<compile_context>
chip_gen: v5e
topology: v5e:2x2
jax: 0.10.0
libtpu: 0.0.40
codegen_flags: <defaults>
</compile_context>

<pallas_src>
import math

import jax
import jax.numpy as jnp
from jax import lax
from jax.experimental import pallas as pl
from jax.experimental.pallas import tpu as pltpu

BN_EPS = 1e-5
LANE = 128
W_OFF = 8          # sublane-aligned start of the interior inside the padded scratch


def _round_up(n, m):
    return (n + m - 1) // m * m


def make_kernel(Hp, Wp, Cin, Cin_p, Cout, Cout_p, row_chunk):
    """Fused per-batch-element kernel: pool -> 3x (3x3 conv + folded BN + ReLU)."""
    Wtot = Wp + 2 * W_OFF
    n_chunks = (Hp + row_chunk - 1) // row_chunk

    def kernel(x_ref, w1_ref, b1_ref, w2_ref, b2_ref, o_ref, pad_in, pad_a, pad_b):
        # ---- (re)initialize the zero halos every grid step ---------------------------
        # Only the 1-wide conv borders are ever read; zero them with aligned slab stores.
        # Not gated on program_id -> correct under megacore "parallel" grid splitting.
        def zero_borders(dst):
            c = dst.shape[-1]
            side = jnp.zeros((Hp + 2, W_OFF, c), dst.dtype)
            dst[:, pl.ds(0, W_OFF), :] = side                 # left  (covers col W_OFF-1)
            dst[:, pl.ds(W_OFF + Wp, W_OFF), :] = side        # right (covers col W_OFF+Wp)
            row = jnp.zeros((1, Wp, c), dst.dtype)
            dst[pl.ds(0, 1), pl.ds(W_OFF, Wp), :] = row       # top
            dst[pl.ds(Hp + 1, 1), pl.ds(W_OFF, Wp), :] = row  # bottom

        if Cin < Cin_p:
            # Interior channel tail [Cin, Cin_p) must also be zero -> cheap full memset.
            pad_in[...] = jnp.zeros_like(pad_in)
        else:
            zero_borders(pad_in)
        zero_borders(pad_a)
        zero_borders(pad_b)

        # ---- MaxPool2d(kernel=2, stride=2): max of 4 dense parity planes --------------
        pooled = jnp.maximum(jnp.maximum(x_ref[0, 0], x_ref[0, 1]),
                             jnp.maximum(x_ref[0, 2], x_ref[0, 3]))   # (Hp, Wp, Cin) bf16
        pad_in[pl.ds(1, Hp), pl.ds(W_OFF, Wp), pl.ds(0, Cin)] = pooled.astype(pad_in.dtype)

        # ---- 3x3 conv + folded-BN bias + ReLU: 9 shallow K=cin_p MXU matmuls ----------
        # accumulated in f32 vregs (no im2col staging buffer, no concatenate copies).
        def conv_bn_relu(src, w_ref, b_ref, cin_p, write_fn):
            bias = b_ref[...]                                  # (1, Cout_p) f32, hoisted
            for c in range(n_chunks):                          # static; 1 chunk at demo
                r0 = c * row_chunk
                rows = min(row_chunk, Hp - r0)
                acc = None
                for dy in range(3):
                    for dx in range(3):
                        p = src[pl.ds(r0 + dy, rows),
                                pl.ds(W_OFF - 1 + dx, Wp), :]         # (rows, Wp, cin_p)
                        p = p.reshape(rows * Wp, cin_p)
                        d = jnp.dot(p, w_ref[3 * dy + dx],
                                    preferred_element_type=jnp.float32)
                        acc = d if acc is None else acc + d
                y = jnp.maximum(acc + bias, 0.0)               # folded BN + ReLU, f32
                write_fn(r0, rows, y)

        def to_pad(dst):
            def write(r0, rows, y):
                dst[pl.ds(1 + r0, rows), pl.ds(W_OFF, Wp), :] = (
                    y.reshape(rows, Wp, Cout_p).astype(dst.dtype))
            return write

        def to_out(r0, rows, y):
            o_ref[0, pl.ds(r0, rows), :, :] = (
                y[:, :Cout].reshape(rows, Wp, Cout).astype(o_ref.dtype))

        conv_bn_relu(pad_in, w1_ref, b1_ref, Cin_p, to_pad(pad_a))    # conv1 / bn1
        conv_bn_relu(pad_a, w2_ref, b2_ref, Cout_p, to_pad(pad_b))    # conv2 / bn2
        conv_bn_relu(pad_b, w2_ref, b2_ref, Cout_p, to_out)           # conv2 / bn3

    return kernel


def _prep_conv(w_oihw, bias, cin_p, cout_p, scale):
    """OIHW conv weight -> (9, cin_p, cout_p) bf16 taps, eval-mode BN scale folded in."""
    cout, cin = w_oihw.shape[0], w_oihw.shape[1]
    w = jnp.transpose(w_oihw.astype(jnp.float32), (2, 3, 1, 0)) * scale   # (3,3,cin,cout)
    w = jnp.pad(w, ((0, 0), (0, 0), (0, cin_p - cin), (0, cout_p - cout)))
    w = w.reshape(9, cin_p, cout_p).astype(jnp.bfloat16)
    b = jnp.pad(bias.astype(jnp.float32) * scale, (0, cout_p - cout)).reshape(1, cout_p)
    return w, b


def easy_down2_forward(params, x_nchw):
    """Forward matching EasyDown2TopViewPathway.forward (NCHW in, NCHW out, bf16)."""
    N, Cin, H, W = x_nchw.shape
    assert H % 2 == 0 and W % 2 == 0, "MaxPool2d(2,2) needs even H, W"
    Cout = params["w1"].shape[0]
    Hp, Wp = H // 2, W // 2
    Cin_p, Cout_p = _round_up(Cin, LANE), _round_up(Cout, LANE)
    Wtot = Wp + 2 * W_OFF

    # Fold eval-mode BN (mean=0, var=1, gamma=1, beta=0) into the conv weights / biases.
    scale = 1.0 / math.sqrt(1.0 + BN_EPS)
    w1, b1 = _prep_conv(params["w1"], params["b1"], Cin_p, Cout_p, scale)
    w2, b2 = _prep_conv(params["w2"], params["b2"], Cout_p, Cout_p, scale)

    # Single host rearrangement (replaces the NCHW->NHWC transpose): split the 2x2 pool
    # window parities into a leading dim of 4 dense (Hp, Wp, Cin) planes.  Real Cin only.
    x = x_nchw.astype(jnp.bfloat16).reshape(N, Cin, Hp, 2, Wp, 2)
    x = jnp.transpose(x, (0, 3, 5, 2, 4, 1)).reshape(N, 4, Hp, Wp, Cin)

    # M (= rows*Wp) per chunk: aim for the MXU width, keep the f32 accumulator <= ~128 KB.
    m_target = max(Wp, min(256, (128 * 1024) // (4 * Cout_p)))
    row_chunk = max(1, min(Hp, m_target // Wp))

    kernel = make_kernel(Hp, Wp, Cin, Cin_p, Cout, Cout_p, row_chunk)

    # VMEM budget: double-buffered operands + persistent padded scratch + headroom.
    operand_bytes = (4 * Hp * Wp * Cin * 2 + Hp * Wp * Cout * 2
                     + (w1.size + w2.size) * 2 + (b1.size + b2.size) * 4)
    scratch_bytes = (Hp + 2) * Wtot * (Cin_p + 2 * Cout_p) * 2
    vmem_limit = int(min(128 << 20,
                         max(32 << 20, 2 * operand_bytes + scratch_bytes + (8 << 20))))

    flops = 2 * N * Hp * Wp * 9 * (Cin_p * Cout_p + 2 * Cout_p * Cout_p)
    bytes_accessed = int(x.size * 2 + (w1.size + w2.size) * 2
                         + (b1.size + b2.size) * 4 + N * Hp * Wp * Cout * 2)

    out = pl.pallas_call(
        kernel,
        out_shape=jax.ShapeDtypeStruct((N, Hp, Wp, Cout), jnp.bfloat16),
        grid_spec=pltpu.PrefetchScalarGridSpec(
            num_scalar_prefetch=0,
            grid=(N,),
            in_specs=[
                pl.BlockSpec((1, 4, Hp, Wp, Cin), lambda n: (n, 0, 0, 0, 0)),
                # Constant-index weights/biases (revisited blocks are not re-DMA'd).
                pl.BlockSpec((9, Cin_p, Cout_p), lambda n: (0, 0, 0)),
                pl.BlockSpec((1, Cout_p), lambda n: (0, 0)),
                pl.BlockSpec((9, Cout_p, Cout_p), lambda n: (0, 0, 0)),
                pl.BlockSpec((1, Cout_p), lambda n: (0, 0)),
            ],
            out_specs=pl.BlockSpec((1, Hp, Wp, Cout), lambda n: (n, 0, 0, 0)),
            scratch_shapes=[
                pltpu.VMEM((Hp + 2, Wtot, Cin_p), jnp.bfloat16),   # pooled input + halo
                pltpu.VMEM((Hp + 2, Wtot, Cout_p), jnp.bfloat16),  # conv1 out + halo
                pltpu.VMEM((Hp + 2, Wtot, Cout_p), jnp.bfloat16),  # conv2 out + halo
            ],
        ),
        compiler_params=pltpu.CompilerParams(
            dimension_semantics=("parallel",),
            vmem_limit_bytes=vmem_limit),
        cost_estimate=pl.CostEstimate(flops=flops, transcendentals=0,
                                      bytes_accessed=bytes_accessed),
    )(x, w1, b1, w2, b2)

    # NHWC -> NCHW only for PyTorch API parity; keep NHWC if the consumer allows it.
    return jnp.transpose(out, (0, 3, 1, 2))


def init_params(input_channels, key):
    """Mirror _initialize_weights: conv ~ N(0, 0.02), bias 0, BN gamma=1 / beta=0."""
    oc = input_channels // 2
    k1, k2 = jax.random.split(key)
    return dict(
        w1=jax.random.normal(k1, (oc, input_channels, 3, 3), jnp.float32) * 0.02,  # OIHW
        b1=jnp.zeros((oc,), jnp.float32),
        w2=jax.random.normal(k2, (oc, oc, 3, 3), jnp.float32) * 0.02,   # shared conv2d_add
        b2=jnp.zeros((oc,), jnp.float32),
    )


# ---------------------------- pure-JAX reference ----------------------------
def reference_forward(params, x_nchw):
    """Same numerics as the kernel: bf16 operands, f32 accumulation, folded eval-mode BN."""
    scale = 1.0 / math.sqrt(1.0 + BN_EPS)
    x = jnp.transpose(x_nchw, (0, 2, 3, 1)).astype(jnp.bfloat16)
    N, H, W, C = x.shape
    xp = x.reshape(N, H // 2, 2, W // 2, 2, C).max(axis=(2, 4))

    def cbr(t, w_oihw, b):
        w = (jnp.transpose(w_oihw.astype(jnp.float32), (2, 3, 1, 0)) * scale
             ).astype(jnp.bfloat16)
        y = lax.conv_general_dilated(
            t, w, (1, 1), "SAME",
            dimension_numbers=("NHWC", "HWIO", "NHWC"),
            preferred_element_type=jnp.float32)
        return jnp.maximum(y + b.astype(jnp.float32) * scale, 0.0)

    y = cbr(xp, params["w1"], params["b1"]).astype(jnp.bfloat16)
    y = cbr(y, params["w2"], params["b2"]).astype(jnp.bfloat16)
    y = cbr(y, params["w2"], params["b2"]).astype(jnp.bfloat16)
    return jnp.transpose(y, (0, 3, 1, 2))


if __name__ == "__main__":
    key = jax.random.PRNGKey(0)
    N, C, H, W = 2, 8, 16, 16

    kp, kx = jax.random.split(key)
    params = init_params(C, kp)
    x = jax.random.normal(kx, (N, C, H, W), jnp.float32)

    y = jax.block_until_ready(easy_down2_forward(params, x))
    y_ref = jax.block_until_ready(reference_forward(params, x))

    assert y.shape == (N, C // 2, H // 2, W // 2)
    assert y.shape == y_ref.shape
    y32, r32 = y.astype(jnp.float32), y_ref.astype(jnp.float32)
    err = float(jnp.max(jnp.abs(y32 - r32)))
    assert jnp.allclose(y32, r32, atol=1e-2, rtol=1e-2), err

    print("KERNEL_OK")
</pallas_src>

<mosaic_0001>
module attributes {stable_mosaic.version = 11 : i64} {
  func.func @kernel(%arg0: i32, %arg1: memref<1x4x8x8x8xbf16, #tpu.memory_space<vmem>>, %arg2: memref<9x128x128xbf16, #tpu.memory_space<vmem>>, %arg3: memref<1x128xf32, #tpu.memory_space<vmem>>, %arg4: memref<9x128x128xbf16, #tpu.memory_space<vmem>>, %arg5: memref<1x128xf32, #tpu.memory_space<vmem>>, %arg6: memref<1x8x8x4xbf16, #tpu.memory_space<vmem>>, %arg7: memref<10x24x128xbf16, #tpu.memory_space<vmem>>, %arg8: memref<10x24x128xbf16, #tpu.memory_space<vmem>>, %arg9: memref<10x24x128xbf16, #tpu.memory_space<vmem>>) attributes {dimension_semantics = [#tpu.dimension_semantics<parallel>], iteration_bounds = array<i64: 2>, scalar_prefetch = 0 : i64, scratch_operands = 3 : i64, tpu.core_type = #tpu.core_type<tc>, window_params = [{transform_indices = @transform_0, window_bounds = array<i64: 1, 4, 8, 8, 8>}, {pipeline_mode = #tpu.pipeline_mode<synchronous>, transform_indices = @transform_1, window_bounds = array<i64: 9, 128, 128>}, {pipeline_mode = #tpu.pipeline_mode<synchronous>, transform_indices = @transform_2, window_bounds = array<i64: 1, 128>}, {pipeline_mode = #tpu.pipeline_mode<synchronous>, transform_indices = @transform_3, window_bounds = array<i64: 9, 128, 128>}, {pipeline_mode = #tpu.pipeline_mode<synchronous>, transform_indices = @transform_4, window_bounds = array<i64: 1, 128>}, {transform_indices = @transform_5, window_bounds = array<i64: 1, 8, 8, 4>}]} {
    %cst = arith.constant 0.000000e+00 : bf16
    %0 = vector.broadcast %cst : bf16 to vector<10x24x128xbf16>
    %c0 = arith.constant 0 : index
    %c0_0 = arith.constant 0 : index
    %c0_1 = arith.constant 0 : index
    %1 = vector.load %arg7[%c0, %c0_0, %c0_1] : memref<10x24x128xbf16, #tpu.memory_space<vmem>>, vector<10x24x128xbf16>
    tpu.vector_store %arg7[%c0, %c0_0, %c0_1], %0 {strides = array<i32>} : memref<10x24x128xbf16, #tpu.memory_space<vmem>>, vector<10x24x128xbf16>,
    %cst_2 = arith.constant 0.000000e+00 : bf16
    %2 = vector.broadcast %cst_2 : bf16 to vector<10x8x128xbf16>
    %c0_3 = arith.constant 0 : index
    %c0_4 = arith.constant 0 : index
    %c0_5 = arith.constant 0 : index
    %3 = vector.load %arg8[%c0_3, %c0_4, %c0_5] : memref<10x24x128xbf16, #tpu.memory_space<vmem>>, vector<10x8x128xbf16>
    tpu.vector_store %arg8[%c0_3, %c0_4, %c0_5], %2 {strides = array<i32>} : memref<10x24x128xbf16, #tpu.memory_space<vmem>>, vector<10x8x128xbf16>,
    %c0_6 = arith.constant 0 : index
    %c16 = arith.constant 16 : index
    %c0_7 = arith.constant 0 : index
    %4 = vector.load %arg8[%c0_6, %c16, %c0_7] : memref<10x24x128xbf16, #tpu.memory_space<vmem>>, vector<10x8x128xbf16>
    tpu.vector_store %arg8[%c0_6, %c16, %c0_7], %2 {strides = array<i32>} : memref<10x24x128xbf16, #tpu.memory_space<vmem>>, vector<10x8x128xbf16>,
    %cst_8 = arith.constant 0.000000e+00 : bf16
    %5 = vector.broadcast %cst_8 : bf16 to vector<1x8x128xbf16>
    %c0_9 = arith.constant 0 : index
    %c8 = arith.constant 8 : index
    %c0_10 = arith.constant 0 : index
    %6 = vector.load %arg8[%c0_9, %c8, %c0_10] : memref<10x24x128xbf16, #tpu.memory_space<vmem>>, vector<1x8x128xbf16>
    tpu.vector_store %arg8[%c0_9, %c8, %c0_10], %5 {strides = array<i32>} : memref<10x24x128xbf16, #tpu.memory_space<vmem>>, vector<1x8x128xbf16>,
    %c9 = arith.constant 9 : index
    %c8_11 = arith.constant 8 : index
    %c0_12 = arith.constant 0 : index
    %7 = vector.load %arg8[%c9, %c8_11, %c0_12] : memref<10x24x128xbf16, #tpu.memory_space<vmem>>, vector<1x8x128xbf16>
    tpu.vector_store %arg8[%c9, %c8_11, %c0_12], %5 {strides = array<i32>} : memref<10x24x128xbf16, #tpu.memory_space<vmem>>, vector<1x8x128xbf16>,
    %cst_13 = arith.constant 0.000000e+00 : bf16
    %8 = vector.broadcast %cst_13 : bf16 to vector<10x8x128xbf16>
    %c0_14 = arith.constant 0 : index
    %c0_15 = arith.constant 0 : index
    %c0_16 = arith.constant 0 : index
    %9 = vector.load %arg9[%c0_14, %c0_15, %c0_16] : memref<10x24x128xbf16, #tpu.memory_space<vmem>>, vector<10x8x128xbf16>
    tpu.vector_store %arg9[%c0_14, %c0_15, %c0_16], %8 {strides = array<i32>} : memref<10x24x128xbf16, #tpu.memory_space<vmem>>, vector<10x8x128xbf16>,
    %c0_17 = arith.constant 0 : index
    %c16_18 = arith.constant 16 : index
    %c0_19 = arith.constant 0 : index
    %10 = vector.load %arg9[%c0_17, %c16_18, %c0_19] : memref<10x24x128xbf16, #tpu.memory_space<vmem>>, vector<10x8x128xbf16>
    tpu.vector_store %arg9[%c0_17, %c16_18, %c0_19], %8 {strides = array<i32>} : memref<10x24x128xbf16, #tpu.memory_space<vmem>>, vector<10x8x128xbf16>,
    %cst_20 = arith.constant 0.000000e+00 : bf16
    %11 = vector.broadcast %cst_20 : bf16 to vector<1x8x128xbf16>
    %c0_21 = arith.constant 0 : index
    %c8_22 = arith.constant 8 : index
    %c0_23 = arith.constant 0 : index
    %12 = vector.load %arg9[%c0_21, %c8_22, %c0_23] : memref<10x24x128xbf16, #tpu.memory_space<vmem>>, vector<1x8x128xbf16>
    tpu.vector_store %arg9[%c0_21, %c8_22, %c0_23], %11 {strides = array<i32>} : memref<10x24x128xbf16, #tpu.memory_space<vmem>>, vector<1x8x128xbf16>,
    %c9_24 = arith.constant 9 : index
    %c8_25 = arith.constant 8 : index
    %c0_26 = arith.constant 0 : index
    %13 = vector.load %arg9[%c9_24, %c8_25, %c0_26] : memref<10x24x128xbf16, #tpu.memory_space<vmem>>, vector<1x8x128xbf16>
    tpu.vector_store %arg9[%c9_24, %c8_25, %c0_26], %11 {strides = array<i32>} : memref<10x24x128xbf16, #tpu.memory_space<vmem>>, vector<1x8x128xbf16>,
    %c0_27 = arith.constant 0 : index
    %c0_28 = arith.constant 0 : index
    %c0_29 = arith.constant 0 : index
    %c0_30 = arith.constant 0 : index
    %c0_31 = arith.constant 0 : index
    %14 = vector.load %arg1[%c0_27, %c0_28, %c0_29, %c0_30, %c0_31] : memref<1x4x8x8x8xbf16, #tpu.memory_space<vmem>>, vector<1x1x8x8x8xbf16>
    %15 = vector.shape_cast %14 : vector<1x1x8x8x8xbf16> to vector<8x8x8xbf16>
    %c0_32 = arith.constant 0 : index
    %c1 = arith.constant 1 : index
    %c0_33 = arith.constant 0 : index
    %c0_34 = arith.constant 0 : index
    %c0_35 = arith.constant 0 : index
    %16 = vector.load %arg1[%c0_32, %c1, %c0_33, %c0_34, %c0_35] : memref<1x4x8x8x8xbf16, #tpu.memory_space<vmem>>, vector<1x1x8x8x8xbf16>
    %17 = vector.shape_cast %16 : vector<1x1x8x8x8xbf16> to vector<8x8x8xbf16>
    %18 = arith.maximumf %15, %17 : vector<8x8x8xbf16>
    %c0_36 = arith.constant 0 : index
    %c2 = arith.constant 2 : index
    %c0_37 = arith.constant 0 : index
    %c0_38 = arith.constant 0 : index
    %c0_39 = arith.constant 0 : index
    %19 = vector.load %arg1[%c0_36, %c2, %c0_37, %c0_38, %c0_39] : memref<1x4x8x8x8xbf16, #tpu.memory_space<vmem>>, vector<1x1x8x8x8xbf16>
    %20 = vector.shape_cast %19 : vector<1x1x8x8x8xbf16> to vector<8x8x8xbf16>
    %c0_40 = arith.constant 0 : index
    %c3 = arith.constant 3 : index
    %c0_41 = arith.constant 0 : index
    %c0_42 = arith.constant 0 : index
    %c0_43 = arith.constant 0 : index
    %21 = vector.load %arg1[%c0_40, %c3, %c0_41, %c0_42, %c0_43] : memref<1x4x8x8x8xbf16, #tpu.memory_space<vmem>>, vector<1x1x8x8x8xbf16>
    %22 = vector.shape_cast %21 : vector<1x1x8x8x8xbf16> to vector<8x8x8xbf16>
    %23 = arith.maximumf %20, %22 : vector<8x8x8xbf16>
    %24 = arith.maximumf %18, %23 : vector<8x8x8xbf16>
    %c1_44 = arith.constant 1 : index
    %c8_45 = arith.constant 8 : index
    %c0_46 = arith.constant 0 : index
    %25 = vector.load %arg7[%c1_44, %c8_45, %c0_46] : memref<10x24x128xbf16, #tpu.memory_space<vmem>>, vector<8x8x8xbf16>
    tpu.vector_store %arg7[%c1_44, %c8_45, %c0_46], %24 {strides = array<i32>} : memref<10x24x128xbf16, #tpu.memory_space<vmem>>, vector<8x8x8xbf16>,
    %c0_47 = arith.constant 0 : index
    %c0_48 = arith.constant 0 : index
    %26 = vector.load %arg3[%c0_47, %c0_48] : memref<1x128xf32, #tpu.memory_space<vmem>>, vector<1x128xf32>
    %c0_49 = arith.constant 0 : index
    %c7 = arith.constant 7 : index
    %c0_50 = arith.constant 0 : index
    %27 = vector.load %arg7[%c0_49, %c7, %c0_50] : memref<10x24x128xbf16, #tpu.memory_space<vmem>>, vector<8x8x128xbf16>
    %28 = vector.shape_cast %27 : vector<8x8x128xbf16> to vector<64x128xbf16>
    %c0_51 = arith.constant 0 : index
    %c0_52 = arith.constant 0 : index
    %c0_53 = arith.constant 0 : index
    %29 = vector.load %arg2[%c0_51, %c0_52, %c0_53] : memref<9x128x128xbf16, #tpu.memory_space<vmem>>, vector<1x128x128xbf16>
    %30 = vector.shape_cast %29 : vector<1x128x128xbf16> to vector<128x128xbf16>
    %cst_54 = arith.constant dense<0.000000e+00> : vector<64x128xf32>
    %31 = tpu.matmul %28, %30, %cst_54 {dimension_numbers = #tpu.dot_dimension_numbers<[1], [0], [0], [1], [0, 0, 1, 1], [], []>} : vector<64x128xbf16>, vector<128x128xbf16>, vector<64x128xf32> -> vector<64x128xf32>
    %c0_55 = arith.constant 0 : index
    %c8_56 = arith.constant 8 : index
    %c0_57 = arith.constant 0 : index
    %32 = vector.load %arg7[%c0_55, %c8_56, %c0_57] : memref<10x24x128xbf16, #tpu.memory_space<vmem>>, vector<8x8x128xbf16>
    %33 = vector.shape_cast %32 : vector<8x8x128xbf16> to vector<64x128xbf16>
    %c1_58 = arith.constant 1 : index
    %c0_59 = arith.constant 0 : index
    %c0_60 = arith.constant 0 : index
    %34 = vector.load %arg2[%c1_58, %c0_59, %c0_60] : memref<9x128x128xbf16, #tpu.memory_space<vmem>>, vector<1x128x128xbf16>
    %35 = vector.shape_cast %34 : vector<1x128x128xbf16> to vector<128x128xbf16>
    %cst_61 = arith.constant dense<0.000000e+00> : vector<64x128xf32>
    %36 = tpu.matmul %33, %35, %cst_61 {dimension_numbers = #tpu.dot_dimension_numbers<[1], [0], [0], [1], [0, 0, 1, 1], [], []>} : vector<64x128xbf16>, vector<128x128xbf16>, vector<64x128xf32> -> vector<64x128xf32>
    %37 = arith.addf %31, %36 : vector<64x128xf32>
    %c0_62 = arith.constant 0 : index
    %c9_63 = arith.constant 9 : index
    %c0_64 = arith.constant 0 : index
    %38 = vector.load %arg7[%c0_62, %c9_63, %c0_64] : memref<10x24x128xbf16, #tpu.memory_space<vmem>>, vector<8x8x128xbf16>
    %39 = vector.shape_cast %38 : vector<8x8x128xbf16> to vector<64x128xbf16>
    %c2_65 = arith.constant 2 : index
    %c0_66 = arith.constant 0 : index
    %c0_67 = arith.constant 0 : index
    %40 = vector.load %arg2[%c2_65, %c0_66, %c0_67] : memref<9x128x128xbf16, #tpu.memory_space<vmem>>, vector<1x128x128xbf16>
    %41 = vector.shape_cast %40 : vector<1x128x128xbf16> to vector<128x128xbf16>
    %cst_68 = arith.constant dense<0.000000e+00> : vector<64x128xf32>
    %42 = tpu.matmul %39, %41, %cst_68 {dimension_numbers = #tpu.dot_dimension_numbers<[1], [0], [0], [1], [0, 0, 1, 1], [], []>} : vector<64x128xbf16>, vector<128x128xbf16>, vector<64x128xf32> -> vector<64x128xf32>
    %43 = arith.addf %37, %42 : vector<64x128xf32>
    %c1_69 = arith.constant 1 : index
    %c7_70 = arith.constant 7 : index
    %c0_71 = arith.constant 0 : index
    %44 = vector.load %arg7[%c1_69, %c7_70, %c0_71] : memref<10x24x128xbf16, #tpu.memory_space<vmem>>, vector<8x8x128xbf16>
    %45 = vector.shape_cast %44 : vector<8x8x128xbf16> to vector<64x128xbf16>
    %c3_72 = arith.constant 3 : index
    %c0_73 = arith.constant 0 : index
    %c0_74 = arith.constant 0 : index
    %46 = vector.load %arg2[%c3_72, %c0_73, %c0_74] : memref<9x128x128xbf16, #tpu.memory_space<vmem>>, vector<1x128x128xbf16>
    %47 = vector.shape_cast %46 : vector<1x128x128xbf16> to vector<128x128xbf16>
    %cst_75 = arith.constant dense<0.000000e+00> : vector<64x128xf32>
    %48 = tpu.matmul %45, %47, %cst_75 {dimension_numbers = #tpu.dot_dimension_numbers<[1], [0], [0], [1], [0, 0, 1, 1], [], []>} : vector<64x128xbf16>, vector<128x128xbf16>, vector<64x128xf32> -> vector<64x128xf32>
    %49 = arith.addf %43, %48 : vector<64x128xf32>
    %c1_76 = arith.constant 1 : index
    %c8_77 = arith.constant 8 : index
    %c0_78 = arith.constant 0 : index
    %50 = vector.load %arg7[%c1_76, %c8_77, %c0_78] : memref<10x24x128xbf16, #tpu.memory_space<vmem>>, vector<8x8x128xbf16>
    %51 = vector.shape_cast %50 : vector<8x8x128xbf16> to vector<64x128xbf16>
    %c4 = arith.constant 4 : index
    %c0_79 = arith.constant 0 : index
    %c0_80 = arith.constant 0 : index
    %52 = vector.load %arg2[%c4, %c0_79, %c0_80] : memref<9x128x128xbf16, #tpu.memory_space<vmem>>, vector<1x128x128xbf16>
    %53 = vector.shape_cast %52 : vector<1x128x128xbf16> to vector<128x128xbf16>
    %cst_81 = arith.constant dense<0.000000e+00> : vector<64x128xf32>
    %54 = tpu.matmul %51, %53, %cst_81 {dimension_numbers = #tpu.dot_dimension_numbers<[1], [0], [0], [1], [0, 0, 1, 1], [], []>} : vector<64x128xbf16>, vector<128x128xbf16>, vector<64x128xf32> -> vector<64x128xf32>
    %55 = arith.addf %49, %54 : vector<64x128xf32>
    %c1_82 = arith.constant 1 : index
    %c9_83 = arith.constant 9 : index
    %c0_84 = arith.constant 0 : index
    %56 = vector.load %arg7[%c1_82, %c9_83, %c0_84] : memref<10x24x128xbf16, #tpu.memory_space<vmem>>, vector<8x8x128xbf16>
    %57 = vector.shape_cast %56 : vector<8x8x128xbf16> to vector<64x128xbf16>
    %c5 = arith.constant 5 : index
    %c0_85 = arith.constant 0 : index
    %c0_86 = arith.constant 0 : index
    %58 = vector.load %arg2[%c5, %c0_85, %c0_86] : memref<9x128x128xbf16, #tpu.memory_space<vmem>>, vector<1x128x128xbf16>
    %59 = vector.shape_cast %58 : vector<1x128x128xbf16> to vector<128x128xbf16>
    %cst_87 = arith.constant dense<0.000000e+00> : vector<64x128xf32>
    %60 = tpu.matmul %57, %59, %cst_87 {dimension_numbers = #tpu.dot_dimension_numbers<[1], [0], [0], [1], [0, 0, 1, 1], [], []>} : vector<64x128xbf16>, vector<128x128xbf16>, vector<64x128xf32> -> vector<64x128xf32>
    %61 = arith.addf %55, %60 : vector<64x128xf32>
    %c2_88 = arith.constant 2 : index
    %c7_89 = arith.constant 7 : index
    %c0_90 = arith.constant 0 : index
    %62 = vector.load %arg7[%c2_88, %c7_89, %c0_90] : memref<10x24x128xbf16, #tpu.memory_space<vmem>>, vector<8x8x128xbf16>
    %63 = vector.shape_cast %62 : vector<8x8x128xbf16> to vector<64x128xbf16>
    %c6 = arith.constant 6 : index
    %c0_91 = arith.constant 0 : index
    %c0_92 = arith.constant 0 : index
    %64 = vector.load %arg2[%c6, %c0_91, %c0_92] : memref<9x128x128xbf16, #tpu.memory_space<vmem>>, vector<1x128x128xbf16>
    %65 = vector.shape_cast %64 : vector<1x128x128xbf16> to vector<128x128xbf16>
    %cst_93 = arith.constant dense<0.000000e+00> : vector<64x128xf32>
    %66 = tpu.matmul %63, %65, %cst_93 {dimension_numbers = #tpu.dot_dimension_numbers<[1], [0], [0], [1], [0, 0, 1, 1], [], []>} : vector<64x128xbf16>, vector<128x128xbf16>, vector<64x128xf32> -> vector<64x128xf32>
    %67 = arith.addf %61, %66 : vector<64x128xf32>
    %c2_94 = arith.constant 2 : index
    %c8_95 = arith.constant 8 : index
    %c0_96 = arith.constant 0 : index
    %68 = vector.load %arg7[%c2_94, %c8_95, %c0_96] : memref<10x24x128xbf16, #tpu.memory_space<vmem>>, vector<8x8x128xbf16>
    %69 = vector.shape_cast %68 : vector<8x8x128xbf16> to vector<64x128xbf16>
    %c7_97 = arith.constant 7 : index
    %c0_98 = arith.constant 0 : index
    %c0_99 = arith.constant 0 : index
    %70 = vector.load %arg2[%c7_97, %c0_98, %c0_99] : memref<9x128x128xbf16, #tpu.memory_space<vmem>>, vector<1x128x128xbf16>
    %71 = vector.shape_cast %70 : vector<1x128x128xbf16> to vector<128x128xbf16>
    %cst_100 = arith.constant dense<0.000000e+00> : vector<64x128xf32>
    %72 = tpu.matmul %69, %71, %cst_100 {dimension_numbers = #tpu.dot_dimension_numbers<[1], [0], [0], [1], [0, 0, 1, 1], [], []>} : vector<64x128xbf16>, vector<128x128xbf16>, vector<64x128xf32> -> vector<64x128xf32>
    %73 = arith.addf %67, %72 : vector<64x128xf32>
    %c2_101 = arith.constant 2 : index
    %c9_102 = arith.constant 9 : index
    %c0_103 = arith.constant 0 : index
    %74 = vector.load %arg7[%c2_101, %c9_102, %c0_103] : memref<10x24x128xbf16, #tpu.memory_space<vmem>>, vector<8x8x128xbf16>
    %75 = vector.shape_cast %74 : vector<8x8x128xbf16> to vector<64x128xbf16>
    %c8_104 = arith.constant 8 : index
    %c0_105 = arith.constant 0 : index
    %c0_106 = arith.constant 0 : index
    %76 = vector.load %arg2[%c8_104, %c0_105, %c0_106] : memref<9x128x128xbf16, #tpu.memory_space<vmem>>, vector<1x128x128xbf16>
    %77 = vector.shape_cast %76 : vector<1x128x128xbf16> to vector<128x128xbf16>
    %cst_107 = arith.constant dense<0.000000e+00> : vector<64x128xf32>
    %78 = tpu.matmul %75, %77, %cst_107 {dimension_numbers = #tpu.dot_dimension_numbers<[1], [0], [0], [1], [0, 0, 1, 1], [], []>} : vector<64x128xbf16>, vector<128x128xbf16>, vector<64x128xf32> -> vector<64x128xf32>
    %79 = arith.addf %73, %78 : vector<64x128xf32>
    %80 = vector.broadcast %26 : vector<1x128xf32> to vector<64x128xf32>
    %81 = arith.addf %79, %80 : vector<64x128xf32>
    %cst_108 = arith.constant 0.000000e+00 : f32
    %82 = vector.broadcast %cst_108 : f32 to vector<64x128xf32>
    %83 = arith.maximumf %81, %82 : vector<64x128xf32>
    %84 = vector.shape_cast %83 : vector<64x128xf32> to vector<8x8x128xf32>
    %85 = arith.truncf %84 : vector<8x8x128xf32> to vector<8x8x128xbf16>
    %c1_109 = arith.constant 1 : index
    %c8_110 = arith.constant 8 : index
    %c0_111 = arith.constant 0 : index
    %86 = vector.load %arg8[%c1_109, %c8_110, %c0_111] : memref<10x24x128xbf16, #tpu.memory_space<vmem>>, vector<8x8x128xbf16>
    tpu.vector_store %arg8[%c1_109, %c8_110, %c0_111], %85 {strides = array<i32>} : memref<10x24x128xbf16, #tpu.memory_space<vmem>>, vector<8x8x128xbf16>,
    %c0_112 = arith.constant 0 : index
    %c0_113 = arith.constant 0 : index
    %87 = vector.load %arg5[%c0_112, %c0_113] : memref<1x128xf32, #tpu.memory_space<vmem>>, vector<1x128xf32>
    %c0_114 = arith.constant 0 : index
    %c7_115 = arith.constant 7 : index
    %c0_116 = arith.constant 0 : index
    %88 = vector.load %arg8[%c0_114, %c7_115, %c0_116] : memref<10x24x128xbf16, #tpu.memory_space<vmem>>, vector<8x8x128xbf16>
    %89 = vector.shape_cast %88 : vector<8x8x128xbf16> to vector<64x128xbf16>
    %c0_117 = arith.constant 0 : index
    %c0_118 = arith.constant 0 : index
    %c0_119 = arith.constant 0 : index
    %90 = vector.load %arg4[%c0_117, %c0_118, %c0_119] : memref<9x128x128xbf16, #tpu.memory_space<vmem>>, vector<1x128x128xbf16>
    %91 = vector.shape_cast %90 : vector<1x128x128xbf16> to vector<128x128xbf16>
    %cst_120 = arith.constant dense<0.000000e+00> : vector<64x128xf32>
    %92 = tpu.matmul %89, %91, %cst_120 {dimension_numbers = #tpu.dot_dimension_numbers<[1], [0], [0], [1], [0, 0, 1, 1], [], []>} : vector<64x128xbf16>, vector<128x128xbf16>, vector<64x128xf32> -> vector<64x128xf32>
    %c0_121 = arith.constant 0 : index
    %c8_122 = arith.constant 8 : index
    %c0_123 = arith.constant 0 : index
    %93 = vector.load %arg8[%c0_121, %c8_122, %c0_123] : memref<10x24x128xbf16, #tpu.memory_space<vmem>>, vector<8x8x128xbf16>
    %94 = vector.shape_cast %93 : vector<8x8x128xbf16> to vector<64x128xbf16>
    %c1_124 = arith.constant 1 : index
    %c0_125 = arith.constant 0 : index
    %c0_126 = arith.constant 0 : index
    %95 = vector.load %arg4[%c1_124, %c0_125, %c0_126] : memref<9x128x128xbf16, #tpu.memory_space<vmem>>, vector<1x128x128xbf16>
    %96 = vector.shape_cast %95 : vector<1x128x128xbf16> to vector<128x128xbf16>
    %cst_127 = arith.constant dense<0.000000e+00> : vector<64x128xf32>
    %97 = tpu.matmul %94, %96, %cst_127 {dimension_numbers = #tpu.dot_dimension_numbers<[1], [0], [0], [1], [0, 0, 1, 1], [], []>} : vector<64x128xbf16>, vector<128x128xbf16>, vector<64x128xf32> -> vector<64x128xf32>
    %98 = arith.addf %92, %97 : vector<64x128xf32>
    %c0_128 = arith.constant 0 : index
    %c9_129 = arith.constant 9 : index
    %c0_130 = arith.constant 0 : index
    %99 = vector.load %arg8[%c0_128, %c9_129, %c0_130] : memref<10x24x128xbf16, #tpu.memory_space<vmem>>, vector<8x8x128xbf16>
    %100 = vector.shape_cast %99 : vector<8x8x128xbf16> to vector<64x128xbf16>
    %c2_131 = arith.constant 2 : index
    %c0_132 = arith.constant 0 : index
    %c0_133 = arith.constant 0 : index
    %101 = vector.load %arg4[%c2_131, %c0_132, %c0_133] : memref<9x128x128xbf16, #tpu.memory_space<vmem>>, vector<1x128x128xbf16>
    %102 = vector.shape_cast %101 : vector<1x128x128xbf16> to vector<128x128xbf16>
    %cst_134 = arith.constant dense<0.000000e+00> : vector<64x128xf32>
    %103 = tpu.matmul %100, %102, %cst_134 {dimension_numbers = #tpu.dot_dimension_numbers<[1], [0], [0], [1], [0, 0, 1, 1], [], []>} : vector<64x128xbf16>, vector<128x128xbf16>, vector<64x128xf32> -> vector<64x128xf32>
    %104 = arith.addf %98, %103 : vector<64x128xf32>
    %c1_135 = arith.constant 1 : index
    %c7_136 = arith.constant 7 : index
    %c0_137 = arith.constant 0 : index
    %105 = vector.load %arg8[%c1_135, %c7_136, %c0_137] : memref<10x24x128xbf16, #tpu.memory_space<vmem>>, vector<8x8x128xbf16>
    %106 = vector.shape_cast %105 : vector<8x8x128xbf16> to vector<64x128xbf16>
    %c3_138 = arith.constant 3 : index
    %c0_139 = arith.constant 0 : index
    %c0_140 = arith.constant 0 : index
    %107 = vector.load %arg4[%c3_138, %c0_139, %c0_140] : memref<9x128x128xbf16, #tpu.memory_space<vmem>>, vector<1x128x128xbf16>
    %108 = vector.shape_cast %107 : vector<1x128x128xbf16> to vector<128x128xbf16>
    %cst_141 = arith.constant dense<0.000000e+00> : vector<64x128xf32>
    %109 = tpu.matmul %106, %108, %cst_141 {dimension_numbers = #tpu.dot_dimension_numbers<[1], [0], [0], [1], [0, 0, 1, 1], [], []>} : vector<64x128xbf16>, vector<128x128xbf16>, vector<64x128xf32> -> vector<64x128xf32>
    %110 = arith.addf %104, %109 : vector<64x128xf32>
    %c1_142 = arith.constant 1 : index
    %c8_143 = arith.constant 8 : index
    %c0_144 = arith.constant 0 : index
    %111 = vector.load %arg8[%c1_142, %c8_143, %c0_144] : memref<10x24x128xbf16, #tpu.memory_space<vmem>>, vector<8x8x128xbf16>
    %112 = vector.shape_cast %111 : vector<8x8x128xbf16> to vector<64x128xbf16>
    %c4_145 = arith.constant 4 : index
    %c0_146 = arith.constant 0 : index
    %c0_147 = arith.constant 0 : index
    %113 = vector.load %arg4[%c4_145, %c0_146, %c0_147] : memref<9x128x128xbf16, #tpu.memory_space<vmem>>, vector<1x128x128xbf16>
    %114 = vector.shape_cast %113 : vector<1x128x128xbf16> to vector<128x128xbf16>
    %cst_148 = arith.constant dense<0.000000e+00> : vector<64x128xf32>
    %115 = tpu.matmul %112, %114, %cst_148 {dimension_numbers = #tpu.dot_dimension_numbers<[1], [0], [0], [1], [0, 0, 1, 1], [], []>} : vector<64x128xbf16>, vector<128x128xbf16>, vector<64x128xf32> -> vector<64x128xf32>
    %116 = arith.addf %110, %115 : vector<64x128xf32>
    %c1_149 = arith.constant 1 : index
    %c9_150 = arith.constant 9 : index
    %c0_151 = arith.constant 0 : index
    %117 = vector.load %arg8[%c1_149, %c9_150, %c0_151] : memref<10x24x128xbf16, #tpu.memory_space<vmem>>, vector<8x8x128xbf16>
    %118 = vector.shape_cast %117 : vector<8x8x128xbf16> to vector<64x128xbf16>
    %c5_152 = arith.constant 5 : index
    %c0_153 = arith.constant 0 : index
    %c0_154 = arith.constant 0 : index
    %119 = vector.load %arg4[%c5_152, %c0_153, %c0_154] : memref<9x128x128xbf16, #tpu.memory_space<vmem>>, vector<1x128x128xbf16>
    %120 = vector.shape_cast %119 : vector<1x128x128xbf16> to vector<128x128xbf16>
    %cst_155 = arith.constant dense<0.000000e+00> : vector<64x128xf32>
    %121 = tpu.matmul %118, %120, %cst_155 {dimension_numbers = #tpu.dot_dimension_numbers<[1], [0], [0], [1], [0, 0, 1, 1], [], []>} : vector<64x128xbf16>, vector<128x128xbf16>, vector<64x128xf32> -> vector<64x128xf32>
    %122 = arith.addf %116, %121 : vector<64x128xf32>
    %c2_156 = arith.constant 2 : index
    %c7_157 = arith.constant 7 : index
    %c0_158 = arith.constant 0 : index
    %123 = vector.load %arg8[%c2_156, %c7_157, %c0_158] : memref<10x24x128xbf16, #tpu.memory_space<vmem>>, vector<8x8x128xbf16>
    %124 = vector.shape_cast %123 : vector<8x8x128xbf16> to vector<64x128xbf16>
    %c6_159 = arith.constant 6 : index
    %c0_160 = arith.constant 0 : index
    %c0_161 = arith.constant 0 : index
    %125 = vector.load %arg4[%c6_159, %c0_160, %c0_161] : memref<9x128x128xbf16, #tpu.memory_space<vmem>>, vector<1x128x128xbf16>
    %126 = vector.shape_cast %125 : vector<1x128x128xbf16> to vector<128x128xbf16>
    %cst_162 = arith.constant dense<0.000000e+00> : vector<64x128xf32>
    %127 = tpu.matmul %124, %126, %cst_162 {dimension_numbers = #tpu.dot_dimension_numbers<[1], [0], [0], [1], [0, 0, 1, 1], [], []>} : vector<64x128xbf16>, vector<128x128xbf16>, vector<64x128xf32> -> vector<64x128xf32>
    %128 = arith.addf %122, %127 : vector<64x128xf32>
    %c2_163 = arith.constant 2 : index
    %c8_164 = arith.constant 8 : index
    %c0_165 = arith.constant 0 : index
    %129 = vector.load %arg8[%c2_163, %c8_164, %c0_165] : memref<10x24x128xbf16, #tpu.memory_space<vmem>>, vector<8x8x128xbf16>
    %130 = vector.shape_cast %129 : vector<8x8x128xbf16> to vector<64x128xbf16>
    %c7_166 = arith.constant 7 : index
    %c0_167 = arith.constant 0 : index
    %c0_168 = arith.constant 0 : index
    %131 = vector.load %arg4[%c7_166, %c0_167, %c0_168] : memref<9x128x128xbf16, #tpu.memory_space<vmem>>, vector<1x128x128xbf16>
    %132 = vector.shape_cast %131 : vector<1x128x128xbf16> to vector<128x128xbf16>
    %cst_169 = arith.constant dense<0.000000e+00> : vector<64x128xf32>
    %133 = tpu.matmul %130, %132, %cst_169 {dimension_numbers = #tpu.dot_dimension_numbers<[1], [0], [0], [1], [0, 0, 1, 1], [], []>} : vector<64x128xbf16>, vector<128x128xbf16>, vector<64x128xf32> -> vector<64x128xf32>
    %134 = arith.addf %128, %133 : vector<64x128xf32>
    %c2_170 = arith.constant 2 : index
    %c9_171 = arith.constant 9 : index
    %c0_172 = arith.constant 0 : index
    %135 = vector.load %arg8[%c2_170, %c9_171, %c0_172] : memref<10x24x128xbf16, #tpu.memory_space<vmem>>, vector<8x8x128xbf16>
    %136 = vector.shape_cast %135 : vector<8x8x128xbf16> to vector<64x128xbf16>
    %c8_173 = arith.constant 8 : index
    %c0_174 = arith.constant 0 : index
    %c0_175 = arith.constant 0 : index
    %137 = vector.load %arg4[%c8_173, %c0_174, %c0_175] : memref<9x128x128xbf16, #tpu.memory_space<vmem>>, vector<1x128x128xbf16>
    %138 = vector.shape_cast %137 : vector<1x128x128xbf16> to vector<128x128xbf16>
    %cst_176 = arith.constant dense<0.000000e+00> : vector<64x128xf32>
    %139 = tpu.matmul %136, %138, %cst_176 {dimension_numbers = #tpu.dot_dimension_numbers<[1], [0], [0], [1], [0, 0, 1, 1], [], []>} : vector<64x128xbf16>, vector<128x128xbf16>, vector<64x128xf32> -> vector<64x128xf32>
    %140 = arith.addf %134, %139 : vector<64x128xf32>
    %141 = vector.broadcast %87 : vector<1x128xf32> to vector<64x128xf32>
    %142 = arith.addf %140, %141 : vector<64x128xf32>
    %cst_177 = arith.constant 0.000000e+00 : f32
    %143 = vector.broadcast %cst_177 : f32 to vector<64x128xf32>
    %144 = arith.maximumf %142, %143 : vector<64x128xf32>
    %145 = vector.shape_cast %144 : vector<64x128xf32> to vector<8x8x128xf32>
    %146 = arith.truncf %145 : vector<8x8x128xf32> to vector<8x8x128xbf16>
    %c1_178 = arith.constant 1 : index
    %c8_179 = arith.constant 8 : index
    %c0_180 = arith.constant 0 : index
    %147 = vector.load %arg9[%c1_178, %c8_179, %c0_180] : memref<10x24x128xbf16, #tpu.memory_space<vmem>>, vector<8x8x128xbf16>
    tpu.vector_store %arg9[%c1_178, %c8_179, %c0_180], %146 {strides = array<i32>} : memref<10x24x128xbf16, #tpu.memory_space<vmem>>, vector<8x8x128xbf16>,
    %c0_181 = arith.constant 0 : index
    %c0_182 = arith.constant 0 : index
    %148 = vector.load %arg5[%c0_181, %c0_182] : memref<1x128xf32, #tpu.memory_space<vmem>>, vector<1x128xf32>
    %c0_183 = arith.constant 0 : index
    %c7_184 = arith.constant 7 : index
    %c0_185 = arith.constant 0 : index
    %149 = vector.load %arg9[%c0_183, %c7_184, %c0_185] : memref<10x24x128xbf16, #tpu.memory_space<vmem>>, vector<8x8x128xbf16>
    %150 = vector.shape_cast %149 : vector<8x8x128xbf16> to vector<64x128xbf16>
    %c0_186 = arith.constant 0 : index
    %c0_187 = arith.constant 0 : index
    %c0_188 = arith.constant 0 : index
    %151 = vector.load %arg4[%c0_186, %c0_187, %c0_188] : memref<9x128x128xbf16, #tpu.memory_space<vmem>>, vector<1x128x128xbf16>
    %152 = vector.shape_cast %151 : vector<1x128x128xbf16> to vector<128x128xbf16>
    %cst_189 = arith.constant dense<0.000000e+00> : vector<64x128xf32>
    %153 = tpu.matmul %150, %152, %cst_189 {dimension_numbers = #tpu.dot_dimension_numbers<[1], [0], [0], [1], [0, 0, 1, 1], [], []>} : vector<64x128xbf16>, vector<128x128xbf16>, vector<64x128xf32> -> vector<64x128xf32>
    %c0_190 = arith.constant 0 : index
    %c8_191 = arith.constant 8 : index
    %c0_192 = arith.constant 0 : index
    %154 = vector.load %arg9[%c0_190, %c8_191, %c0_192] : memref<10x24x128xbf16, #tpu.memory_space<vmem>>, vector<8x8x128xbf16>
    %155 = vector.shape_cast %154 : vector<8x8x128xbf16> to vector<64x128xbf16>
    %c1_193 = arith.constant 1 : index
    %c0_194 = arith.constant 0 : index
    %c0_195 = arith.constant 0 : index
    %156 = vector.load %arg4[%c1_193, %c0_194, %c0_195] : memref<9x128x128xbf16, #tpu.memory_space<vmem>>, vector<1x128x128xbf16>
    %157 = vector.shape_cast %156 : vector<1x128x128xbf16> to vector<128x128xbf16>
    %cst_196 = arith.constant dense<0.000000e+00> : vector<64x128xf32>
    %158 = tpu.matmul %155, %157, %cst_196 {dimension_numbers = #tpu.dot_dimension_numbers<[1], [0], [0], [1], [0, 0, 1, 1], [], []>} : vector<64x128xbf16>, vector<128x128xbf16>, vector<64x128xf32> -> vector<64x128xf32>
    %159 = arith.addf %153, %158 : vector<64x128xf32>
    %c0_197 = arith.constant 0 : index
    %c9_198 = arith.constant 9 : index
    %c0_199 = arith.constant 0 : index
    %160 = vector.load %arg9[%c0_197, %c9_198, %c0_199] : memref<10x24x128xbf16, #tpu.memory_space<vmem>>, vector<8x8x128xbf16>
    %161 = vector.shape_cast %160 : vector<8x8x128xbf16> to vector<64x128xbf16>
    %c2_200 = arith.constant 2 : index
    %c0_201 = arith.constant 0 : index
    %c0_202 = arith.constant 0 : index
    %162 = vector.load %arg4[%c2_200, %c0_201, %c0_202] : memref<9x128x128xbf16, #tpu.memory_space<vmem>>, vector<1x128x128xbf16>
    %163 = vector.shape_cast %162 : vector<1x128x128xbf16> to vector<128x128xbf16>
    %cst_203 = arith.constant dense<0.000000e+00> : vector<64x128xf32>
    %164 = tpu.matmul %161, %163, %cst_203 {dimension_numbers = #tpu.dot_dimension_numbers<[1], [0], [0], [1], [0, 0, 1, 1], [], []>} : vector<64x128xbf16>, vector<128x128xbf16>, vector<64x128xf32> -> vector<64x128xf32>
    %165 = arith.addf %159, %164 : vector<64x128xf32>
    %c1_204 = arith.constant 1 : index
    %c7_205 = arith.constant 7 : index
    %c0_206 = arith.constant 0 : index
    %166 = vector.load %arg9[%c1_204, %c7_205, %c0_206] : memref<10x24x128xbf16, #tpu.memory_space<vmem>>, vector<8x8x128xbf16>
    %167 = vector.shape_cast %166 : vector<8x8x128xbf16> to vector<64x128xbf16>
    %c3_207 = arith.constant 3 : index
    %c0_208 = arith.constant 0 : index
    %c0_209 = arith.constant 0 : index
    %168 = vector.load %arg4[%c3_207, %c0_208, %c0_209] : memref<9x128x128xbf16, #tpu.memory_space<vmem>>, vector<1x128x128xbf16>
    %169 = vector.shape_cast %168 : vector<1x128x128xbf16> to vector<128x128xbf16>
    %cst_210 = arith.constant dense<0.000000e+00> : vector<64x128xf32>
    %170 = tpu.matmul %167, %169, %cst_210 {dimension_numbers = #tpu.dot_dimension_numbers<[1], [0], [0], [1], [0, 0, 1, 1], [], []>} : vector<64x128xbf16>, vector<128x128xbf16>, vector<64x128xf32> -> vector<64x128xf32>
    %171 = arith.addf %165, %170 : vector<64x128xf32>
    %c1_211 = arith.constant 1 : index
    %c8_212 = arith.constant 8 : index
    %c0_213 = arith.constant 0 : index
    %172 = vector.load %arg9[%c1_211, %c8_212, %c0_213] : memref<10x24x128xbf16, #tpu.memory_space<vmem>>, vector<8x8x128xbf16>
    %173 = vector.shape_cast %172 : vector<8x8x128xbf16> to vector<64x128xbf16>
    %c4_214 = arith.constant 4 : index
    %c0_215 = arith.constant 0 : index
    %c0_216 = arith.constant 0 : index
    %174 = vector.load %arg4[%c4_214, %c0_215, %c0_216] : memref<9x128x128xbf16, #tpu.memory_space<vmem>>, vector<1x128x128xbf16>
    %175 = vector.shape_cast %174 : vector<1x128x128xbf16> to vector<128x128xbf16>
    %cst_217 = arith.constant dense<0.000000e+00> : vector<64x128xf32>
    %176 = tpu.matmul %173, %175, %cst_217 {dimension_numbers = #tpu.dot_dimension_numbers<[1], [0], [0], [1], [0, 0, 1, 1], [], []>} : vector<64x128xbf16>, vector<128x128xbf16>, vector<64x128xf32> -> vector<64x128xf32>
    %177 = arith.addf %171, %176 : vector<64x128xf32>
    %c1_218 = arith.constant 1 : index
    %c9_219 = arith.constant 9 : index
    %c0_220 = arith.constant 0 : index
    %178 = vector.load %arg9[%c1_218, %c9_219, %c0_220] : memref<10x24x128xbf16, #tpu.memory_space<vmem>>, vector<8x8x128xbf16>
    %179 = vector.shape_cast %178 : vector<8x8x128xbf16> to vector<64x128xbf16>
    %c5_221 = arith.constant 5 : index
    %c0_222 = arith.constant 0 : index
    %c0_223 = arith.constant 0 : index
    %180 = vector.load %arg4[%c5_221, %c0_222, %c0_223] : memref<9x128x128xbf16, #tpu.memory_space<vmem>>, vector<1x128x128xbf16>
    %181 = vector.shape_cast %180 : vector<1x128x128xbf16> to vector<128x128xbf16>
    %cst_224 = arith.constant dense<0.000000e+00> : vector<64x128xf32>
    %182 = tpu.matmul %179, %181, %cst_224 {dimension_numbers = #tpu.dot_dimension_numbers<[1], [0], [0], [1], [0, 0, 1, 1], [], []>} : vector<64x128xbf16>, vector<128x128xbf16>, vector<64x128xf32> -> vector<64x128xf32>
    %183 = arith.addf %177, %182 : vector<64x128xf32>
    %c2_225 = arith.constant 2 : index
    %c7_226 = arith.constant 7 : index
    %c0_227 = arith.constant 0 : index
    %184 = vector.load %arg9[%c2_225, %c7_226, %c0_227] : memref<10x24x128xbf16, #tpu.memory_space<vmem>>, vector<8x8x128xbf16>
    %185 = vector.shape_cast %184 : vector<8x8x128xbf16> to vector<64x128xbf16>
    %c6_228 = arith.constant 6 : index
    %c0_229 = arith.constant 0 : index
    %c0_230 = arith.constant 0 : index
    %186 = vector.load %arg4[%c6_228, %c0_229, %c0_230] : memref<9x128x128xbf16, #tpu.memory_space<vmem>>, vector<1x128x128xbf16>
    %187 = vector.shape_cast %186 : vector<1x128x128xbf16> to vector<128x128xbf16>
    %cst_231 = arith.constant dense<0.000000e+00> : vector<64x128xf32>
    %188 = tpu.matmul %185, %187, %cst_231 {dimension_numbers = #tpu.dot_dimension_numbers<[1], [0], [0], [1], [0, 0, 1, 1], [], []>} : vector<64x128xbf16>, vector<128x128xbf16>, vector<64x128xf32> -> vector<64x128xf32>
    %189 = arith.addf %183, %188 : vector<64x128xf32>
    %c2_232 = arith.constant 2 : index
    %c8_233 = arith.constant 8 : index
    %c0_234 = arith.constant 0 : index
    %190 = vector.load %arg9[%c2_232, %c8_233, %c0_234] : memref<10x24x128xbf16, #tpu.memory_space<vmem>>, vector<8x8x128xbf16>
    %191 = vector.shape_cast %190 : vector<8x8x128xbf16> to vector<64x128xbf16>
    %c7_235 = arith.constant 7 : index
    %c0_236 = arith.constant 0 : index
    %c0_237 = arith.constant 0 : index
    %192 = vector.load %arg4[%c7_235, %c0_236, %c0_237] : memref<9x128x128xbf16, #tpu.memory_space<vmem>>, vector<1x128x128xbf16>
    %193 = vector.shape_cast %192 : vector<1x128x128xbf16> to vector<128x128xbf16>
    %cst_238 = arith.constant dense<0.000000e+00> : vector<64x128xf32>
    %194 = tpu.matmul %191, %193, %cst_238 {dimension_numbers = #tpu.dot_dimension_numbers<[1], [0], [0], [1], [0, 0, 1, 1], [], []>} : vector<64x128xbf16>, vector<128x128xbf16>, vector<64x128xf32> -> vector<64x128xf32>
    %195 = arith.addf %189, %194 : vector<64x128xf32>
    %c2_239 = arith.constant 2 : index
    %c9_240 = arith.constant 9 : index
    %c0_241 = arith.constant 0 : index
    %196 = vector.load %arg9[%c2_239, %c9_240, %c0_241] : memref<10x24x128xbf16, #tpu.memory_space<vmem>>, vector<8x8x128xbf16>
    %197 = vector.shape_cast %196 : vector<8x8x128xbf16> to vector<64x128xbf16>
    %c8_242 = arith.constant 8 : index
    %c0_243 = arith.constant 0 : index
    %c0_244 = arith.constant 0 : index
    %198 = vector.load %arg4[%c8_242, %c0_243, %c0_244] : memref<9x128x128xbf16, #tpu.memory_space<vmem>>, vector<1x128x128xbf16>
    %199 = vector.shape_cast %198 : vector<1x128x128xbf16> to vector<128x128xbf16>
    %cst_245 = arith.constant dense<0.000000e+00> : vector<64x128xf32>
    %200 = tpu.matmul %197, %199, %cst_245 {dimension_numbers = #tpu.dot_dimension_numbers<[1], [0], [0], [1], [0, 0, 1, 1], [], []>} : vector<64x128xbf16>, vector<128x128xbf16>, vector<64x128xf32> -> vector<64x128xf32>
    %201 = arith.addf %195, %200 : vector<64x128xf32>
    %202 = vector.broadcast %148 : vector<1x128xf32> to vector<64x128xf32>
    %203 = arith.addf %201, %202 : vector<64x128xf32>
    %cst_246 = arith.constant 0.000000e+00 : f32
    %204 = vector.broadcast %cst_246 : f32 to vector<64x128xf32>
    %205 = arith.maximumf %203, %204 : vector<64x128xf32>
    %206 = vector.extract_strided_slice %205 {offsets = [0, 0], sizes = [64, 4], strides = [1, 1]} : vector<64x128xf32> to vector<64x4xf32>
    %207 = vector.shape_cast %206 : vector<64x4xf32> to vector<8x8x4xf32>
    %208 = arith.truncf %207 : vector<8x8x4xf32> to vector<8x8x4xbf16>
    %c0_247 = arith.constant 0 : index
    %c0_248 = arith.constant 0 : index
    %c0_249 = arith.constant 0 : index
    %c0_250 = arith.constant 0 : index
    %209 = vector.load %arg6[%c0_247, %c0_248, %c0_249, %c0_250] : memref<1x8x8x4xbf16, #tpu.memory_space<vmem>>, vector<1x8x8x4xbf16>
    %210 = vector.shape_cast %209 : vector<1x8x8x4xbf16> to vector<8x8x4xbf16>
    %211 = vector.shape_cast %208 : vector<8x8x4xbf16> to vector<1x8x8x4xbf16>
    tpu.vector_store %arg6[%c0_247, %c0_248, %c0_249, %c0_250], %211 {strides = array<i32>} : memref<1x8x8x4xbf16, #tpu.memory_space<vmem>>, vector<1x8x8x4xbf16>,
    return
  }
  func.func @transform_0(%arg0: i32) -> (i32, i32, i32, i32, i32) {
    %c0_i32 = arith.constant 0 : i32
    %c0_i32_0 = arith.constant 0 : i32
    %c0_i32_1 = arith.constant 0 : i32
    %c0_i32_2 = arith.constant 0 : i32
    %c0_i32_3 = arith.constant 0 : i32
    return %arg0, %c0_i32, %c0_i32_0, %c0_i32_1, %c0_i32_2 : i32, i32, i32, i32, i32
  }
  func.func @transform_1(%arg0: i32) -> (i32, i32, i32) {
    %c0_i32 = arith.constant 0 : i32
    %c0_i32_0 = arith.constant 0 : i32
    %c0_i32_1 = arith.constant 0 : i32
    %c0_i32_2 = arith.constant 0 : i32
    return %c0_i32, %c0_i32_0, %c0_i32_1 : i32, i32, i32
  }
  func.func @transform_2(%arg0: i32) -> (i32, i32) {
    %c0_i32 = arith.constant 0 : i32
    %c0_i32_0 = arith.constant 0 : i32
    %c0_i32_1 = arith.constant 0 : i32
    return %c0_i32, %c0_i32_0 : i32, i32
  }
  func.func @transform_3(%arg0: i32) -> (i32, i32, i32) {
    %c0_i32 = arith.constant 0 : i32
    %c0_i32_0 = arith.constant 0 : i32
    %c0_i32_1 = arith.constant 0 : i32
    %c0_i32_2 = arith.constant 0 : i32
    return %c0_i32, %c0_i32_0, %c0_i32_1 : i32, i32, i32
  }
  func.func @transform_4(%arg0: i32) -> (i32, i32) {
    %c0_i32 = arith.constant 0 : i32
    %c0_i32_0 = arith.constant 0 : i32
    %c0_i32_1 = arith.constant 0 : i32
    return %c0_i32, %c0_i32_0 : i32, i32
  }
  func.func @transform_5(%arg0: i32) -> (i32, i32, i32, i32) {
    %c0_i32 = arith.constant 0 : i32
    %c0_i32_0 = arith.constant 0 : i32
    %c0_i32_1 = arith.constant 0 : i32
    %c0_i32_2 = arith.constant 0 : i32
    return %arg0, %c0_i32, %c0_i32_0, %c0_i32_1 : i32, i32, i32, i32
  }
}

</mosaic_0001>

<llo_original>
// kernel: tpu_custom_call.1
$region0: #{tpu_custom_call.1}
  #allocation0 [shape = 'u32[]', space=smem, size = 0x4, offset = 0x4, fixed_abs, tag = 'smem constant byte address 0x4 - core index']
  #allocation1 [shape = 'u32[72,128]{1,0:T(1,128)}', space=vmem, size = 0x9000, scoped, tag = 'internal scratch']
  #allocation2 [shape = 'bf16[10,24,128]{2,1,0:T(8,128)(2,1)}', space=vmem, size = 0xf000, scoped, tag = 'scratch operand']
  #allocation3 [shape = 'bf16[10,24,128]{2,1,0:T(8,128)(2,1)}', space=vmem, size = 0xf000, scoped, tag = 'scratch operand']
  #allocation4 [shape = 'bf16[10,24,128]{2,1,0:T(8,128)(2,1)}', space=vmem, size = 0xf000, scoped, tag = 'scratch operand']
  %s0 = inlined_call_operand.hbm [shape: bf16[2,4,8,8,8], index: 0, kind: input, shape index: {}]
  %s1 = inlined_call_operand.hbm [shape: bf16[9,128,128], index: 1, kind: input, shape index: {}]
  %s2 = inlined_call_operand.vmem [shape: f32[1,128], index: 2, kind: input, shape index: {}]
  %s3 = inlined_call_operand.hbm [shape: bf16[9,128,128], index: 3, kind: input, shape index: {}]
  %s4 = inlined_call_operand.vmem [shape: f32[1,128], index: 4, kind: input, shape index: {}]
  %s5 = inlined_call_operand.vmem [shape: bf16[2,8,8,4], index: 5, kind: output, shape index: {}]
  %s6 = sld [smem:[#allocation0]]
  $region65: #{tpu_custom_call.1} parent=0
    _
  %s8 = ssub.s32 1, %s6
  %s9 = scalar_select 0, %s8, %s6
  $region1: #{tpu_custom_call.1} parent=0
    #allocation5 [shape = 'u8[131072]{0}', space=vmem, size = 0x20000, scoped, tag = 'input window, operand 0']
    #allocation6 [shape = 's32[2]{0}', space=sflag, size = 0x8, scoped, tag = 'scoped memory for tpu_custom_call.1']
    #allocation7 [shape = 'u8[294912]{0}', space=vmem, size = 0x48000, scoped, tag = 'input window, operand 1, single buffered']
    #allocation8 [shape = 's32[1]{0}', space=sflag, size = 0x4, scoped, tag = 'scoped memory for tpu_custom_call.1']
    #allocation9 [shape = 'u8[294912]{0}', space=vmem, size = 0x48000, scoped, tag = 'input window, operand 3, single buffered']
    %10 = vsyncpa [#allocation6], 0
    %s11 = scalar_lea.sflag [#allocation6], 1
    %12 = vsyncpa %s11, 0
    %13 = vsyncpa [#allocation8], 0
    loop: start=0, step=1, limit=4
    $region2: #{tpu_custom_call.1} parent=1 // loop_pre_header
      _
    $region3: #{tpu_custom_call.1} parent=1 // loop_header
      %s15 = sphi 0, %s19
      %p16 = scmp.ge.s32.totalorder %s15, 4
      %s25 = sphi 0, %s27
      %s28 = sphi 0, %s25
      %s29 = sphi 0, %s28
      %s45 = sphi 0, %s29
      %s49 = sphi 0, %s49
      %s51 = sphi 0, %s49
      %s52 = sphi 0, %s51
      %s66 = sphi 0, %s52
      %s70 = sphi 0, %s70
      %s72 = sphi 0, %s70
      %s73 = sphi 0, %s72
      %s87 = sphi 0, %s73
      %s91 = sphi 0, %s91
      %s93 = sphi 0, %s91
      %s94 = sphi 0, %s93
      %s108 = sphi 0, %s94
      %s112 = sphi 0, %s112
      %s114 = sphi 0, %s112
      %s115 = sphi 0, %s114
      %s129 = sphi 0, %s115
      %s135 = sphi 0, %s137
      %s138 = sphi 0, %s135
      %s139 = sphi 0, %s138
      %s155 = sphi 0, %s139
    $region4: #{tpu_custom_call.1} parent=1 // loop_header_branch
      %18 = sbr.rel (%p16) target = $region8
    $region5: #{tpu_custom_call.1} parent=1 // loop_body
      %s20 = ssub.s32 %s15, 1
      %s21 = ssub.s32 %s15, 2
      %s22 = sadd.s32 %s15, 1
      %s23 = ssub.s32 %s15, %s22
      %p24 = scmp.eq.s32.totalorder %s23, 0
      %s26 = sadd.s32 %s25, 1
      %s27 = scalar_select %p24, %s25, %s26
      %p30 = pneg %p24
      %p31 = scmp.eq.s32.totalorder %s15, 1
      %p32 = por %p30, %p31
      %p33 = scmp.ne.s32.totalorder %s25, %s28
      %p34 = scmp.eq.s32.totalorder %s15, 0
      %p35 = por %p33, %p34
      %p36 = scmp.ne.s32.totalorder %s25, %s28
      %p37 = scmp.eq.s32.totalorder %s20, 1
      %p38 = por %p36, %p37
      %p39 = scmp.ne.s32.totalorder %s28, %s29
      %p40 = scmp.eq.s32.totalorder %s20, 0
      %p41 = por %p39, %p40
      %p42 = scmp.ne.s32.totalorder %s28, %s29
      %p43 = scmp.eq.s32.totalorder %s21, 1
      %p44 = por %p42, %p43
      %p46 = scmp.ne.s32.totalorder %s29, %s45
      %p47 = scmp.eq.s32.totalorder %s21, 0
      %p48 = por %p46, %p47
      %s50 = sadd.s32 %s49, 1
      %p53 = scmp.eq.s32.totalorder %s15, 1
      %p54 = scmp.ne.s32.totalorder %s49, %s51
      %p55 = scmp.eq.s32.totalorder %s15, 0
      %p56 = por %p54, %p55
      %p57 = scmp.ne.s32.totalorder %s49, %s51
      %p58 = scmp.eq.s32.totalorder %s20, 1
      %p59 = por %p57, %p58
      %p60 = scmp.ne.s32.totalorder %s51, %s52
      %p61 = scmp.eq.s32.totalorder %s20, 0
      %p62 = por %p60, %p61
      %p63 = scmp.ne.s32.totalorder %s51, %s52
      %p64 = scmp.eq.s32.totalorder %s21, 1
      %p65 = por %p63, %p64
      %p67 = scmp.ne.s32.totalorder %s52, %s66
      %p68 = scmp.eq.s32.totalorder %s21, 0
      %p69 = por %p67, %p68
      %s71 = sadd.s32 %s70, 1
      %p74 = scmp.eq.s32.totalorder %s15, 1
      %p75 = scmp.ne.s32.totalorder %s70, %s72
      %p76 = scmp.eq.s32.totalorder %s15, 0
      %p77 = por %p75, %p76
      %p78 = scmp.ne.s32.totalorder %s70, %s72
      %p79 = scmp.eq.s32.totalorder %s20, 1
      %p80 = por %p78, %p79
      %p81 = scmp.ne.s32.totalorder %s72, %s73
      %p82 = scmp.eq.s32.totalorder %s20, 0
      %p83 = por %p81, %p82
      %p84 = scmp.ne.s32.totalorder %s72, %s73
      %p85 = scmp.eq.s32.totalorder %s21, 1
      %p86 = por %p84, %p85
      %p88 = scmp.ne.s32.totalorder %s73, %s87
      %p89 = scmp.eq.s32.totalorder %s21, 0
      %p90 = por %p88, %p89
      %s92 = sadd.s32 %s91, 1
      %p95 = scmp.eq.s32.totalorder %s15, 1
      %p96 = scmp.ne.s32.totalorder %s91, %s93
      %p97 = scmp.eq.s32.totalorder %s15, 0
      %p98 = por %p96, %p97
      %p99 = scmp.ne.s32.totalorder %s91, %s93
      %p100 = scmp.eq.s32.totalorder %s20, 1
      %p101 = por %p99, %p100
      %p102 = scmp.ne.s32.totalorder %s93, %s94
      %p103 = scmp.eq.s32.totalorder %s20, 0
      %p104 = por %p102, %p103
      %p105 = scmp.ne.s32.totalorder %s93, %s94
      %p106 = scmp.eq.s32.totalorder %s21, 1
      %p107 = por %p105, %p106
      %p109 = scmp.ne.s32.totalorder %s94, %s108
      %p110 = scmp.eq.s32.totalorder %s21, 0
      %p111 = por %p109, %p110
      %s113 = sadd.s32 %s112, 1
      %p116 = scmp.eq.s32.totalorder %s15, 1
      %p117 = scmp.ne.s32.totalorder %s112, %s114
      %p118 = scmp.eq.s32.totalorder %s15, 0
      %p119 = por %p117, %p118
      %p120 = scmp.ne.s32.totalorder %s112, %s114
      %p121 = scmp.eq.s32.totalorder %s20, 1
      %p122 = por %p120, %p121
      %p123 = scmp.ne.s32.totalorder %s114, %s115
      %p124 = scmp.eq.s32.totalorder %s20, 0
      %p125 = por %p123, %p124
      %p126 = scmp.ne.s32.totalorder %s114, %s115
      %p127 = scmp.eq.s32.totalorder %s21, 1
      %p128 = por %p126, %p127
      %p130 = scmp.ne.s32.totalorder %s115, %s129
      %p131 = scmp.eq.s32.totalorder %s21, 0
      %p132 = por %p130, %p131
      %s133 = ssub.s32 %s15, %s22
      %p134 = scmp.eq.s32.totalorder %s133, 0
      %s136 = sadd.s32 %s135, 1
      %s137 = scalar_select %p134, %s135, %s136
      %p140 = pneg %p134
      %p141 = scmp.eq.s32.totalorder %s15, 1
      %p142 = por %p140, %p141
      %p143 = scmp.ne.s32.totalorder %s135, %s138
      %p144 = scmp.eq.s32.totalorder %s15, 0
      %p145 = por %p143, %p144
      %p146 = scmp.ne.s32.totalorder %s135, %s138
      %p147 = scmp.eq.s32.totalorder %s20, 1
      %p148 = por %p146, %p147
      %p149 = scmp.ne.s32.totalorder %s138, %s139
      %p150 = scmp.eq.s32.totalorder %s20, 0
      %p151 = por %p149, %p150
      %p152 = scmp.ne.s32.totalorder %s138, %s139
      %p153 = scmp.eq.s32.totalorder %s21, 1
      %p154 = por %p152, %p153
      %p156 = scmp.ne.s32.totalorder %s139, %s155
      %p157 = scmp.eq.s32.totalorder %s21, 0
      %p158 = por %p156, %p157
      %p159 = scmp.le.s32.totalorder 1, %s15
      %p160 = scmp.lt.s32.totalorder %s15, 3
      %p161 = pnand %p159, %p160
      %p162 = pneg %p161
      // Predicated region
      $region9: #{tpu_custom_call.1} parent=5 // pred_check
        _
      $region10: #{tpu_custom_call.1} parent=5 // pred_check_branch
        %164 = sbr.rel (%p161) target = $region12
      $region11: #{tpu_custom_call.1} parent=5 // pred_region
        %s165 = ssub.s32 %s15, 1
        // Predicated region
        $region13: #{tpu_custom_call.1} parent=11 // pred_check
          %p166 = pneg %p62
        $region14: #{tpu_custom_call.1} parent=11 // pred_check_branch
          %168 = sbr.rel (%p166) target = $region16
        $region15: #{tpu_custom_call.1} parent=11 // pred_region
          %170 = vsyncadd [#allocation8], 0
          %s171 = sshll.u32 %s1, 4
          %s172 = int_to_ptr.hbm [resolvable:$true] %s171
          %s173 = sshll.u32 [#allocation7], 4
          %s174 = int_to_ptr.vmem [resolvable:$true] %s173
          %179 = dma.hbm_to_vmem [thread:$0]  %s172, 9216, %s174, [#allocation8], 64, 64, 4
        $region16: #{tpu_custom_call.1} parent=11 // pred_fallthru
          _
        // Predicated region
        $region17: #{tpu_custom_call.1} parent=11 // pred_check
          %p180 = pneg %p83
        $region18: #{tpu_custom_call.1} parent=11 // pred_check_branch
          %182 = sbr.rel (%p180) target = $region20
        $region19: #{tpu_custom_call.1} parent=11 // pred_region
          _
        $region20: #{tpu_custom_call.1} parent=11 // pred_fallthru
          _
        // Predicated region
        $region21: #{tpu_custom_call.1} parent=11 // pred_check
          %p183 = pneg %p104
        $region22: #{tpu_custom_call.1} parent=11 // pred_check_branch
          %185 = sbr.rel (%p183) target = $region24
        $region23: #{tpu_custom_call.1} parent=11 // pred_region
          %187 = vsyncadd [#allocation8], 0
          %s188 = sshll.u32 %s3, 4
          %s189 = int_to_ptr.hbm [resolvable:$true] %s188
          %s190 = sshll.u32 [#allocation9], 4
          %s191 = int_to_ptr.vmem [resolvable:$true] %s190
          %196 = dma.hbm_to_vmem [thread:$0]  %s189, 9216, %s191, [#allocation8], 64, 64, 4
        $region24: #{tpu_custom_call.1} parent=11 // pred_fallthru
          _
        // Predicated region
        $region25: #{tpu_custom_call.1} parent=11 // pred_check
          %p197 = pneg %p125
        $region26: #{tpu_custom_call.1} parent=11 // pred_check_branch
          %199 = sbr.rel (%p197) target = $region28
        $region27: #{tpu_custom_call.1} parent=11 // pred_region
          _
        $region28: #{tpu_custom_call.1} parent=11 // pred_fallthru
          _
      $region12: #{tpu_custom_call.1} parent=5 // pred_fallthru
        _
      %p200 = scmp.lt.s32.totalorder %s15, 2
      // Predicated region
      $region29: #{tpu_custom_call.1} parent=5 // pred_check
        %p201 = pneg %p200
      $region30: #{tpu_custom_call.1} parent=5 // pred_check_branch
        %203 = sbr.rel (%p201) target = $region32
      $region31: #{tpu_custom_call.1} parent=5 // pred_region
        // Predicated region
        $region33: #{tpu_custom_call.1} parent=31 // pred_check
          %p204 = pneg %p35
        $region34: #{tpu_custom_call.1} parent=31 // pred_check_branch
          %206 = sbr.rel (%p204) target = $region36
        $region35: #{tpu_custom_call.1} parent=31 // pred_region
          %s207 = sand.u32 %s25, 1
          %s208 = scalar_lea.sflag [#allocation6], %s207
          %s209 = sand.u32 %s25, 1
          %s210 = smul.addr %s209, 128
          %s211 = scalar_lea.vmem [#allocation5], %s210
          %213 = vsyncadd %s208, 0
          %s214 = smul.addr %s15, 32
          %s215 = smul.addr %s214, 4
          %s216 = scalar_lea.hbm %s0, %s215
          %s217 = sshll.u32 %s216, 4
          %s218 = int_to_ptr.hbm [resolvable:$true] %s217
          %s219 = sshll.u32 %s211, 4
          %s220 = int_to_ptr.vmem [resolvable:$true] %s219
          %225 = dma.hbm_to_vmem [thread:$0]  %s218, 2048, %s220, %s208, 64, 64, 4
        $region36: #{tpu_custom_call.1} parent=31 // pred_fallthru
          _
      $region32: #{tpu_custom_call.1} parent=5 // pred_fallthru
        _
      %p226 = scmp.le.s32.totalorder 1, %s15
      %p227 = scmp.lt.s32.totalorder %s15, 3
      %p228 = pnand %p226, %p227
      %p229 = pneg %p228
      // Predicated region
      $region37: #{tpu_custom_call.1} parent=5 // pred_check
        _
      $region38: #{tpu_custom_call.1} parent=5 // pred_check_branch
        %231 = sbr.rel (%p228) target = $region40
      $region39: #{tpu_custom_call.1} parent=5 // pred_region
        %s232 = ssub.s32 %s15, 1
        %s233 = sand.u32 %s28, 1
        %s234 = scalar_lea.sflag [#allocation6], %s233
        %s235 = sand.u32 %s28, 1
        %s236 = smul.addr %s235, 128
        %s237 = scalar_lea.vmem [#allocation5], %s236
        // Predicated region
        $region41: #{tpu_custom_call.1} parent=39 // pred_check
          %p238 = pneg %p41
        $region42: #{tpu_custom_call.1} parent=39 // pred_check_branch
          %240 = sbr.rel (%p238) target = $region44
        $region43: #{tpu_custom_call.1} parent=39 // pred_region
          %242 = dma.done %s234, 2048
        $region44: #{tpu_custom_call.1} parent=39 // pred_fallthru
          _
        // Predicated region
        $region45: #{tpu_custom_call.1} parent=39 // pred_check
          %p243 = pneg %p62
        $region46: #{tpu_custom_call.1} parent=39 // pred_check_branch
          %245 = sbr.rel (%p243) target = $region48
        $region47: #{tpu_custom_call.1} parent=39 // pred_region
          %247 = dma.done [#allocation8], 9216
        $region48: #{tpu_custom_call.1} parent=39 // pred_fallthru
          _
        // Predicated region
        $region49: #{tpu_custom_call.1} parent=39 // pred_check
          %p248 = pneg %p104
        $region50: #{tpu_custom_call.1} parent=39 // pred_check_branch
          %250 = sbr.rel (%p248) target = $region52
        $region51: #{tpu_custom_call.1} parent=39 // pred_region
          %252 = dma.done [#allocation8], 9216
        $region52: #{tpu_custom_call.1} parent=39 // pred_fallthru
          _
        %s253 = sand.u32 %s28, 1
        %s254 = scalar_lea.sflag [#allocation6], %s253
        %s255 = sand.u32 %s28, 1
        %s256 = smul.addr %s255, 128
        %s257 = scalar_lea.vmem [#allocation5], %s256
        %p258 = pneg %p41
        %p259 = pneg %p38
        %p260 = pneg %p62
        %p261 = pneg %p59
        %p262 = pneg %p83
        %p263 = pneg %p80
        %p264 = pneg %p104
        %p265 = pneg %p101
        %p266 = pneg %p125
        %p267 = pneg %p122
        %p268 = pneg %p151
        %p269 = pneg %p148
        %p270 = scmp.lt.s32.totalorder %s20, 1
        %s271 = scalar_select %p270, %s20, 1
        %s272 = smul.addr %s271, 8
        %s273 = smul.addr %s272, 4
        %s274 = scalar_lea.vmem %s5, %s273
        %p275 = scmp.lt.s32.totalorder %s20, 1
        %s276 = scalar_select %p275, %s20, 1
        %s277 = smul.addr %s276, 8
        %s278 = smul.addr %s277, 4
        %s279 = scalar_lea.vmem %s5, %s278
        %281 = vst [vmem:[#allocation2] sm:$0xf] 0
        %282 = vst [vmem:[#allocation2 + $0x4] sm:$0xf] 0
        %283 = vst [vmem:[#allocation2 + $0x8] sm:$0xf] 0
        %284 = vst [vmem:[#allocation2 + $0xc] sm:$0xf] 0
        %285 = vst [vmem:[#allocation2 + $0x10] sm:$0xf] 0
        %286 = vst [vmem:[#allocation2 + $0x14] sm:$0xf] 0
        %287 = vst [vmem:[#allocation2 + $0x18] sm:$0xf] 0
        %288 = vst [vmem:[#allocation2 + $0x1c] sm:$0xf] 0
        %289 = vst [vmem:[#allocation2 + $0x20] sm:$0xf] 0
        %290 = vst [vmem:[#allocation2 + $0x24] sm:$0xf] 0
        %291 = vst [vmem:[#allocation2 + $0x28] sm:$0xf] 0
        %292 = vst [vmem:[#allocation2 + $0x2c] sm:$0xf] 0
        %293 = vst [vmem:[#allocation2 + $0x30] sm:$0xf] 0
        %294 = vst [vmem:[#allocation2 + $0x34] sm:$0xf] 0
        %295 = vst [vmem:[#allocation2 + $0x38] sm:$0xf] 0
        %296 = vst [vmem:[#allocation2 + $0x3c] sm:$0xf] 0
        %297 = vst [vmem:[#allocation2 + $0x40] sm:$0xf] 0
        %298 = vst [vmem:[#allocation2 + $0x44] sm:$0xf] 0
        %299 = vst [vmem:[#allocation2 + $0x48] sm:$0xf] 0
        %300 = vst [vmem:[#allocation2 + $0x4c] sm:$0xf] 0
        %301 = vst [vmem:[#allocation2 + $0x50] sm:$0xf] 0
        %302 = vst [vmem:[#allocation2 + $0x54] sm:$0xf] 0
        %303 = vst [vmem:[#allocation2 + $0x58] sm:$0xf] 0
        %304 = vst [vmem:[#allocation2 + $0x5c] sm:$0xf] 0
        %305 = vst [vmem:[#allocation2 + $0x60] sm:$0xf] 0
        %306 = vst [vmem:[#allocation2 + $0x64] sm:$0xf] 0
        %307 = vst [vmem:[#allocation2 + $0x68] sm:$0xf] 0
        %308 = vst [vmem:[#allocation2 + $0x6c] sm:$0xf] 0
        %309 = vst [vmem:[#allocation2 + $0x70] sm:$0xf] 0
        %310 = vst [vmem:[#allocation2 + $0x74] sm:$0xf] 0
        %311 = vst [vmem:[#allocation3] sm:$0xf] 0
        %312 = vst [vmem:[#allocation3 + $0xc] sm:$0xf] 0
        %313 = vst [vmem:[#allocation3 + $0x18] sm:$0xf] 0
        %314 = vst [vmem:[#allocation3 + $0x24] sm:$0xf] 0
        %315 = vst [vmem:[#allocation3 + $0x30] sm:$0xf] 0
        %316 = vst [vmem:[#allocation3 + $0x3c] sm:$0xf] 0
        %317 = vst [vmem:[#allocation3 + $0x48] sm:$0xf] 0
        %318 = vst [vmem:[#allocation3 + $0x54] sm:$0xf] 0
        %319 = vst [vmem:[#allocation3 + $0x60] sm:$0xf] 0
        %320 = vst [vmem:[#allocation3 + $0x6c] sm:$0xf] 0
        %321 = vst [vmem:[#allocation3 + $0x8] sm:$0xf] 0
        %322 = vst [vmem:[#allocation3 + $0x14] sm:$0xf] 0
        %323 = vst [vmem:[#allocation3 + $0x20] sm:$0xf] 0
        %324 = vst [vmem:[#allocation3 + $0x2c] sm:$0xf] 0
        %325 = vst [vmem:[#allocation3 + $0x38] sm:$0xf] 0
        %326 = vst [vmem:[#allocation3 + $0x44] sm:$0xf] 0
        %327 = vst [vmem:[#allocation3 + $0x50] sm:$0xf] 0
        %328 = vst [vmem:[#allocation3 + $0x5c] sm:$0xf] 0
        %329 = vst [vmem:[#allocation3 + $0x68] sm:$0xf] 0
        %330 = vst [vmem:[#allocation3 + $0x74] sm:$0xf] 0
        %331 = vst [vmem:[#allocation3 + $0x4] sm:$0xf] 0
        %s332 = scalar_lea.vmem [#allocation3], 108
        %333 = vst [vmem:[%s332 + $0x4] sm:$0xf] 0
        %334 = vst [vmem:[#allocation4] sm:$0xf] 0
        %335 = vst [vmem:[#allocation4 + $0xc] sm:$0xf] 0
        %336 = vst [vmem:[#allocation4 + $0x18] sm:$0xf] 0
        %337 = vst [vmem:[#allocation4 + $0x24] sm:$0xf] 0
        %338 = vst [vmem:[#allocation4 + $0x30] sm:$0xf] 0
        %339 = vst [vmem:[#allocation4 + $0x3c] sm:$0xf] 0
        %340 = vst [vmem:[#allocation4 + $0x48] sm:$0xf] 0
        %341 = vst [vmem:[#allocation4 + $0x54] sm:$0xf] 0
        %342 = vst [vmem:[#allocation4 + $0x60] sm:$0xf] 0
        %343 = vst [vmem:[#allocation4 + $0x6c] sm:$0xf] 0
        %344 = vst [vmem:[#allocation4 + $0x8] sm:$0xf] 0
        %345 = vst [vmem:[#allocation4 + $0x14] sm:$0xf] 0
        %346 = vst [vmem:[#allocation4 + $0x20] sm:$0xf] 0
        %347 = vst [vmem:[#allocation4 + $0x2c] sm:$0xf] 0
        %348 = vst [vmem:[#allocation4 + $0x38] sm:$0xf] 0
        %349 = vst [vmem:[#allocation4 + $0x44] sm:$0xf] 0
        %350 = vst [vmem:[#allocation4 + $0x50] sm:$0xf] 0
        %351 = vst [vmem:[#allocation4 + $0x5c] sm:$0xf] 0
        %352 = vst [vmem:[#allocation4 + $0x68] sm:$0xf] 0
        %353 = vst [vmem:[#allocation4 + $0x74] sm:$0xf] 0
        %354 = vst [vmem:[#allocation4 + $0x4] sm:$0xf] 0
        %s355 = scalar_lea.vmem [#allocation4], 108
        %356 = vst [vmem:[%s355 + $0x4] sm:$0xf] 0
        %v357 = vld [vmem:[%s237] sm:$0xf]
        %v358 = vld [vmem:[%s237 + $0x4] sm:$0xf]
        %v359 = vld [vmem:[%s237 + $0x8] sm:$0xf]
        %v360 = vld [vmem:[%s237 + $0xc] sm:$0xf]
        %v361 = vld [vmem:[%s237 + $0x10] sm:$0xf]
        %v362 = vld [vmem:[%s237 + $0x14] sm:$0xf]
        %v363 = vld [vmem:[%s237 + $0x18] sm:$0xf]
        %v364 = vld [vmem:[%s237 + $0x1c] sm:$0xf]
        %s365 = scalar_lea.vmem %s237, 32 [#allocation5]
        %v366 = vld [vmem:[%s365] sm:$0xf]
        %v367 = vld [vmem:[%s365 + $0x4] sm:$0xf]
        %v368 = vld [vmem:[%s365 + $0x8] sm:$0xf]
        %v369 = vld [vmem:[%s365 + $0xc] sm:$0xf]
        %v370 = vld [vmem:[%s365 + $0x10] sm:$0xf]
        %v371 = vld [vmem:[%s365 + $0x14] sm:$0xf]
        %v372 = vld [vmem:[%s365 + $0x18] sm:$0xf]
        %v373 = vld [vmem:[%s365 + $0x1c] sm:$0xf]
        %v374 = vunpack.c.l.bf16 %v357
        %v375 = vunpack.c.l.bf16 %v358
        %v376 = vunpack.c.l.bf16 %v359
        %v377 = vunpack.c.l.bf16 %v360
        %v378 = vunpack.c.l.bf16 %v361
        %v379 = vunpack.c.l.bf16 %v362
        %v380 = vunpack.c.l.bf16 %v363
        %v381 = vunpack.c.l.bf16 %v364
        %v382 = vunpack.c.l.bf16 %v366
        %v383 = vunpack.c.l.bf16 %v367
        %v384 = vunpack.c.l.bf16 %v368
        %v385 = vunpack.c.l.bf16 %v369
        %v386 = vunpack.c.l.bf16 %v370
        %v387 = vunpack.c.l.bf16 %v371
        %v388 = vunpack.c.l.bf16 %v372
        %v389 = vunpack.c.l.bf16 %v373
        %v390 = vmax.f32 %v374, %v382
        %v391 = vmax.f32 %v375, %v383
        %v392 = vmax.f32 %v376, %v384
        %v393 = vmax.f32 %v377, %v385
        %v394 = vmax.f32 %v378, %v386
        %v395 = vmax.f32 %v379, %v387
        %v396 = vmax.f32 %v380, %v388
        %v397 = vmax.f32 %v381, %v389
        %v398 = vpack.c.bf16 %v390, %v390
        %v399 = vpack.c.bf16 %v391, %v391
        %v400 = vpack.c.bf16 %v392, %v392
        %v401 = vpack.c.bf16 %v393, %v393
        %v402 = vpack.c.bf16 %v394, %v394
        %v403 = vpack.c.bf16 %v395, %v395
        %v404 = vpack.c.bf16 %v396, %v396
        %v405 = vpack.c.bf16 %v397, %v397
        %s406 = scalar_lea.vmem %s237, 64 [#allocation5]
        %v407 = vld [vmem:[%s406] sm:$0xf]
        %v408 = vld [vmem:[%s406 + $0x4] sm:$0xf]
        %v409 = vld [vmem:[%s406 + $0x8] sm:$0xf]
        %v410 = vld [vmem:[%s406 + $0xc] sm:$0xf]
        %v411 = vld [vmem:[%s406 + $0x10] sm:$0xf]
        %v412 = vld [vmem:[%s406 + $0x14] sm:$0xf]
        %v413 = vld [vmem:[%s406 + $0x18] sm:$0xf]
        %v414 = vld [vmem:[%s406 + $0x1c] sm:$0xf]
        %s415 = scalar_lea.vmem %s237, 96 [#allocation5]
        %v416 = vld [vmem:[%s415] sm:$0xf]
        %v417 = vld [vmem:[%s415 + $0x4] sm:$0xf]
        %v418 = vld [vmem:[%s415 + $0x8] sm:$0xf]
        %v419 = vld [vmem:[%s415 + $0xc] sm:$0xf]
        %v420 = vld [vmem:[%s415 + $0x10] sm:$0xf]
        %v421 = vld [vmem:[%s415 + $0x14] sm:$0xf]
        %v422 = vld [vmem:[%s415 + $0x18] sm:$0xf]
        %v423 = vld [vmem:[%s415 + $0x1c] sm:$0xf]
        %v424 = vunpack.c.l.bf16 %v407
        %v425 = vunpack.c.l.bf16 %v408
        %v426 = vunpack.c.l.bf16 %v409
        %v427 = vunpack.c.l.bf16 %v410
        %v428 = vunpack.c.l.bf16 %v411
        %v429 = vunpack.c.l.bf16 %v412
        %v430 = vunpack.c.l.bf16 %v413
        %v431 = vunpack.c.l.bf16 %v414
        %v432 = vunpack.c.l.bf16 %v416
        %v433 = vunpack.c.l.bf16 %v417
        %v434 = vunpack.c.l.bf16 %v418
        %v435 = vunpack.c.l.bf16 %v419
        %v436 = vunpack.c.l.bf16 %v420
        %v437 = vunpack.c.l.bf16 %v421
        %v438 = vunpack.c.l.bf16 %v422
        %v439 = vunpack.c.l.bf16 %v423
        %v440 = vmax.f32 %v424, %v432
        %v441 = vmax.f32 %v425, %v433
        %v442 = vmax.f32 %v426, %v434
        %v443 = vmax.f32 %v427, %v435
        %v444 = vmax.f32 %v428, %v436
        %v445 = vmax.f32 %v429, %v437
        %v446 = vmax.f32 %v430, %v438
        %v447 = vmax.f32 %v431, %v439
        %v448 = vpack.c.bf16 %v440, %v440
        %v449 = vpack.c.bf16 %v441, %v441
        %v450 = vpack.c.bf16 %v442, %v442
        %v451 = vpack.c.bf16 %v443, %v443
        %v452 = vpack.c.bf16 %v444, %v444
        %v453 = vpack.c.bf16 %v445, %v445
        %v454 = vpack.c.bf16 %v446, %v446
        %v455 = vpack.c.bf16 %v447, %v447
        %v456 = vunpack.c.l.bf16 %v398
        %v457 = vunpack.c.l.bf16 %v399
        %v458 = vunpack.c.l.bf16 %v400
        %v459 = vunpack.c.l.bf16 %v401
        %v460 = vunpack.c.l.bf16 %v402
        %v461 = vunpack.c.l.bf16 %v403
        %v462 = vunpack.c.l.bf16 %v404
        %v463 = vunpack.c.l.bf16 %v405
        %v464 = vunpack.c.l.bf16 %v448
        %v465 = vunpack.c.l.bf16 %v449
        %v466 = vunpack.c.l.bf16 %v450
        %v467 = vunpack.c.l.bf16 %v451
        %v468 = vunpack.c.l.bf16 %v452
        %v469 = vunpack.c.l.bf16 %v453
        %v470 = vunpack.c.l.bf16 %v454
        %v471 = vunpack.c.l.bf16 %v455
        %v472 = vmax.f32 %v456, %v464
        %v473 = vmax.f32 %v457, %v465
        %v474 = vmax.f32 %v458, %v466
        %v475 = vmax.f32 %v459, %v467
        %v476 = vmax.f32 %v460, %v468
        %v477 = vmax.f32 %v461, %v469
        %v478 = vmax.f32 %v462, %v470
        %v479 = vmax.f32 %v463, %v471
        %v480 = vpack.c.bf16 %v472, %v472
        %v481 = vpack.c.bf16 %v473, %v473
        %v482 = vpack.c.bf16 %v474, %v474
        %v483 = vpack.c.bf16 %v475, %v475
        %v484 = vpack.c.bf16 %v476, %v476
        %v485 = vpack.c.bf16 %v477, %v477
        %v486 = vpack.c.bf16 %v478, %v478
        %v487 = vpack.c.bf16 %v479, %v479
        %s488 = scalar_lea.vmem [#allocation2], 12
        %vm489 = vcmask 60416
        %490 = vst.msk [vmem:[%s488 + $0x4] sm:$0xf] %vm489, %v480
        %491 = vst.msk [vmem:[%s488 + $0x10] sm:$0xf] %vm489, %v481
        %492 = vst.msk [vmem:[%s488 + $0x1c] sm:$0xf] %vm489, %v482
        %493 = vst.msk [vmem:[%s488 + $0x28] sm:$0xf] %vm489, %v483
        %494 = vst.msk [vmem:[%s488 + $0x34] sm:$0xf] %vm489, %v484
        %495 = vst.msk [vmem:[%s488 + $0x40] sm:$0xf] %vm489, %v485
        %496 = vst.msk [vmem:[%s488 + $0x4c] sm:$0xf] %vm489, %v486
        %497 = vst.msk [vmem:[%s488 + $0x58] sm:$0xf] %vm489, %v487
        %v498 = vld [vmem:[%s2] sm:$0x1]
        %v499 = vld [vmem:[#allocation2] sm:$0x8]
        %v500 = vld [vmem:[#allocation2 + $0x4] sm:$0xf]
        %v501 = vld [vmem:[#allocation2 + $0xc] sm:$0x8]
        %v502 = vld [vmem:[#allocation2 + $0x10] sm:$0xf]
        %v503 = vld [vmem:[#allocation2 + $0x18] sm:$0x8]
        %v504 = vld [vmem:[#allocation2 + $0x1c] sm:$0xf]
        %v505 = vld [vmem:[#allocation2 + $0x24] sm:$0x8]
        %v506 = vld [vmem:[#allocation2 + $0x28] sm:$0xf]
        %v507 = vld [vmem:[#allocation2 + $0x30] sm:$0x8]
        %v508 = vld [vmem:[#allocation2 + $0x34] sm:$0xf]
        %v509 = vld [vmem:[#allocation2 + $0x3c] sm:$0x8]
        %v510 = vld [vmem:[#allocation2 + $0x40] sm:$0xf]
        %v511 = vld [vmem:[#allocation2 + $0x48] sm:$0x8]
        %v512 = vld [vmem:[#allocation2 + $0x4c] sm:$0xf]
        %v513 = vld [vmem:[#allocation2 + $0x54] sm:$0x8]
        %v514 = vld [vmem:[#allocation2 + $0x58] sm:$0xf]
        %vm515 = vsmask.f32 256
        %vm516 = vsmask.f32 4368
        %vm517 = vmor %vm515, %vm516
        %v519 = vshrl.u32 %v499, 16
        %v521 = vrot.slane %v519, 7
        %v522 = vrot.slane %v521, 4
        %v524 = vshrl.u32 %v500, 16
        %v526 = vrot.slane %v524, 7
        %v527 = vshll.u32 %v500, 16
        %v529 = vor.u32 %v526, %v527
        %v530 = vsel %vm517, %v522, %v529
        %v532 = vshrl.u32 %v501, 16
        %v534 = vrot.slane %v532, 7
        %v535 = vrot.slane %v534, 4
        %v537 = vshrl.u32 %v502, 16
        %v539 = vrot.slane %v537, 7
        %v540 = vshll.u32 %v502, 16
        %v542 = vor.u32 %v539, %v540
        %v543 = vsel %vm517, %v535, %v542
        %v545 = vshrl.u32 %v503, 16
        %v547 = vrot.slane %v545, 7
        %v548 = vrot.slane %v547, 4
        %v550 = vshrl.u32 %v504, 16
        %v552 = vrot.slane %v550, 7
        %v553 = vshll.u32 %v504, 16
        %v555 = vor.u32 %v552, %v553
        %v556 = vsel %vm517, %v548, %v555
        %v558 = vshrl.u32 %v505, 16
        %v560 = vrot.slane %v558, 7
        %v561 = vrot.slane %v560, 4
        %v563 = vshrl.u32 %v506, 16
        %v565 = vrot.slane %v563, 7
        %v566 = vshll.u32 %v506, 16
        %v568 = vor.u32 %v565, %v566
        %v569 = vsel %vm517, %v561, %v568
        %v571 = vshrl.u32 %v507, 16
        %v573 = vrot.slane %v571, 7
        %v574 = vrot.slane %v573, 4
        %v576 = vshrl.u32 %v508, 16
        %v578 = vrot.slane %v576, 7
        %v579 = vshll.u32 %v508, 16
        %v581 = vor.u32 %v578, %v579
        %v582 = vsel %vm517, %v574, %v581
        %v584 = vshrl.u32 %v509, 16
        %v586 = vrot.slane %v584, 7
        %v587 = vrot.slane %v586, 4
        %v589 = vshrl.u32 %v510, 16
        %v591 = vrot.slane %v589, 7
        %v592 = vshll.u32 %v510, 16
        %v594 = vor.u32 %v591, %v592
        %v595 = vsel %vm517, %v587, %v594
        %v597 = vshrl.u32 %v511, 16
        %v599 = vrot.slane %v597, 7
        %v600 = vrot.slane %v599, 4
        %v602 = vshrl.u32 %v512, 16
        %v604 = vrot.slane %v602, 7
        %v605 = vshll.u32 %v512, 16
        %v607 = vor.u32 %v604, %v605
        %v608 = vsel %vm517, %v600, %v607
        %v610 = vshrl.u32 %v513, 16
        %v612 = vrot.slane %v610, 7
        %v613 = vrot.slane %v612, 4
        %v615 = vshrl.u32 %v514, 16
        %v617 = vrot.slane %v615, 7
        %v618 = vshll.u32 %v514, 16
        %v620 = vor.u32 %v617, %v618
        %v621 = vsel %vm517, %v613, %v620
        %v622 = vld [vmem:[#allocation7] sm:$0xf]
        %v623 = vld [vmem:[#allocation7 + $0x4] sm:$0xf]
        %v624 = vld [vmem:[#allocation7 + $0x8] sm:$0xf]
        %v625 = vld [vmem:[#allocation7 + $0xc] sm:$0xf]
        %v626 = vld [vmem:[#allocation7 + $0x10] sm:$0xf]
        %v627 = vld [vmem:[#allocation7 + $0x14] sm:$0xf]
        %v628 = vld [vmem:[#allocation7 + $0x18] sm:$0xf]
        %v629 = vld [vmem:[#allocation7 + $0x1c] sm:$0xf]
        %v630 = vld [vmem:[#allocation7 + $0x20] sm:$0xf]
        %v631 = vld [vmem:[#allocation7 + $0x24] sm:$0xf]
        %v632 = vld [vmem:[#allocation7 + $0x28] sm:$0xf]
        %v633 = vld [vmem:[#allocation7 + $0x2c] sm:$0xf]
        %v634 = vld [vmem:[#allocation7 + $0x30] sm:$0xf]
        %v635 = vld [vmem:[#allocation7 + $0x34] sm:$0xf]
        %v636 = vld [vmem:[#allocation7 + $0x38] sm:$0xf]
        %v637 = vld [vmem:[#allocation7 + $0x3c] sm:$0xf]
        %s638 = scalar_lea.vmem [#allocation7], 64
        %v639 = vld [vmem:[%s638] sm:$0xf]
        %v640 = vld [vmem:[%s638 + $0x4] sm:$0xf]
        %v641 = vld [vmem:[%s638 + $0x8] sm:$0xf]
        %v642 = vld [vmem:[%s638 + $0xc] sm:$0xf]
        %v643 = vld [vmem:[%s638 + $0x10] sm:$0xf]
        %v644 = vld [vmem:[%s638 + $0x14] sm:$0xf]
        %v645 = vld [vmem:[%s638 + $0x18] sm:$0xf]
        %v646 = vld [vmem:[%s638 + $0x1c] sm:$0xf]
        %v647 = vld [vmem:[%s638 + $0x20] sm:$0xf]
        %v648 = vld [vmem:[%s638 + $0x24] sm:$0xf]
        %v649 = vld [vmem:[%s638 + $0x28] sm:$0xf]
        %v650 = vld [vmem:[%s638 + $0x2c] sm:$0xf]
        %v651 = vld [vmem:[%s638 + $0x30] sm:$0xf]
        %v652 = vld [vmem:[%s638 + $0x34] sm:$0xf]
        %v653 = vld [vmem:[%s638 + $0x38] sm:$0xf]
        %v654 = vld [vmem:[%s638 + $0x3c] sm:$0xf]
        %v663 = vunpack.c.l.b16 %v500
        %v664 = vunpack.c.l.b16 %v502
        %v665 = vunpack.c.l.b16 %v504
        %v666 = vunpack.c.l.b16 %v506
        %v667 = vunpack.c.l.b16 %v508
        %v668 = vunpack.c.l.b16 %v510
        %v669 = vunpack.c.l.b16 %v512
        %v670 = vunpack.c.l.b16 %v514
        %v671 = vpack.c.b16 %v664, %v663
        %v672 = vpack.c.b16 %v666, %v665
        %v673 = vpack.c.b16 %v668, %v667
        %v674 = vpack.c.b16 %v670, %v669
        %v695 = vunpack.c.l.b16 %v639
        %v696 = vunpack.c.l.b16 %v640
        %v697 = vunpack.c.l.b16 %v641
        %v698 = vunpack.c.l.b16 %v642
        %v699 = vunpack.c.l.b16 %v643
        %v700 = vunpack.c.l.b16 %v644
        %v701 = vunpack.c.l.b16 %v645
        %v702 = vunpack.c.l.b16 %v646
        %v703 = vunpack.c.l.b16 %v647
        %v704 = vunpack.c.l.b16 %v648
        %v705 = vunpack.c.l.b16 %v649
        %v706 = vunpack.c.l.b16 %v650
        %v707 = vunpack.c.l.b16 %v651
        %v708 = vunpack.c.l.b16 %v652
        %v709 = vunpack.c.l.b16 %v653
        %v710 = vunpack.c.l.b16 %v654
        %v711 = vpack.c.b16 %v696, %v695
        %v712 = vpack.c.b16 %v698, %v697
        %v713 = vpack.c.b16 %v700, %v699
        %v714 = vpack.c.b16 %v702, %v701
        %v715 = vpack.c.b16 %v704, %v703
        %v716 = vpack.c.b16 %v706, %v705
        %v717 = vpack.c.b16 %v708, %v707
        %v718 = vpack.c.b16 %v710, %v709
        %727 = vmatpush.bf16.msra.mxu0 %v718
        %728 = vmatpush.bf16.msra.mxu0 %v717
        %729 = vmatpush.bf16.msra.mxu0 %v716
        %730 = vmatpush.bf16.msra.mxu0 %v715
        %731 = vmatpush.bf16.msra.mxu0 %v714
        %732 = vmatpush.bf16.msra.mxu0 %v713
        %733 = vmatpush.bf16.msra.mxu0 %v712
        %734 = vmatpush.bf16.msra.mxu0 %v711
        %735 = vmatmul.bf16.gmra.mxu0 %v671
        %v736 = vpop.f32.mrf.mxu0
        %v737 = vadd.f32 0.0, %v736
        %v738 = vpop.f32.mrf.mxu0
        %v739 = vadd.f32 0.0, %v738
        %740 = vmatmul.bf16.gmra.mxu0 %v672
        %v741 = vpop.f32.mrf.mxu0
        %v742 = vadd.f32 0.0, %v741
        %v743 = vpop.f32.mrf.mxu0
        %v744 = vadd.f32 0.0, %v743
        %745 = vmatmul.bf16.gmra.mxu0 %v673
        %v746 = vpop.f32.mrf.mxu0
        %v747 = vadd.f32 0.0, %v746
        %v748 = vpop.f32.mrf.mxu0
        %v749 = vadd.f32 0.0, %v748
        %750 = vmatmul.bf16.gmra.mxu0 %v674
        %v751 = vpop.f32.mrf.mxu0
        %v752 = vadd.f32 0.0, %v751
        %v753 = vpop.f32.mrf.mxu0
        %v754 = vadd.f32 0.0, %v753
        %755 = vdwg.mxu0
        %v756 = vunpack.c.l.b16 %v530
        %v757 = vunpack.c.l.b16 %v543
        %v758 = vunpack.c.l.b16 %v556
        %v759 = vunpack.c.l.b16 %v569
        %v760 = vunpack.c.l.b16 %v582
        %v761 = vunpack.c.l.b16 %v595
        %v762 = vunpack.c.l.b16 %v608
        %v763 = vunpack.c.l.b16 %v621
        %v764 = vpack.c.b16 %v757, %v756
        %v765 = vpack.c.b16 %v759, %v758
        %v766 = vpack.c.b16 %v761, %v760
        %v767 = vpack.c.b16 %v763, %v762
        %v788 = vunpack.c.l.b16 %v622
        %v789 = vunpack.c.l.b16 %v623
        %v790 = vunpack.c.l.b16 %v624
        %v791 = vunpack.c.l.b16 %v625
        %v792 = vunpack.c.l.b16 %v626
        %v793 = vunpack.c.l.b16 %v627
        %v794 = vunpack.c.l.b16 %v628
        %v795 = vunpack.c.l.b16 %v629
        %v796 = vunpack.c.l.b16 %v630
        %v797 = vunpack.c.l.b16 %v631
        %v798 = vunpack.c.l.b16 %v632
        %v799 = vunpack.c.l.b16 %v633
        %v800 = vunpack.c.l.b16 %v634
        %v801 = vunpack.c.l.b16 %v635
        %v802 = vunpack.c.l.b16 %v636
        %v803 = vunpack.c.l.b16 %v637
        %v804 = vpack.c.b16 %v789, %v788
        %v805 = vpack.c.b16 %v791, %v790
        %v806 = vpack.c.b16 %v793, %v792
        %v807 = vpack.c.b16 %v795, %v794
        %v808 = vpack.c.b16 %v797, %v796
        %v809 = vpack.c.b16 %v799, %v798
        %v810 = vpack.c.b16 %v801, %v800
        %v811 = vpack.c.b16 %v803, %v802
        %820 = vmatpush.bf16.msra.mxu0 %v811
        %821 = vmatpush.bf16.msra.mxu0 %v810
        %822 = vmatpush.bf16.msra.mxu0 %v809
        %823 = vmatpush.bf16.msra.mxu0 %v808
        %824 = vmatpush.bf16.msra.mxu0 %v807
        %825 = vmatpush.bf16.msra.mxu0 %v806
        %826 = vmatpush.bf16.msra.mxu0 %v805
        %827 = vmatpush.bf16.msra.mxu0 %v804
        %828 = vmatmul.bf16.gmra.mxu0 %v764
        %v829 = vpop.f32.mrf.mxu0
        %v830 = vadd.f32 %v737, %v829
        %v831 = vpop.f32.mrf.mxu0
        %v832 = vadd.f32 %v739, %v831
        %833 = vmatmul.bf16.gmra.mxu0 %v765
        %v834 = vpop.f32.mrf.mxu0
        %v835 = vadd.f32 %v742, %v834
        %v836 = vpop.f32.mrf.mxu0
        %v837 = vadd.f32 %v744, %v836
        %838 = vmatmul.bf16.gmra.mxu0 %v766
        %v839 = vpop.f32.mrf.mxu0
        %v840 = vadd.f32 %v747, %v839
        %v841 = vpop.f32.mrf.mxu0
        %v842 = vadd.f32 %v749, %v841
        %843 = vmatmul.bf16.gmra.mxu0 %v767
        %v844 = vpop.f32.mrf.mxu0
        %v845 = vadd.f32 %v752, %v844
        %v846 = vpop.f32.mrf.mxu0
        %v847 = vadd.f32 %v754, %v846
        %848 = vdwg.mxu0
        %v849 = vld [vmem:[#allocation2 + $0x4] sm:$0xf]
        %v850 = vld [vmem:[#allocation2 + $0x8] sm:$0x1]
        %v851 = vld [vmem:[#allocation2 + $0x10] sm:$0xf]
        %v852 = vld [vmem:[#allocation2 + $0x14] sm:$0x1]
        %v853 = vld [vmem:[#allocation2 + $0x1c] sm:$0xf]
        %v854 = vld [vmem:[#allocation2 + $0x20] sm:$0x1]
        %v855 = vld [vmem:[#allocation2 + $0x28] sm:$0xf]
        %v856 = vld [vmem:[#allocation2 + $0x2c] sm:$0x1]
        %v857 = vld [vmem:[#allocation2 + $0x34] sm:$0xf]
        %v858 = vld [vmem:[#allocation2 + $0x38] sm:$0x1]
        %v859 = vld [vmem:[#allocation2 + $0x40] sm:$0xf]
        %v860 = vld [vmem:[#allocation2 + $0x44] sm:$0x1]
        %v861 = vld [vmem:[#allocation2 + $0x4c] sm:$0xf]
        %v862 = vld [vmem:[#allocation2 + $0x50] sm:$0x1]
        %v863 = vld [vmem:[#allocation2 + $0x58] sm:$0xf]
        %v864 = vld [vmem:[#allocation2 + $0x5c] sm:$0x1]
        %vm865 = vsmask.f32 3328
        %vm866 = vsmask.f32 7440
        %vm867 = vmor %vm865, %vm866
        %v869 = vshrl.u32 %v849, 16
        %v871 = vrot.slane %v869, 4
        %v872 = vshll.u32 %v849, 16
        %v874 = vrot.slane %v872, 5
        %v875 = vor.u32 %v871, %v874
        %v876 = vrot.slane %v875, 4
        %v878 = vshll.u32 %v850, 16
        %v880 = vrot.slane %v878, 5
        %v881 = vsel %vm867, %v876, %v880
        %v883 = vshrl.u32 %v851, 16
        %v885 = vrot.slane %v883, 4
        %v886 = vshll.u32 %v851, 16
        %v888 = vrot.slane %v886, 5
        %v889 = vor.u32 %v885, %v888
        %v890 = vrot.slane %v889, 4
        %v892 = vshll.u32 %v852, 16
        %v894 = vrot.slane %v892, 5
        %v895 = vsel %vm867, %v890, %v894
        %v897 = vshrl.u32 %v853, 16
        %v899 = vrot.slane %v897, 4
        %v900 = vshll.u32 %v853, 16
        %v902 = vrot.slane %v900, 5
        %v903 = vor.u32 %v899, %v902
        %v904 = vrot.slane %v903, 4
        %v906 = vshll.u32 %v854, 16
        %v908 = vrot.slane %v906, 5
        %v909 = vsel %vm867, %v904, %v908
        %v911 = vshrl.u32 %v855, 16
        %v913 = vrot.slane %v911, 4
        %v914 = vshll.u32 %v855, 16
        %v916 = vrot.slane %v914, 5
        %v917 = vor.u32 %v913, %v916
        %v918 = vrot.slane %v917, 4
        %v920 = vshll.u32 %v856, 16
        %v922 = vrot.slane %v920, 5
        %v923 = vsel %vm867, %v918, %v922
        %v925 = vshrl.u32 %v857, 16
        %v927 = vrot.slane %v925, 4
        %v928 = vshll.u32 %v857, 16
        %v930 = vrot.slane %v928, 5
        %v931 = vor.u32 %v927, %v930
        %v932 = vrot.slane %v931, 4
        %v934 = vshll.u32 %v858, 16
        %v936 = vrot.slane %v934, 5
        %v937 = vsel %vm867, %v932, %v936
        %v939 = vshrl.u32 %v859, 16
        %v941 = vrot.slane %v939, 4
        %v942 = vshll.u32 %v859, 16
        %v944 = vrot.slane %v942, 5
        %v945 = vor.u32 %v941, %v944
        %v946 = vrot.slane %v945, 4
        %v948 = vshll.u32 %v860, 16
        %v950 = vrot.slane %v948, 5
        %v951 = vsel %vm867, %v946, %v950
        %v953 = vshrl.u32 %v861, 16
        %v955 = vrot.slane %v953, 4
        %v956 = vshll.u32 %v861, 16
        %v958 = vrot.slane %v956, 5
        %v959 = vor.u32 %v955, %v958
        %v960 = vrot.slane %v959, 4
        %v962 = vshll.u32 %v862, 16
        %v964 = vrot.slane %v962, 5
        %v965 = vsel %vm867, %v960, %v964
        %v967 = vshrl.u32 %v863, 16
        %v969 = vrot.slane %v967, 4
        %v970 = vshll.u32 %v863, 16
        %v972 = vrot.slane %v970, 5
        %v973 = vor.u32 %v969, %v972
        %v974 = vrot.slane %v973, 4
        %v976 = vshll.u32 %v864, 16
        %v978 = vrot.slane %v976, 5
        %v979 = vsel %vm867, %v974, %v978
        %s980 = scalar_lea.vmem [#allocation7], 128
        %v981 = vld [vmem:[%s980] sm:$0xf]
        %v982 = vld [vmem:[%s980 + $0x4] sm:$0xf]
        %v983 = vld [vmem:[%s980 + $0x8] sm:$0xf]
        %v984 = vld [vmem:[%s980 + $0xc] sm:$0xf]
        %v985 = vld [vmem:[%s980 + $0x10] sm:$0xf]
        %v986 = vld [vmem:[%s980 + $0x14] sm:$0xf]
        %v987 = vld [vmem:[%s980 + $0x18] sm:$0xf]
        %v988 = vld [vmem:[%s980 + $0x1c] sm:$0xf]
        %v989 = vld [vmem:[%s980 + $0x20] sm:$0xf]
        %v990 = vld [vmem:[%s980 + $0x24] sm:$0xf]
        %v991 = vld [vmem:[%s980 + $0x28] sm:$0xf]
        %v992 = vld [vmem:[%s980 + $0x2c] sm:$0xf]
        %v993 = vld [vmem:[%s980 + $0x30] sm:$0xf]
        %v994 = vld [vmem:[%s980 + $0x34] sm:$0xf]
        %v995 = vld [vmem:[%s980 + $0x38] sm:$0xf]
        %v996 = vld [vmem:[%s980 + $0x3c] sm:$0xf]
        %v997 = vunpack.c.l.b16 %v881
        %v998 = vunpack.c.l.b16 %v895
        %v999 = vunpack.c.l.b16 %v909
        %v1000 = vunpack.c.l.b16 %v923
        %v1001 = vunpack.c.l.b16 %v937
        %v1002 = vunpack.c.l.b16 %v951
        %v1003 = vunpack.c.l.b16 %v965
        %v1004 = vunpack.c.l.b16 %v979
        %v1005 = vpack.c.b16 %v998, %v997
        %v1006 = vpack.c.b16 %v1000, %v999
        %v1007 = vpack.c.b16 %v1002, %v1001
        %v1008 = vpack.c.b16 %v1004, %v1003
        %v1029 = vunpack.c.l.b16 %v981
        %v1030 = vunpack.c.l.b16 %v982
        %v1031 = vunpack.c.l.b16 %v983
        %v1032 = vunpack.c.l.b16 %v984
        %v1033 = vunpack.c.l.b16 %v985
        %v1034 = vunpack.c.l.b16 %v986
        %v1035 = vunpack.c.l.b16 %v987
        %v1036 = vunpack.c.l.b16 %v988
        %v1037 = vunpack.c.l.b16 %v989
        %v1038 = vunpack.c.l.b16 %v990
        %v1039 = vunpack.c.l.b16 %v991
        %v1040 = vunpack.c.l.b16 %v992
        %v1041 = vunpack.c.l.b16 %v993
        %v1042 = vunpack.c.l.b16 %v994
        %v1043 = vunpack.c.l.b16 %v995
        %v1044 = vunpack.c.l.b16 %v996
        %v1045 = vpack.c.b16 %v1030, %v1029
        %v1046 = vpack.c.b16 %v1032, %v1031
        %v1047 = vpack.c.b16 %v1034, %v1033
        %v1048 = vpack.c.b16 %v1036, %v1035
        %v1049 = vpack.c.b16 %v1038, %v1037
        %v1050 = vpack.c.b16 %v1040, %v1039
        %v1051 = vpack.c.b16 %v1042, %v1041
        %v1052 = vpack.c.b16 %v1044, %v1043
        %1061 = vmatpush.bf16.msra.mxu0 %v1052
        %1062 = vmatpush.bf16.msra.mxu0 %v1051
        %1063 = vmatpush.bf16.msra.mxu0 %v1050
        %1064 = vmatpush.bf16.msra.mxu0 %v1049
        %1065 = vmatpush.bf16.msra.mxu0 %v1048
        %1066 = vmatpush.bf16.msra.mxu0 %v1047
        %1067 = vmatpush.bf16.msra.mxu0 %v1046
        %1068 = vmatpush.bf16.msra.mxu0 %v1045
        %1069 = vmatmul.bf16.gmra.mxu0 %v1005
        %v1070 = vpop.f32.mrf.mxu0
        %v1071 = vadd.f32 0.0, %v1070
        %v1072 = vpop.f32.mrf.mxu0
        %v1073 = vadd.f32 0.0, %v1072
        %1074 = vmatmul.bf16.gmra.mxu0 %v1006
        %v1075 = vpop.f32.mrf.mxu0
        %v1076 = vadd.f32 0.0, %v1075
        %v1077 = vpop.f32.mrf.mxu0
        %v1078 = vadd.f32 0.0, %v1077
        %1079 = vmatmul.bf16.gmra.mxu0 %v1007
        %v1080 = vpop.f32.mrf.mxu0
        %v1081 = vadd.f32 0.0, %v1080
        %v1082 = vpop.f32.mrf.mxu0
        %v1083 = vadd.f32 0.0, %v1082
        %1084 = vmatmul.bf16.gmra.mxu0 %v1008
        %v1085 = vpop.f32.mrf.mxu0
        %v1086 = vadd.f32 0.0, %v1085
        %v1087 = vpop.f32.mrf.mxu0
        %v1088 = vadd.f32 0.0, %v1087
        %1089 = vdwg.mxu0
        %v1090 = vadd.f32 %v830, %v1071
        %v1091 = vadd.f32 %v832, %v1073
        %v1092 = vadd.f32 %v835, %v1076
        %v1093 = vadd.f32 %v837, %v1078
        %v1094 = vadd.f32 %v840, %v1081
        %v1095 = vadd.f32 %v842, %v1083
        %v1096 = vadd.f32 %v845, %v1086
        %v1097 = vadd.f32 %v847, %v1088
        %v1098 = vld [vmem:[%s488] sm:$0x8]
        %v1099 = vld [vmem:[%s488 + $0x4] sm:$0xf]
        %v1100 = vld [vmem:[%s488 + $0xc] sm:$0x8]
        %v1101 = vld [vmem:[%s488 + $0x10] sm:$0xf]
        %v1102 = vld [vmem:[%s488 + $0x18] sm:$0x8]
        %v1103 = vld [vmem:[%s488 + $0x1c] sm:$0xf]
        %v1104 = vld [vmem:[%s488 + $0x24] sm:$0x8]
        %v1105 = vld [vmem:[%s488 + $0x28] sm:$0xf]
        %v1106 = vld [vmem:[%s488 + $0x30] sm:$0x8]
        %v1107 = vld [vmem:[%s488 + $0x34] sm:$0xf]
        %v1108 = vld [vmem:[%s488 + $0x3c] sm:$0x8]
        %v1109 = vld [vmem:[%s488 + $0x40] sm:$0xf]
        %v1110 = vld [vmem:[%s488 + $0x48] sm:$0x8]
        %v1111 = vld [vmem:[%s488 + $0x4c] sm:$0xf]
        %v1112 = vld [vmem:[%s488 + $0x54] sm:$0x8]
        %v1113 = vld [vmem:[%s488 + $0x58] sm:$0xf]
        %v1115 = vshrl.u32 %v1098, 16
        %v1117 = vrot.slane %v1115, 7
        %v1118 = vrot.slane %v1117, 4
        %v1120 = vshrl.u32 %v1099, 16
        %v1122 = vrot.slane %v1120, 7
        %v1123 = vshll.u32 %v1099, 16
        %v1125 = vor.u32 %v1122, %v1123
        %v1126 = vsel %vm517, %v1118, %v1125
        %v1128 = vshrl.u32 %v1100, 16
        %v1130 = vrot.slane %v1128, 7
        %v1131 = vrot.slane %v1130, 4
        %v1133 = vshrl.u32 %v1101, 16
        %v1135 = vrot.slane %v1133, 7
        %v1136 = vshll.u32 %v1101, 16
        %v1138 = vor.u32 %v1135, %v1136
        %v1139 = vsel %vm517, %v1131, %v1138
        %v1141 = vshrl.u32 %v1102, 16
        %v1143 = vrot.slane %v1141, 7
        %v1144 = vrot.slane %v1143, 4
        %v1146 = vshrl.u32 %v1103, 16
        %v1148 = vrot.slane %v1146, 7
        %v1149 = vshll.u32 %v1103, 16
        %v1151 = vor.u32 %v1148, %v1149
        %v1152 = vsel %vm517, %v1144, %v1151
        %v1154 = vshrl.u32 %v1104, 16
        %v1156 = vrot.slane %v1154, 7
        %v1157 = vrot.slane %v1156, 4
        %v1159 = vshrl.u32 %v1105, 16
        %v1161 = vrot.slane %v1159, 7
        %v1162 = vshll.u32 %v1105, 16
        %v1164 = vor.u32 %v1161, %v1162
        %v1165 = vsel %vm517, %v1157, %v1164
        %v1167 = vshrl.u32 %v1106, 16
        %v1169 = vrot.slane %v1167, 7
        %v1170 = vrot.slane %v1169, 4
        %v1172 = vshrl.u32 %v1107, 16
        %v1174 = vrot.slane %v1172, 7
        %v1175 = vshll.u32 %v1107, 16
        %v1177 = vor.u32 %v1174, %v1175
        %v1178 = vsel %vm517, %v1170, %v1177
        %v1180 = vshrl.u32 %v1108, 16
        %v1182 = vrot.slane %v1180, 7
        %v1183 = vrot.slane %v1182, 4
        %v1185 = vshrl.u32 %v1109, 16
        %v1187 = vrot.slane %v1185, 7
        %v1188 = vshll.u32 %v1109, 16
        %v1190 = vor.u32 %v1187, %v1188
        %v1191 = vsel %vm517, %v1183, %v1190
        %v1193 = vshrl.u32 %v1110, 16
        %v1195 = vrot.slane %v1193, 7
        %v1196 = vrot.slane %v1195, 4
        %v1198 = vshrl.u32 %v1111, 16
        %v1200 = vrot.slane %v1198, 7
        %v1201 = vshll.u32 %v1111, 16
        %v1203 = vor.u32 %v1200, %v1201
        %v1204 = vsel %vm517, %v1196, %v1203
        %v1206 = vshrl.u32 %v1112, 16
        %v1208 = vrot.slane %v1206, 7
        %v1209 = vrot.slane %v1208, 4
        %v1211 = vshrl.u32 %v1113, 16
        %v1213 = vrot.slane %v1211, 7
        %v1214 = vshll.u32 %v1113, 16
        %v1216 = vor.u32 %v1213, %v1214
        %v1217 = vsel %vm517, %v1209, %v1216
        %s1218 = scalar_lea.vmem [#allocation7], 192
        %v1219 = vld [vmem:[%s1218] sm:$0xf]
        %v1220 = vld [vmem:[%s1218 + $0x4] sm:$0xf]
        %v1221 = vld [vmem:[%s1218 + $0x8] sm:$0xf]
        %v1222 = vld [vmem:[%s1218 + $0xc] sm:$0xf]
        %v1223 = vld [vmem:[%s1218 + $0x10] sm:$0xf]
        %v1224 = vld [vmem:[%s1218 + $0x14] sm:$0xf]
        %v1225 = vld [vmem:[%s1218 + $0x18] sm:$0xf]
        %v1226 = vld [vmem:[%s1218 + $0x1c] sm:$0xf]
        %v1227 = vld [vmem:[%s1218 + $0x20] sm:$0xf]
        %v1228 = vld [vmem:[%s1218 + $0x24] sm:$0xf]
        %v1229 = vld [vmem:[%s1218 + $0x28] sm:$0xf]
        %v1230 = vld [vmem:[%s1218 + $0x2c] sm:$0xf]
        %v1231 = vld [vmem:[%s1218 + $0x30] sm:$0xf]
        %v1232 = vld [vmem:[%s1218 + $0x34] sm:$0xf]
        %v1233 = vld [vmem:[%s1218 + $0x38] sm:$0xf]
        %v1234 = vld [vmem:[%s1218 + $0x3c] sm:$0xf]
        %v1235 = vunpack.c.l.b16 %v1126
        %v1236 = vunpack.c.l.b16 %v1139
        %v1237 = vunpack.c.l.b16 %v1152
        %v1238 = vunpack.c.l.b16 %v1165
        %v1239 = vunpack.c.l.b16 %v1178
        %v1240 = vunpack.c.l.b16 %v1191
        %v1241 = vunpack.c.l.b16 %v1204
        %v1242 = vunpack.c.l.b16 %v1217
        %v1243 = vpack.c.b16 %v1236, %v1235
        %v1244 = vpack.c.b16 %v1238, %v1237
        %v1245 = vpack.c.b16 %v1240, %v1239
        %v1246 = vpack.c.b16 %v1242, %v1241
        %v1267 = vunpack.c.l.b16 %v1219
        %v1268 = vunpack.c.l.b16 %v1220
        %v1269 = vunpack.c.l.b16 %v1221
        %v1270 = vunpack.c.l.b16 %v1222
        %v1271 = vunpack.c.l.b16 %v1223
        %v1272 = vunpack.c.l.b16 %v1224
        %v1273 = vunpack.c.l.b16 %v1225
        %v1274 = vunpack.c.l.b16 %v1226
        %v1275 = vunpack.c.l.b16 %v1227
        %v1276 = vunpack.c.l.b16 %v1228
        %v1277 = vunpack.c.l.b16 %v1229
        %v1278 = vunpack.c.l.b16 %v1230
        %v1279 = vunpack.c.l.b16 %v1231
        %v1280 = vunpack.c.l.b16 %v1232
        %v1281 = vunpack.c.l.b16 %v1233
        %v1282 = vunpack.c.l.b16 %v1234
        %v1283 = vpack.c.b16 %v1268, %v1267
        %v1284 = vpack.c.b16 %v1270, %v1269
        %v1285 = vpack.c.b16 %v1272, %v1271
        %v1286 = vpack.c.b16 %v1274, %v1273
        %v1287 = vpack.c.b16 %v1276, %v1275
        %v1288 = vpack.c.b16 %v1278, %v1277
        %v1289 = vpack.c.b16 %v1280, %v1279
        %v1290 = vpack.c.b16 %v1282, %v1281
        %1299 = vmatpush.bf16.msra.mxu0 %v1290
        %1300 = vmatpush.bf16.msra.mxu0 %v1289
        %1301 = vmatpush.bf16.msra.mxu0 %v1288
        %1302 = vmatpush.bf16.msra.mxu0 %v1287
        %1303 = vmatpush.bf16.msra.mxu0 %v1286
        %1304 = vmatpush.bf16.msra.mxu0 %v1285
        %1305 = vmatpush.bf16.msra.mxu0 %v1284
        %1306 = vmatpush.bf16.msra.mxu0 %v1283
        %1307 = vmatmul.bf16.gmra.mxu0 %v1243
        %v1308 = vpop.f32.mrf.mxu0
        %v1309 = vadd.f32 0.0, %v1308
        %v1310 = vpop.f32.mrf.mxu0
        %v1311 = vadd.f32 0.0, %v1310
        %1312 = vmatmul.bf16.gmra.mxu0 %v1244
        %v1313 = vpop.f32.mrf.mxu0
        %v1314 = vadd.f32 0.0, %v1313
        %v1315 = vpop.f32.mrf.mxu0
        %v1316 = vadd.f32 0.0, %v1315
        %1317 = vmatmul.bf16.gmra.mxu0 %v1245
        %v1318 = vpop.f32.mrf.mxu0
        %v1319 = vadd.f32 0.0, %v1318
        %v1320 = vpop.f32.mrf.mxu0
        %v1321 = vadd.f32 0.0, %v1320
        %1322 = vmatmul.bf16.gmra.mxu0 %v1246
        %v1323 = vpop.f32.mrf.mxu0
        %v1324 = vadd.f32 0.0, %v1323
        %v1325 = vpop.f32.mrf.mxu0
        %v1326 = vadd.f32 0.0, %v1325
        %1327 = vdwg.mxu0
        %v1328 = vadd.f32 %v1090, %v1309
        %v1329 = vadd.f32 %v1091, %v1311
        %v1330 = vadd.f32 %v1092, %v1314
        %v1331 = vadd.f32 %v1093, %v1316
        %v1332 = vadd.f32 %v1094, %v1319
        %v1333 = vadd.f32 %v1095, %v1321
        %v1334 = vadd.f32 %v1096, %v1324
        %v1335 = vadd.f32 %v1097, %v1326
        %s1336 = scalar_lea.vmem [#allocation7], 256
        %v1337 = vld [vmem:[%s1336] sm:$0xf]
        %v1338 = vld [vmem:[%s1336 + $0x4] sm:$0xf]
        %v1339 = vld [vmem:[%s1336 + $0x8] sm:$0xf]
        %v1340 = vld [vmem:[%s1336 + $0xc] sm:$0xf]
        %v1341 = vld [vmem:[%s1336 + $0x10] sm:$0xf]
        %v1342 = vld [vmem:[%s1336 + $0x14] sm:$0xf]
        %v1343 = vld [vmem:[%s1336 + $0x18] sm:$0xf]
        %v1344 = vld [vmem:[%s1336 + $0x1c] sm:$0xf]
        %v1345 = vld [vmem:[%s1336 + $0x20] sm:$0xf]
        %v1346 = vld [vmem:[%s1336 + $0x24] sm:$0xf]
        %v1347 = vld [vmem:[%s1336 + $0x28] sm:$0xf]
        %v1348 = vld [vmem:[%s1336 + $0x2c] sm:$0xf]
        %v1349 = vld [vmem:[%s1336 + $0x30] sm:$0xf]
        %v1350 = vld [vmem:[%s1336 + $0x34] sm:$0xf]
        %v1351 = vld [vmem:[%s1336 + $0x38] sm:$0xf]
        %v1352 = vld [vmem:[%s1336 + $0x3c] sm:$0xf]
        %v1361 = vunpack.c.l.b16 %v1099
        %v1362 = vunpack.c.l.b16 %v1101
        %v1363 = vunpack.c.l.b16 %v1103
        %v1364 = vunpack.c.l.b16 %v1105
        %v1365 = vunpack.c.l.b16 %v1107
        %v1366 = vunpack.c.l.b16 %v1109
        %v1367 = vunpack.c.l.b16 %v1111
        %v1368 = vunpack.c.l.b16 %v1113
        %v1369 = vpack.c.b16 %v1362, %v1361
        %v1370 = vpack.c.b16 %v1364, %v1363
        %v1371 = vpack.c.b16 %v1366, %v1365
        %v1372 = vpack.c.b16 %v1368, %v1367
        %v1393 = vunpack.c.l.b16 %v1337
        %v1394 = vunpack.c.l.b16 %v1338
        %v1395 = vunpack.c.l.b16 %v1339
        %v1396 = vunpack.c.l.b16 %v1340
        %v1397 = vunpack.c.l.b16 %v1341
        %v1398 = vunpack.c.l.b16 %v1342
        %v1399 = vunpack.c.l.b16 %v1343
        %v1400 = vunpack.c.l.b16 %v1344
        %v1401 = vunpack.c.l.b16 %v1345
        %v1402 = vunpack.c.l.b16 %v1346
        %v1403 = vunpack.c.l.b16 %v1347
        %v1404 = vunpack.c.l.b16 %v1348
        %v1405 = vunpack.c.l.b16 %v1349
        %v1406 = vunpack.c.l.b16 %v1350
        %v1407 = vunpack.c.l.b16 %v1351
        %v1408 = vunpack.c.l.b16 %v1352
        %v1409 = vpack.c.b16 %v1394, %v1393
        %v1410 = vpack.c.b16 %v1396, %v1395
        %v1411 = vpack.c.b16 %v1398, %v1397
        %v1412 = vpack.c.b16 %v1400, %v1399
        %v1413 = vpack.c.b16 %v1402, %v1401
        %v1414 = vpack.c.b16 %v1404, %v1403
        %v1415 = vpack.c.b16 %v1406, %v1405
        %v1416 = vpack.c.b16 %v1408, %v1407
        %1425 = vmatpush.bf16.msra.mxu0 %v1416
        %1426 = vmatpush.bf16.msra.mxu0 %v1415
        %1427 = vmatpush.bf16.msra.mxu0 %v1414
        %1428 = vmatpush.bf16.msra.mxu0 %v1413
        %1429 = vmatpush.bf16.msra.mxu0 %v1412
        %1430 = vmatpush.bf16.msra.mxu0 %v1411
        %1431 = vmatpush.bf16.msra.mxu0 %v1410
        %1432 = vmatpush.bf16.msra.mxu0 %v1409
        %1433 = vmatmul.bf16.gmra.mxu0 %v1369
        %v1434 = vpop.f32.mrf.mxu0
        %v1435 = vadd.f32 0.0, %v1434
        %v1436 = vpop.f32.mrf.mxu0
        %v1437 = vadd.f32 0.0, %v1436
        %1438 = vmatmul.bf16.gmra.mxu0 %v1370
        %v1439 = vpop.f32.mrf.mxu0
        %v1440 = vadd.f32 0.0, %v1439
        %v1441 = vpop.f32.mrf.mxu0
        %v1442 = vadd.f32 0.0, %v1441
        %1443 = vmatmul.bf16.gmra.mxu0 %v1371
        %v1444 = vpop.f32.mrf.mxu0
        %v1445 = vadd.f32 0.0, %v1444
        %v1446 = vpop.f32.mrf.mxu0
        %v1447 = vadd.f32 0.0, %v1446
        %1448 = vmatmul.bf16.gmra.mxu0 %v1372
        %v1449 = vpop.f32.mrf.mxu0
        %v1450 = vadd.f32 0.0, %v1449
        %v1451 = vpop.f32.mrf.mxu0
        %v1452 = vadd.f32 0.0, %v1451
        %1453 = vdwg.mxu0
        %v1454 = vadd.f32 %v1328, %v1435
        %v1455 = vadd.f32 %v1329, %v1437
        %v1456 = vadd.f32 %v1330, %v1440
        %v1457 = vadd.f32 %v1331, %v1442
        %v1458 = vadd.f32 %v1332, %v1445
        %v1459 = vadd.f32 %v1333, %v1447
        %v1460 = vadd.f32 %v1334, %v1450
        %v1461 = vadd.f32 %v1335, %v1452
        %v1462 = vld [vmem:[%s488 + $0x4] sm:$0xf]
        %v1463 = vld [vmem:[%s488 + $0x8] sm:$0x1]
        %v1464 = vld [vmem:[%s488 + $0x10] sm:$0xf]
        %v1465 = vld [vmem:[%s488 + $0x14] sm:$0x1]
        %v1466 = vld [vmem:[%s488 + $0x1c] sm:$0xf]
        %v1467 = vld [vmem:[%s488 + $0x20] sm:$0x1]
        %v1468 = vld [vmem:[%s488 + $0x28] sm:$0xf]
        %v1469 = vld [vmem:[%s488 + $0x2c] sm:$0x1]
        %v1470 = vld [vmem:[%s488 + $0x34] sm:$0xf]
        %v1471 = vld [vmem:[%s488 + $0x38] sm:$0x1]
        %v1472 = vld [vmem:[%s488 + $0x40] sm:$0xf]
        %v1473 = vld [vmem:[%s488 + $0x44] sm:$0x1]
        %v1474 = vld [vmem:[%s488 + $0x4c] sm:$0xf]
        %v1475 = vld [vmem:[%s488 + $0x50] sm:$0x1]
        %v1476 = vld [vmem:[%s488 + $0x58] sm:$0xf]
        %v1477 = vld [vmem:[%s488 + $0x5c] sm:$0x1]
        %v1479 = vshrl.u32 %v1462, 16
        %v1481 = vrot.slane %v1479, 4
        %v1482 = vshll.u32 %v1462, 16
        %v1484 = vrot.slane %v1482, 5
        %v1485 = vor.u32 %v1481, %v1484
        %v1486 = vrot.slane %v1485, 4
        %v1488 = vshll.u32 %v1463, 16
        %v1490 = vrot.slane %v1488, 5
        %v1491 = vsel %vm867, %v1486, %v1490
        %v1493 = vshrl.u32 %v1464, 16
        %v1495 = vrot.slane %v1493, 4
        %v1496 = vshll.u32 %v1464, 16
        %v1498 = vrot.slane %v1496, 5
        %v1499 = vor.u32 %v1495, %v1498
        %v1500 = vrot.slane %v1499, 4
        %v1502 = vshll.u32 %v1465, 16
        %v1504 = vrot.slane %v1502, 5
        %v1505 = vsel %vm867, %v1500, %v1504
        %v1507 = vshrl.u32 %v1466, 16
        %v1509 = vrot.slane %v1507, 4
        %v1510 = vshll.u32 %v1466, 16
        %v1512 = vrot.slane %v1510, 5
        %v1513 = vor.u32 %v1509, %v1512
        %v1514 = vrot.slane %v1513, 4
        %v1516 = vshll.u32 %v1467, 16
        %v1518 = vrot.slane %v1516, 5
        %v1519 = vsel %vm867, %v1514, %v1518
        %v1521 = vshrl.u32 %v1468, 16
        %v1523 = vrot.slane %v1521, 4
        %v1524 = vshll.u32 %v1468, 16
        %v1526 = vrot.slane %v1524, 5
        %v1527 = vor.u32 %v1523, %v1526
        %v1528 = vrot.slane %v1527, 4
        %v1530 = vshll.u32 %v1469, 16
        %v1532 = vrot.slane %v1530, 5
        %v1533 = vsel %vm867, %v1528, %v1532
        %v1535 = vshrl.u32 %v1470, 16
        %v1537 = vrot.slane %v1535, 4
        %v1538 = vshll.u32 %v1470, 16
        %v1540 = vrot.slane %v1538, 5
        %v1541 = vor.u32 %v1537, %v1540
        %v1542 = vrot.slane %v1541, 4
        %v1544 = vshll.u32 %v1471, 16
        %v1546 = vrot.slane %v1544, 5
        %v1547 = vsel %vm867, %v1542, %v1546
        %v1549 = vshrl.u32 %v1472, 16
        %v1551 = vrot.slane %v1549, 4
        %v1552 = vshll.u32 %v1472, 16
        %v1554 = vrot.slane %v1552, 5
        %v1555 = vor.u32 %v1551, %v1554
        %v1556 = vrot.slane %v1555, 4
        %v1558 = vshll.u32 %v1473, 16
        %v1560 = vrot.slane %v1558, 5
        %v1561 = vsel %vm867, %v1556, %v1560
        %v1563 = vshrl.u32 %v1474, 16
        %v1565 = vrot.slane %v1563, 4
        %v1566 = vshll.u32 %v1474, 16
        %v1568 = vrot.slane %v1566, 5
        %v1569 = vor.u32 %v1565, %v1568
        %v1570 = vrot.slane %v1569, 4
        %v1572 = vshll.u32 %v1475, 16
        %v1574 = vrot.slane %v1572, 5
        %v1575 = vsel %vm867, %v1570, %v1574
        %v1577 = vshrl.u32 %v1476, 16
        %v1579 = vrot.slane %v1577, 4
        %v1580 = vshll.u32 %v1476, 16
        %v1582 = vrot.slane %v1580, 5
        %v1583 = vor.u32 %v1579, %v1582
        %v1584 = vrot.slane %v1583, 4
        %v1586 = vshll.u32 %v1477, 16
        %v1588 = vrot.slane %v1586, 5
        %v1589 = vsel %vm867, %v1584, %v1588
        %s1590 = scalar_lea.vmem [#allocation7], 320
        %v1591 = vld [vmem:[%s1590] sm:$0xf]
        %v1592 = vld [vmem:[%s1590 + $0x4] sm:$0xf]
        %v1593 = vld [vmem:[%s1590 + $0x8] sm:$0xf]
        %v1594 = vld [vmem:[%s1590 + $0xc] sm:$0xf]
        %v1595 = vld [vmem:[%s1590 + $0x10] sm:$0xf]
        %v1596 = vld [vmem:[%s1590 + $0x14] sm:$0xf]
        %v1597 = vld [vmem:[%s1590 + $0x18] sm:$0xf]
        %v1598 = vld [vmem:[%s1590 + $0x1c] sm:$0xf]
        %v1599 = vld [vmem:[%s1590 + $0x20] sm:$0xf]
        %v1600 = vld [vmem:[%s1590 + $0x24] sm:$0xf]
        %v1601 = vld [vmem:[%s1590 + $0x28] sm:$0xf]
        %v1602 = vld [vmem:[%s1590 + $0x2c] sm:$0xf]
        %v1603 = vld [vmem:[%s1590 + $0x30] sm:$0xf]
        %v1604 = vld [vmem:[%s1590 + $0x34] sm:$0xf]
        %v1605 = vld [vmem:[%s1590 + $0x38] sm:$0xf]
        %v1606 = vld [vmem:[%s1590 + $0x3c] sm:$0xf]
        %v1607 = vunpack.c.l.b16 %v1491
        %v1608 = vunpack.c.l.b16 %v1505
        %v1609 = vunpack.c.l.b16 %v1519
        %v1610 = vunpack.c.l.b16 %v1533
        %v1611 = vunpack.c.l.b16 %v1547
        %v1612 = vunpack.c.l.b16 %v1561
        %v1613 = vunpack.c.l.b16 %v1575
        %v1614 = vunpack.c.l.b16 %v1589
        %v1615 = vpack.c.b16 %v1608, %v1607
        %v1616 = vpack.c.b16 %v1610, %v1609
        %v1617 = vpack.c.b16 %v1612, %v1611
        %v1618 = vpack.c.b16 %v1614, %v1613
        %v1639 = vunpack.c.l.b16 %v1591
        %v1640 = vunpack.c.l.b16 %v1592
        %v1641 = vunpack.c.l.b16 %v1593
        %v1642 = vunpack.c.l.b16 %v1594
        %v1643 = vunpack.c.l.b16 %v1595
        %v1644 = vunpack.c.l.b16 %v1596
        %v1645 = vunpack.c.l.b16 %v1597
        %v1646 = vunpack.c.l.b16 %v1598
        %v1647 = vunpack.c.l.b16 %v1599
        %v1648 = vunpack.c.l.b16 %v1600
        %v1649 = vunpack.c.l.b16 %v1601
        %v1650 = vunpack.c.l.b16 %v1602
        %v1651 = vunpack.c.l.b16 %v1603
        %v1652 = vunpack.c.l.b16 %v1604
        %v1653 = vunpack.c.l.b16 %v1605
        %v1654 = vunpack.c.l.b16 %v1606
        %v1655 = vpack.c.b16 %v1640, %v1639
        %v1656 = vpack.c.b16 %v1642, %v1641
        %v1657 = vpack.c.b16 %v1644, %v1643
        %v1658 = vpack.c.b16 %v1646, %v1645
        %v1659 = vpack.c.b16 %v1648, %v1647
        %v1660 = vpack.c.b16 %v1650, %v1649
        %v1661 = vpack.c.b16 %v1652, %v1651
        %v1662 = vpack.c.b16 %v1654, %v1653
        %1671 = vmatpush.bf16.msra.mxu0 %v1662
        %1672 = vmatpush.bf16.msra.mxu0 %v1661
        %1673 = vmatpush.bf16.msra.mxu0 %v1660
        %1674 = vmatpush.bf16.msra.mxu0 %v1659
        %1675 = vmatpush.bf16.msra.mxu0 %v1658
        %1676 = vmatpush.bf16.msra.mxu0 %v1657
        %1677 = vmatpush.bf16.msra.mxu0 %v1656
        %1678 = vmatpush.bf16.msra.mxu0 %v1655
        %1679 = vmatmul.bf16.gmra.mxu0 %v1615
        %v1680 = vpop.f32.mrf.mxu0
        %v1681 = vadd.f32 0.0, %v1680
        %v1682 = vpop.f32.mrf.mxu0
        %v1683 = vadd.f32 0.0, %v1682
        %1684 = vmatmul.bf16.gmra.mxu0 %v1616
        %v1685 = vpop.f32.mrf.mxu0
        %v1686 = vadd.f32 0.0, %v1685
        %v1687 = vpop.f32.mrf.mxu0
        %v1688 = vadd.f32 0.0, %v1687
        %1689 = vmatmul.bf16.gmra.mxu0 %v1617
        %v1690 = vpop.f32.mrf.mxu0
        %v1691 = vadd.f32 0.0, %v1690
        %v1692 = vpop.f32.mrf.mxu0
        %v1693 = vadd.f32 0.0, %v1692
        %1694 = vmatmul.bf16.gmra.mxu0 %v1618
        %v1695 = vpop.f32.mrf.mxu0
        %v1696 = vadd.f32 0.0, %v1695
        %v1697 = vpop.f32.mrf.mxu0
        %v1698 = vadd.f32 0.0, %v1697
        %1699 = vdwg.mxu0
        %v1700 = vadd.f32 %v1454, %v1681
        %v1701 = vadd.f32 %v1455, %v1683
        %v1702 = vadd.f32 %v1456, %v1686
        %v1703 = vadd.f32 %v1457, %v1688
        %v1704 = vadd.f32 %v1458, %v1691
        %v1705 = vadd.f32 %v1459, %v1693
        %v1706 = vadd.f32 %v1460, %v1696
        %v1707 = vadd.f32 %v1461, %v1698
        %s1708 = scalar_lea.vmem [#allocation2], 24
        %v1709 = vld [vmem:[%s1708] sm:$0x8]
        %v1710 = vld [vmem:[%s1708 + $0x4] sm:$0xf]
        %v1711 = vld [vmem:[%s1708 + $0xc] sm:$0x8]
        %v1712 = vld [vmem:[%s1708 + $0x10] sm:$0xf]
        %v1713 = vld [vmem:[%s1708 + $0x18] sm:$0x8]
        %v1714 = vld [vmem:[%s1708 + $0x1c] sm:$0xf]
        %v1715 = vld [vmem:[%s1708 + $0x24] sm:$0x8]
        %v1716 = vld [vmem:[%s1708 + $0x28] sm:$0xf]
        %v1717 = vld [vmem:[%s1708 + $0x30] sm:$0x8]
        %v1718 = vld [vmem:[%s1708 + $0x34] sm:$0xf]
        %v1719 = vld [vmem:[%s1708 + $0x3c] sm:$0x8]
        %v1720 = vld [vmem:[%s1708 + $0x40] sm:$0xf]
        %v1721 = vld [vmem:[%s1708 + $0x48] sm:$0x8]
        %v1722 = vld [vmem:[%s1708 + $0x4c] sm:$0xf]
        %v1723 = vld [vmem:[%s1708 + $0x54] sm:$0x8]
        %v1724 = vld [vmem:[%s1708 + $0x58] sm:$0xf]
        %v1726 = vshrl.u32 %v1709, 16
        %v1728 = vrot.slane %v1726, 7
        %v1729 = vrot.slane %v1728, 4
        %v1731 = vshrl.u32 %v1710, 16
        %v1733 = vrot.slane %v1731, 7
        %v1734 = vshll.u32 %v1710, 16
        %v1736 = vor.u32 %v1733, %v1734
        %v1737 = vsel %vm517, %v1729, %v1736
        %v1739 = vshrl.u32 %v1711, 16
        %v1741 = vrot.slane %v1739, 7
        %v1742 = vrot.slane %v1741, 4
        %v1744 = vshrl.u32 %v1712, 16
        %v1746 = vrot.slane %v1744, 7
        %v1747 = vshll.u32 %v1712, 16
        %v1749 = vor.u32 %v1746, %v1747
        %v1750 = vsel %vm517, %v1742, %v1749
        %v1752 = vshrl.u32 %v1713, 16
        %v1754 = vrot.slane %v1752, 7
        %v1755 = vrot.slane %v1754, 4
        %v1757 = vshrl.u32 %v1714, 16
        %v1759 = vrot.slane %v1757, 7
        %v1760 = vshll.u32 %v1714, 16
        %v1762 = vor.u32 %v1759, %v1760
        %v1763 = vsel %vm517, %v1755, %v1762
        %v1765 = vshrl.u32 %v1715, 16
        %v1767 = vrot.slane %v1765, 7
        %v1768 = vrot.slane %v1767, 4
        %v1770 = vshrl.u32 %v1716, 16
        %v1772 = vrot.slane %v1770, 7
        %v1773 = vshll.u32 %v1716, 16
        %v1775 = vor.u32 %v1772, %v1773
        %v1776 = vsel %vm517, %v1768, %v1775
        %v1778 = vshrl.u32 %v1717, 16
        %v1780 = vrot.slane %v1778, 7
        %v1781 = vrot.slane %v1780, 4
        %v1783 = vshrl.u32 %v1718, 16
        %v1785 = vrot.slane %v1783, 7
        %v1786 = vshll.u32 %v1718, 16
        %v1788 = vor.u32 %v1785, %v1786
        %v1789 = vsel %vm517, %v1781, %v1788
        %v1791 = vshrl.u32 %v1719, 16
        %v1793 = vrot.slane %v1791, 7
        %v1794 = vrot.slane %v1793, 4
        %v1796 = vshrl.u32 %v1720, 16
        %v1798 = vrot.slane %v1796, 7
        %v1799 = vshll.u32 %v1720, 16
        %v1801 = vor.u32 %v1798, %v1799
        %v1802 = vsel %vm517, %v1794, %v1801
        %v1804 = vshrl.u32 %v1721, 16
        %v1806 = vrot.slane %v1804, 7
        %v1807 = vrot.slane %v1806, 4
        %v1809 = vshrl.u32 %v1722, 16
        %v1811 = vrot.slane %v1809, 7
        %v1812 = vshll.u32 %v1722, 16
        %v1814 = vor.u32 %v1811, %v1812
        %v1815 = vsel %vm517, %v1807, %v1814
        %v1817 = vshrl.u32 %v1723, 16
        %v1819 = vrot.slane %v1817, 7
        %v1820 = vrot.slane %v1819, 4
        %v1822 = vshrl.u32 %v1724, 16
        %v1824 = vrot.slane %v1822, 7
        %v1825 = vshll.u32 %v1724, 16
        %v1827 = vor.u32 %v1824, %v1825
        %v1828 = vsel %vm517, %v1820, %v1827
        %s1829 = scalar_lea.vmem [#allocation7], 384
        %v1830 = vld [vmem:[%s1829] sm:$0xf]
        %v1831 = vld [vmem:[%s1829 + $0x4] sm:$0xf]
        %v1832 = vld [vmem:[%s1829 + $0x8] sm:$0xf]
        %v1833 = vld [vmem:[%s1829 + $0xc] sm:$0xf]
        %v1834 = vld [vmem:[%s1829 + $0x10] sm:$0xf]
        %v1835 = vld [vmem:[%s1829 + $0x14] sm:$0xf]
        %v1836 = vld [vmem:[%s1829 + $0x18] sm:$0xf]
        %v1837 = vld [vmem:[%s1829 + $0x1c] sm:$0xf]
        %v1838 = vld [vmem:[%s1829 + $0x20] sm:$0xf]
        %v1839 = vld [vmem:[%s1829 + $0x24] sm:$0xf]
        %v1840 = vld [vmem:[%s1829 + $0x28] sm:$0xf]
        %v1841 = vld [vmem:[%s1829 + $0x2c] sm:$0xf]
        %v1842 = vld [vmem:[%s1829 + $0x30] sm:$0xf]
        %v1843 = vld [vmem:[%s1829 + $0x34] sm:$0xf]
        %v1844 = vld [vmem:[%s1829 + $0x38] sm:$0xf]
        %v1845 = vld [vmem:[%s1829 + $0x3c] sm:$0xf]
        %v1846 = vunpack.c.l.b16 %v1737
        %v1847 = vunpack.c.l.b16 %v1750
        %v1848 = vunpack.c.l.b16 %v1763
        %v1849 = vunpack.c.l.b16 %v1776
        %v1850 = vunpack.c.l.b16 %v1789
        %v1851 = vunpack.c.l.b16 %v1802
        %v1852 = vunpack.c.l.b16 %v1815
        %v1853 = vunpack.c.l.b16 %v1828
        %v1854 = vpack.c.b16 %v1847, %v1846
        %v1855 = vpack.c.b16 %v1849, %v1848
        %v1856 = vpack.c.b16 %v1851, %v1850
        %v1857 = vpack.c.b16 %v1853, %v1852
        %v1878 = vunpack.c.l.b16 %v1830
        %v1879 = vunpack.c.l.b16 %v1831
        %v1880 = vunpack.c.l.b16 %v1832
        %v1881 = vunpack.c.l.b16 %v1833
        %v1882 = vunpack.c.l.b16 %v1834
        %v1883 = vunpack.c.l.b16 %v1835
        %v1884 = vunpack.c.l.b16 %v1836
        %v1885 = vunpack.c.l.b16 %v1837
        %v1886 = vunpack.c.l.b16 %v1838
        %v1887 = vunpack.c.l.b16 %v1839
        %v1888 = vunpack.c.l.b16 %v1840
        %v1889 = vunpack.c.l.b16 %v1841
        %v1890 = vunpack.c.l.b16 %v1842
        %v1891 = vunpack.c.l.b16 %v1843
        %v1892 = vunpack.c.l.b16 %v1844
        %v1893 = vunpack.c.l.b16 %v1845
        %v1894 = vpack.c.b16 %v1879, %v1878
        %v1895 = vpack.c.b16 %v1881, %v1880
        %v1896 = vpack.c.b16 %v1883, %v1882
        %v1897 = vpack.c.b16 %v1885, %v1884
        %v1898 = vpack.c.b16 %v1887, %v1886
        %v1899 = vpack.c.b16 %v1889, %v1888
        %v1900 = vpack.c.b16 %v1891, %v1890
        %v1901 = vpack.c.b16 %v1893, %v1892
        %1910 = vmatpush.bf16.msra.mxu0 %v1901
        %1911 = vmatpush.bf16.msra.mxu0 %v1900
        %1912 = vmatpush.bf16.msra.mxu0 %v1899
        %1913 = vmatpush.bf16.msra.mxu0 %v1898
        %1914 = vmatpush.bf16.msra.mxu0 %v1897
        %1915 = vmatpush.bf16.msra.mxu0 %v1896
        %1916 = vmatpush.bf16.msra.mxu0 %v1895
        %1917 = vmatpush.bf16.msra.mxu0 %v1894
        %1918 = vmatmul.bf16.gmra.mxu0 %v1854
        %v1919 = vpop.f32.mrf.mxu0
        %v1920 = vadd.f32 0.0, %v1919
        %v1921 = vpop.f32.mrf.mxu0
        %v1922 = vadd.f32 0.0, %v1921
        %1923 = vmatmul.bf16.gmra.mxu0 %v1855
        %v1924 = vpop.f32.mrf.mxu0
        %v1925 = vadd.f32 0.0, %v1924
        %v1926 = vpop.f32.mrf.mxu0
        %v1927 = vadd.f32 0.0, %v1926
        %1928 = vmatmul.bf16.gmra.mxu0 %v1856
        %v1929 = vpop.f32.mrf.mxu0
        %v1930 = vadd.f32 0.0, %v1929
        %v1931 = vpop.f32.mrf.mxu0
        %v1932 = vadd.f32 0.0, %v1931
        %1933 = vmatmul.bf16.gmra.mxu0 %v1857
        %v1934 = vpop.f32.mrf.mxu0
        %v1935 = vadd.f32 0.0, %v1934
        %v1936 = vpop.f32.mrf.mxu0
        %v1937 = vadd.f32 0.0, %v1936
        %1938 = vdwg.mxu0
        %v1939 = vadd.f32 %v1700, %v1920
        %v1940 = vadd.f32 %v1701, %v1922
        %v1941 = vadd.f32 %v1702, %v1925
        %v1942 = vadd.f32 %v1703, %v1927
        %v1943 = vadd.f32 %v1704, %v1930
        %v1944 = vadd.f32 %v1705, %v1932
        %v1945 = vadd.f32 %v1706, %v1935
        %v1946 = vadd.f32 %v1707, %v1937
        %s1947 = scalar_lea.vmem [#allocation7], 448
        %v1948 = vld [vmem:[%s1947] sm:$0xf]
        %v1949 = vld [vmem:[%s1947 + $0x4] sm:$0xf]
        %v1950 = vld [vmem:[%s1947 + $0x8] sm:$0xf]
        %v1951 = vld [vmem:[%s1947 + $0xc] sm:$0xf]
        %v1952 = vld [vmem:[%s1947 + $0x10] sm:$0xf]
        %v1953 = vld [vmem:[%s1947 + $0x14] sm:$0xf]
        %v1954 = vld [vmem:[%s1947 + $0x18] sm:$0xf]
        %v1955 = vld [vmem:[%s1947 + $0x1c] sm:$0xf]
        %v1956 = vld [vmem:[%s1947 + $0x20] sm:$0xf]
        %v1957 = vld [vmem:[%s1947 + $0x24] sm:$0xf]
        %v1958 = vld [vmem:[%s1947 + $0x28] sm:$0xf]
        %v1959 = vld [vmem:[%s1947 + $0x2c] sm:$0xf]
        %v1960 = vld [vmem:[%s1947 + $0x30] sm:$0xf]
        %v1961 = vld [vmem:[%s1947 + $0x34] sm:$0xf]
        %v1962 = vld [vmem:[%s1947 + $0x38] sm:$0xf]
        %v1963 = vld [vmem:[%s1947 + $0x3c] sm:$0xf]
        %v1972 = vunpack.c.l.b16 %v1710
        %v1973 = vunpack.c.l.b16 %v1712
        %v1974 = vunpack.c.l.b16 %v1714
        %v1975 = vunpack.c.l.b16 %v1716
        %v1976 = vunpack.c.l.b16 %v1718
        %v1977 = vunpack.c.l.b16 %v1720
        %v1978 = vunpack.c.l.b16 %v1722
        %v1979 = vunpack.c.l.b16 %v1724
        %v1980 = vpack.c.b16 %v1973, %v1972
        %v1981 = vpack.c.b16 %v1975, %v1974
        %v1982 = vpack.c.b16 %v1977, %v1976
        %v1983 = vpack.c.b16 %v1979, %v1978
        %v2004 = vunpack.c.l.b16 %v1948
        %v2005 = vunpack.c.l.b16 %v1949
        %v2006 = vunpack.c.l.b16 %v1950
        %v2007 = vunpack.c.l.b16 %v1951
        %v2008 = vunpack.c.l.b16 %v1952
        %v2009 = vunpack.c.l.b16 %v1953
        %v2010 = vunpack.c.l.b16 %v1954
        %v2011 = vunpack.c.l.b16 %v1955
        %v2012 = vunpack.c.l.b16 %v1956
        %v2013 = vunpack.c.l.b16 %v1957
        %v2014 = vunpack.c.l.b16 %v1958
        %v2015 = vunpack.c.l.b16 %v1959
        %v2016 = vunpack.c.l.b16 %v1960
        %v2017 = vunpack.c.l.b16 %v1961
        %v2018 = vunpack.c.l.b16 %v1962
        %v2019 = vunpack.c.l.b16 %v1963
        %v2020 = vpack.c.b16 %v2005, %v2004
        %v2021 = vpack.c.b16 %v2007, %v2006
        %v2022 = vpack.c.b16 %v2009, %v2008
        %v2023 = vpack.c.b16 %v2011, %v2010
        %v2024 = vpack.c.b16 %v2013, %v2012
        %v2025 = vpack.c.b16 %v2015, %v2014
        %v2026 = vpack.c.b16 %v2017, %v2016
        %v2027 = vpack.c.b16 %v2019, %v2018
        %2036 = vmatpush.bf16.msra.mxu0 %v2027
        %2037 = vmatpush.bf16.msra.mxu0 %v2026
        %2038 = vmatpush.bf16.msra.mxu0 %v2025
        %2039 = vmatpush.bf16.msra.mxu0 %v2024
        %2040 = vmatpush.bf16.msra.mxu0 %v2023
        %2041 = vmatpush.bf16.msra.mxu0 %v2022
        %2042 = vmatpush.bf16.msra.mxu0 %v2021
        %2043 = vmatpush.bf16.msra.mxu0 %v2020
        %2044 = vmatmul.bf16.gmra.mxu0 %v1980
        %v2045 = vpop.f32.mrf.mxu0
        %v2046 = vadd.f32 0.0, %v2045
        %v2047 = vpop.f32.mrf.mxu0
        %v2048 = vadd.f32 0.0, %v2047
        %2049 = vmatmul.bf16.gmra.mxu0 %v1981
        %v2050 = vpop.f32.mrf.mxu0
        %v2051 = vadd.f32 0.0, %v2050
        %v2052 = vpop.f32.mrf.mxu0
        %v2053 = vadd.f32 0.0, %v2052
        %2054 = vmatmul.bf16.gmra.mxu0 %v1982
        %v2055 = vpop.f32.mrf.mxu0
        %v2056 = vadd.f32 0.0, %v2055
        %v2057 = vpop.f32.mrf.mxu0
        %v2058 = vadd.f32 0.0, %v2057
        %2059 = vmatmul.bf16.gmra.mxu0 %v1983
        %v2060 = vpop.f32.mrf.mxu0
        %v2061 = vadd.f32 0.0, %v2060
        %v2062 = vpop.f32.mrf.mxu0
        %v2063 = vadd.f32 0.0, %v2062
        %2064 = vdwg.mxu0
        %v2065 = vadd.f32 %v1939, %v2046
        %v2066 = vadd.f32 %v1940, %v2048
        %v2067 = vadd.f32 %v1941, %v2051
        %v2068 = vadd.f32 %v1942, %v2053
        %v2069 = vadd.f32 %v1943, %v2056
        %v2070 = vadd.f32 %v1944, %v2058
        %v2071 = vadd.f32 %v1945, %v2061
        %v2072 = vadd.f32 %v1946, %v2063
        %v2073 = vld [vmem:[%s1708 + $0x4] sm:$0xf]
        %v2074 = vld [vmem:[%s1708 + $0x8] sm:$0x1]
        %v2075 = vld [vmem:[%s1708 + $0x10] sm:$0xf]
        %v2076 = vld [vmem:[%s1708 + $0x14] sm:$0x1]
        %v2077 = vld [vmem:[%s1708 + $0x1c] sm:$0xf]
        %v2078 = vld [vmem:[%s1708 + $0x20] sm:$0x1]
        %v2079 = vld [vmem:[%s1708 + $0x28] sm:$0xf]
        %v2080 = vld [vmem:[%s1708 + $0x2c] sm:$0x1]
        %v2081 = vld [vmem:[%s1708 + $0x34] sm:$0xf]
        %v2082 = vld [vmem:[%s1708 + $0x38] sm:$0x1]
        %v2083 = vld [vmem:[%s1708 + $0x40] sm:$0xf]
        %v2084 = vld [vmem:[%s1708 + $0x44] sm:$0x1]
        %v2085 = vld [vmem:[%s1708 + $0x4c] sm:$0xf]
        %v2086 = vld [vmem:[%s1708 + $0x50] sm:$0x1]
        %v2087 = vld [vmem:[%s1708 + $0x58] sm:$0xf]
        %v2088 = vld [vmem:[%s1708 + $0x5c] sm:$0x1]
        %v2090 = vshrl.u32 %v2073, 16
        %v2092 = vrot.slane %v2090, 4
        %v2093 = vshll.u32 %v2073, 16
        %v2095 = vrot.slane %v2093, 5
        %v2096 = vor.u32 %v2092, %v2095
        %v2097 = vrot.slane %v2096, 4
        %v2099 = vshll.u32 %v2074, 16
        %v2101 = vrot.slane %v2099, 5
        %v2102 = vsel %vm867, %v2097, %v2101
        %v2104 = vshrl.u32 %v2075, 16
        %v2106 = vrot.slane %v2104, 4
        %v2107 = vshll.u32 %v2075, 16
        %v2109 = vrot.slane %v2107, 5
        %v2110 = vor.u32 %v2106, %v2109
        %v2111 = vrot.slane %v2110, 4
        %v2113 = vshll.u32 %v2076, 16
        %v2115 = vrot.slane %v2113, 5
        %v2116 = vsel %vm867, %v2111, %v2115
        %v2118 = vshrl.u32 %v2077, 16
        %v2120 = vrot.slane %v2118, 4
        %v2121 = vshll.u32 %v2077, 16
        %v2123 = vrot.slane %v2121, 5
        %v2124 = vor.u32 %v2120, %v2123
        %v2125 = vrot.slane %v2124, 4
        %v2127 = vshll.u32 %v2078, 16
        %v2129 = vrot.slane %v2127, 5
        %v2130 = vsel %vm867, %v2125, %v2129
        %v2132 = vshrl.u32 %v2079, 16
        %v2134 = vrot.slane %v2132, 4
        %v2135 = vshll.u32 %v2079, 16
        %v2137 = vrot.slane %v2135, 5
        %v2138 = vor.u32 %v2134, %v2137
        %v2139 = vrot.slane %v2138, 4
        %v2141 = vshll.u32 %v2080, 16
        %v2143 = vrot.slane %v2141, 5
        %v2144 = vsel %vm867, %v2139, %v2143
        %v2146 = vshrl.u32 %v2081, 16
        %v2148 = vrot.slane %v2146, 4
        %v2149 = vshll.u32 %v2081, 16
        %v2151 = vrot.slane %v2149, 5
        %v2152 = vor.u32 %v2148, %v2151
        %v2153 = vrot.slane %v2152, 4
        %v2155 = vshll.u32 %v2082, 16
        %v2157 = vrot.slane %v2155, 5
        %v2158 = vsel %vm867, %v2153, %v2157
        %v2160 = vshrl.u32 %v2083, 16
        %v2162 = vrot.slane %v2160, 4
        %v2163 = vshll.u32 %v2083, 16
        %v2165 = vrot.slane %v2163, 5
        %v2166 = vor.u32 %v2162, %v2165
        %v2167 = vrot.slane %v2166, 4
        %v2169 = vshll.u32 %v2084, 16
        %v2171 = vrot.slane %v2169, 5
        %v2172 = vsel %vm867, %v2167, %v2171
        %v2174 = vshrl.u32 %v2085, 16
        %v2176 = vrot.slane %v2174, 4
        %v2177 = vshll.u32 %v2085, 16
        %v2179 = vrot.slane %v2177, 5
        %v2180 = vor.u32 %v2176, %v2179
        %v2181 = vrot.slane %v2180, 4
        %v2183 = vshll.u32 %v2086, 16
        %v2185 = vrot.slane %v2183, 5
        %v2186 = vsel %vm867, %v2181, %v2185
        %v2188 = vshrl.u32 %v2087, 16
        %v2190 = vrot.slane %v2188, 4
        %v2191 = vshll.u32 %v2087, 16
        %v2193 = vrot.slane %v2191, 5
        %v2194 = vor.u32 %v2190, %v2193
        %v2195 = vrot.slane %v2194, 4
        %v2197 = vshll.u32 %v2088, 16
        %v2199 = vrot.slane %v2197, 5
        %v2200 = vsel %vm867, %v2195, %v2199
        %s2201 = scalar_lea.vmem [#allocation7], 512
        %v2202 = vld [vmem:[%s2201] sm:$0xf]
        %v2203 = vld [vmem:[%s2201 + $0x4] sm:$0xf]
        %v2204 = vld [vmem:[%s2201 + $0x8] sm:$0xf]
        %v2205 = vld [vmem:[%s2201 + $0xc] sm:$0xf]
        %v2206 = vld [vmem:[%s2201 + $0x10] sm:$0xf]
        %v2207 = vld [vmem:[%s2201 + $0x14] sm:$0xf]
        %v2208 = vld [vmem:[%s2201 + $0x18] sm:$0xf]
        %v2209 = vld [vmem:[%s2201 + $0x1c] sm:$0xf]
        %v2210 = vld [vmem:[%s2201 + $0x20] sm:$0xf]
        %v2211 = vld [vmem:[%s2201 + $0x24] sm:$0xf]
        %v2212 = vld [vmem:[%s2201 + $0x28] sm:$0xf]
        %v2213 = vld [vmem:[%s2201 + $0x2c] sm:$0xf]
        %v2214 = vld [vmem:[%s2201 + $0x30] sm:$0xf]
        %v2215 = vld [vmem:[%s2201 + $0x34] sm:$0xf]
        %v2216 = vld [vmem:[%s2201 + $0x38] sm:$0xf]
        %v2217 = vld [vmem:[%s2201 + $0x3c] sm:$0xf]
        %v2218 = vunpack.c.l.b16 %v2102
        %v2219 = vunpack.c.l.b16 %v2116
        %v2220 = vunpack.c.l.b16 %v2130
        %v2221 = vunpack.c.l.b16 %v2144
        %v2222 = vunpack.c.l.b16 %v2158
        %v2223 = vunpack.c.l.b16 %v2172
        %v2224 = vunpack.c.l.b16 %v2186
        %v2225 = vunpack.c.l.b16 %v2200
        %v2226 = vpack.c.b16 %v2219, %v2218
        %v2227 = vpack.c.b16 %v2221, %v2220
        %v2228 = vpack.c.b16 %v2223, %v2222
        %v2229 = vpack.c.b16 %v2225, %v2224
        %v2250 = vunpack.c.l.b16 %v2202
        %v2251 = vunpack.c.l.b16 %v2203
        %v2252 = vunpack.c.l.b16 %v2204
        %v2253 = vunpack.c.l.b16 %v2205
        %v2254 = vunpack.c.l.b16 %v2206
        %v2255 = vunpack.c.l.b16 %v2207
        %v2256 = vunpack.c.l.b16 %v2208
        %v2257 = vunpack.c.l.b16 %v2209
        %v2258 = vunpack.c.l.b16 %v2210
        %v2259 = vunpack.c.l.b16 %v2211
        %v2260 = vunpack.c.l.b16 %v2212
        %v2261 = vunpack.c.l.b16 %v2213
        %v2262 = vunpack.c.l.b16 %v2214
        %v2263 = vunpack.c.l.b16 %v2215
        %v2264 = vunpack.c.l.b16 %v2216
        %v2265 = vunpack.c.l.b16 %v2217
        %v2266 = vpack.c.b16 %v2251, %v2250
        %v2267 = vpack.c.b16 %v2253, %v2252
        %v2268 = vpack.c.b16 %v2255, %v2254
        %v2269 = vpack.c.b16 %v2257, %v2256
        %v2270 = vpack.c.b16 %v2259, %v2258
        %v2271 = vpack.c.b16 %v2261, %v2260
        %v2272 = vpack.c.b16 %v2263, %v2262
        %v2273 = vpack.c.b16 %v2265, %v2264
        %2282 = vmatpush.bf16.msra.mxu0 %v2273
        %2283 = vmatpush.bf16.msra.mxu0 %v2272
        %2284 = vmatpush.bf16.msra.mxu0 %v2271
        %2285 = vmatpush.bf16.msra.mxu0 %v2270
        %2286 = vmatpush.bf16.msra.mxu0 %v2269
        %2287 = vmatpush.bf16.msra.mxu0 %v2268
        %2288 = vmatpush.bf16.msra.mxu0 %v2267
        %2289 = vmatpush.bf16.msra.mxu0 %v2266
        %2290 = vmatmul.bf16.gmra.mxu0 %v2226
        %v2291 = vpop.f32.mrf.mxu0
        %v2292 = vadd.f32 0.0, %v2291
        %v2293 = vpop.f32.mrf.mxu0
        %v2294 = vadd.f32 0.0, %v2293
        %2295 = vmatmul.bf16.gmra.mxu0 %v2227
        %v2296 = vpop.f32.mrf.mxu0
        %v2297 = vadd.f32 0.0, %v2296
        %v2298 = vpop.f32.mrf.mxu0
        %v2299 = vadd.f32 0.0, %v2298
        %2300 = vmatmul.bf16.gmra.mxu0 %v2228
        %v2301 = vpop.f32.mrf.mxu0
        %v2302 = vadd.f32 0.0, %v2301
        %v2303 = vpop.f32.mrf.mxu0
        %v2304 = vadd.f32 0.0, %v2303
        %2305 = vmatmul.bf16.gmra.mxu0 %v2229
        %v2306 = vpop.f32.mrf.mxu0
        %v2307 = vadd.f32 0.0, %v2306
        %v2308 = vpop.f32.mrf.mxu0
        %v2309 = vadd.f32 0.0, %v2308
        %2310 = vdwg.mxu0
        %v2311 = vadd.f32 %v2065, %v2292
        %v2312 = vadd.f32 %v2066, %v2294
        %v2313 = vadd.f32 %v2067, %v2297
        %v2314 = vadd.f32 %v2068, %v2299
        %v2315 = vadd.f32 %v2069, %v2302
        %v2316 = vadd.f32 %v2070, %v2304
        %v2317 = vadd.f32 %v2071, %v2307
        %v2318 = vadd.f32 %v2072, %v2309
        %v2320 = vperm.slane %v498, 0
        %v2322 = vadd.f32 %v2311, %v2320
        %v2323 = vadd.f32 %v2312, %v2320
        %v2324 = vadd.f32 %v2313, %v2320
        %v2325 = vadd.f32 %v2314, %v2320
        %v2326 = vadd.f32 %v2315, %v2320
        %v2327 = vadd.f32 %v2316, %v2320
        %v2328 = vadd.f32 %v2317, %v2320
        %v2329 = vadd.f32 %v2318, %v2320
        %v2330 = vmax.f32 %v2322, 0.0
        %v2331 = vmax.f32 %v2323, 0.0
        %v2332 = vmax.f32 %v2324, 0.0
        %v2333 = vmax.f32 %v2325, 0.0
        %v2334 = vmax.f32 %v2326, 0.0
        %v2335 = vmax.f32 %v2327, 0.0
        %v2336 = vmax.f32 %v2328, 0.0
        %v2337 = vmax.f32 %v2329, 0.0
        %v2338 = vpack.c.bf16 %v2330, %v2330
        %v2339 = vpack.c.bf16 %v2331, %v2331
        %v2340 = vpack.c.bf16 %v2332, %v2332
        %v2341 = vpack.c.bf16 %v2333, %v2333
        %v2342 = vpack.c.bf16 %v2334, %v2334
        %v2343 = vpack.c.bf16 %v2335, %v2335
        %v2344 = vpack.c.bf16 %v2336, %v2336
        %v2345 = vpack.c.bf16 %v2337, %v2337
        %s2346 = scalar_lea.vmem [#allocation3], 12
        %2347 = vst [vmem:[%s2346 + $0x4] sm:$0xf] %v2338
        %2348 = vst [vmem:[%s2346 + $0x10] sm:$0xf] %v2339
        %2349 = vst [vmem:[%s2346 + $0x1c] sm:$0xf] %v2340
        %2350 = vst [vmem:[%s2346 + $0x28] sm:$0xf] %v2341
        %2351 = vst [vmem:[%s2346 + $0x34] sm:$0xf] %v2342
        %2352 = vst [vmem:[%s2346 + $0x40] sm:$0xf] %v2343
        %2353 = vst [vmem:[%s2346 + $0x4c] sm:$0xf] %v2344
        %2354 = vst [vmem:[%s2346 + $0x58] sm:$0xf] %v2345
        %v2355 = vld [vmem:[%s4] sm:$0x1]
        %v2356 = vld [vmem:[#allocation3] sm:$0x8]
        %v2357 = vld [vmem:[#allocation3 + $0x4] sm:$0xf]
        %v2358 = vld [vmem:[#allocation3 + $0xc] sm:$0x8]
        %v2359 = vld [vmem:[#allocation3 + $0x10] sm:$0xf]
        %v2360 = vld [vmem:[#allocation3 + $0x18] sm:$0x8]
        %v2361 = vld [vmem:[#allocation3 + $0x1c] sm:$0xf]
        %v2362 = vld [vmem:[#allocation3 + $0x24] sm:$0x8]
        %v2363 = vld [vmem:[#allocation3 + $0x28] sm:$0xf]
        %v2364 = vld [vmem:[#allocation3 + $0x30] sm:$0x8]
        %v2365 = vld [vmem:[#allocation3 + $0x34] sm:$0xf]
        %v2366 = vld [vmem:[#allocation3 + $0x3c] sm:$0x8]
        %v2367 = vld [vmem:[#allocation3 + $0x40] sm:$0xf]
        %v2368 = vld [vmem:[#allocation3 + $0x48] sm:$0x8]
        %v2369 = vld [vmem:[#allocation3 + $0x4c] sm:$0xf]
        %v2370 = vld [vmem:[#allocation3 + $0x54] sm:$0x8]
        %v2371 = vld [vmem:[#allocation3 + $0x58] sm:$0xf]
        %v2373 = vshrl.u32 %v2356, 16
        %v2375 = vrot.slane %v2373, 7
        %v2376 = vrot.slane %v2375, 4
        %v2378 = vshrl.u32 %v2357, 16
        %v2380 = vrot.slane %v2378, 7
        %v2381 = vshll.u32 %v2357, 16
        %v2383 = vor.u32 %v2380, %v2381
        %v2384 = vsel %vm517, %v2376, %v2383
        %v2386 = vshrl.u32 %v2358, 16
        %v2388 = vrot.slane %v2386, 7
        %v2389 = vrot.slane %v2388, 4
        %v2391 = vshrl.u32 %v2359, 16
        %v2393 = vrot.slane %v2391, 7
        %v2394 = vshll.u32 %v2359, 16
        %v2396 = vor.u32 %v2393, %v2394
        %v2397 = vsel %vm517, %v2389, %v2396
        %v2399 = vshrl.u32 %v2360, 16
        %v2401 = vrot.slane %v2399, 7
        %v2402 = vrot.slane %v2401, 4
        %v2404 = vshrl.u32 %v2361, 16
        %v2406 = vrot.slane %v2404, 7
        %v2407 = vshll.u32 %v2361, 16
        %v2409 = vor.u32 %v2406, %v2407
        %v2410 = vsel %vm517, %v2402, %v2409
        %v2412 = vshrl.u32 %v2362, 16
        %v2414 = vrot.slane %v2412, 7
        %v2415 = vrot.slane %v2414, 4
        %v2417 = vshrl.u32 %v2363, 16
        %v2419 = vrot.slane %v2417, 7
        %v2420 = vshll.u32 %v2363, 16
        %v2422 = vor.u32 %v2419, %v2420
        %v2423 = vsel %vm517, %v2415, %v2422
        %v2425 = vshrl.u32 %v2364, 16
        %v2427 = vrot.slane %v2425, 7
        %v2428 = vrot.slane %v2427, 4
        %v2430 = vshrl.u32 %v2365, 16
        %v2432 = vrot.slane %v2430, 7
        %v2433 = vshll.u32 %v2365, 16
        %v2435 = vor.u32 %v2432, %v2433
        %v2436 = vsel %vm517, %v2428, %v2435
        %v2438 = vshrl.u32 %v2366, 16
        %v2440 = vrot.slane %v2438, 7
        %v2441 = vrot.slane %v2440, 4
        %v2443 = vshrl.u32 %v2367, 16
        %v2445 = vrot.slane %v2443, 7
        %v2446 = vshll.u32 %v2367, 16
        %v2448 = vor.u32 %v2445, %v2446
        %v2449 = vsel %vm517, %v2441, %v2448
        %v2451 = vshrl.u32 %v2368, 16
        %v2453 = vrot.slane %v2451, 7
        %v2454 = vrot.slane %v2453, 4
        %v2456 = vshrl.u32 %v2369, 16
        %v2458 = vrot.slane %v2456, 7
        %v2459 = vshll.u32 %v2369, 16
        %v2461 = vor.u32 %v2458, %v2459
        %v2462 = vsel %vm517, %v2454, %v2461
        %v2464 = vshrl.u32 %v2370, 16
        %v2466 = vrot.slane %v2464, 7
        %v2467 = vrot.slane %v2466, 4
        %v2469 = vshrl.u32 %v2371, 16
        %v2471 = vrot.slane %v2469, 7
        %v2472 = vshll.u32 %v2371, 16
        %v2474 = vor.u32 %v2471, %v2472
        %v2475 = vsel %vm517, %v2467, %v2474
        %v2476 = vld [vmem:[#allocation9] sm:$0xf]
        %v2477 = vld [vmem:[#allocation9 + $0x4] sm:$0xf]
        %v2478 = vld [vmem:[#allocation9 + $0x8] sm:$0xf]
        %v2479 = vld [vmem:[#allocation9 + $0xc] sm:$0xf]
        %v2480 = vld [vmem:[#allocation9 + $0x10] sm:$0xf]
        %v2481 = vld [vmem:[#allocation9 + $0x14] sm:$0xf]
        %v2482 = vld [vmem:[#allocation9 + $0x18] sm:$0xf]
        %v2483 = vld [vmem:[#allocation9 + $0x1c] sm:$0xf]
        %v2484 = vld [vmem:[#allocation9 + $0x20] sm:$0xf]
        %v2485 = vld [vmem:[#allocation9 + $0x24] sm:$0xf]
        %v2486 = vld [vmem:[#allocation9 + $0x28] sm:$0xf]
        %v2487 = vld [vmem:[#allocation9 + $0x2c] sm:$0xf]
        %v2488 = vld [vmem:[#allocation9 + $0x30] sm:$0xf]
        %v2489 = vld [vmem:[#allocation9 + $0x34] sm:$0xf]
        %v2490 = vld [vmem:[#allocation9 + $0x38] sm:$0xf]
        %v2491 = vld [vmem:[#allocation9 + $0x3c] sm:$0xf]
        %s2492 = scalar_lea.vmem [#allocation9], 64
        %v2493 = vld [vmem:[%s2492] sm:$0xf]
        %v2494 = vld [vmem:[%s2492 + $0x4] sm:$0xf]
        %v2495 = vld [vmem:[%s2492 + $0x8] sm:$0xf]
        %v2496 = vld [vmem:[%s2492 + $0xc] sm:$0xf]
        %v2497 = vld [vmem:[%s2492 + $0x10] sm:$0xf]
        %v2498 = vld [vmem:[%s2492 + $0x14] sm:$0xf]
        %v2499 = vld [vmem:[%s2492 + $0x18] sm:$0xf]
        %v2500 = vld [vmem:[%s2492 + $0x1c] sm:$0xf]
        %v2501 = vld [vmem:[%s2492 + $0x20] sm:$0xf]
        %v2502 = vld [vmem:[%s2492 + $0x24] sm:$0xf]
        %v2503 = vld [vmem:[%s2492 + $0x28] sm:$0xf]
        %v2504 = vld [vmem:[%s2492 + $0x2c] sm:$0xf]
        %v2505 = vld [vmem:[%s2492 + $0x30] sm:$0xf]
        %v2506 = vld [vmem:[%s2492 + $0x34] sm:$0xf]
        %v2507 = vld [vmem:[%s2492 + $0x38] sm:$0xf]
        %v2508 = vld [vmem:[%s2492 + $0x3c] sm:$0xf]
        %v2517 = vunpack.c.l.b16 %v2357
        %v2518 = vunpack.c.l.b16 %v2359
        %v2519 = vunpack.c.l.b16 %v2361
        %v2520 = vunpack.c.l.b16 %v2363
        %v2521 = vunpack.c.l.b16 %v2365
        %v2522 = vunpack.c.l.b16 %v2367
        %v2523 = vunpack.c.l.b16 %v2369
        %v2524 = vunpack.c.l.b16 %v2371
        %v2525 = vpack.c.b16 %v2518, %v2517
        %v2526 = vpack.c.b16 %v2520, %v2519
        %v2527 = vpack.c.b16 %v2522, %v2521
        %v2528 = vpack.c.b16 %v2524, %v2523
        %v2549 = vunpack.c.l.b16 %v2493
        %v2550 = vunpack.c.l.b16 %v2494
        %v2551 = vunpack.c.l.b16 %v2495
        %v2552 = vunpack.c.l.b16 %v2496
        %v2553 = vunpack.c.l.b16 %v2497
        %v2554 = vunpack.c.l.b16 %v2498
        %v2555 = vunpack.c.l.b16 %v2499
        %v2556 = vunpack.c.l.b16 %v2500
        %v2557 = vunpack.c.l.b16 %v2501
        %v2558 = vunpack.c.l.b16 %v2502
        %v2559 = vunpack.c.l.b16 %v2503
        %v2560 = vunpack.c.l.b16 %v2504
        %v2561 = vunpack.c.l.b16 %v2505
        %v2562 = vunpack.c.l.b16 %v2506
        %v2563 = vunpack.c.l.b16 %v2507
        %v2564 = vunpack.c.l.b16 %v2508
        %v2565 = vpack.c.b16 %v2550, %v2549
        %v2566 = vpack.c.b16 %v2552, %v2551
        %v2567 = vpack.c.b16 %v2554, %v2553
        %v2568 = vpack.c.b16 %v2556, %v2555
        %v2569 = vpack.c.b16 %v2558, %v2557
        %v2570 = vpack.c.b16 %v2560, %v2559
        %v2571 = vpack.c.b16 %v2562, %v2561
        %v2572 = vpack.c.b16 %v2564, %v2563
        %2581 = vmatpush.bf16.msra.mxu0 %v2572
        %2582 = vmatpush.bf16.msra.mxu0 %v2571
        %2583 = vmatpush.bf16.msra.mxu0 %v2570
        %2584 = vmatpush.bf16.msra.mxu0 %v2569
        %2585 = vmatpush.bf16.msra.mxu0 %v2568
        %2586 = vmatpush.bf16.msra.mxu0 %v2567
        %2587 = vmatpush.bf16.msra.mxu0 %v2566
        %2588 = vmatpush.bf16.msra.mxu0 %v2565
        %2589 = vmatmul.bf16.gmra.mxu0 %v2525
        %v2590 = vpop.f32.mrf.mxu0
        %v2591 = vadd.f32 0.0, %v2590
        %v2592 = vpop.f32.mrf.mxu0
        %v2593 = vadd.f32 0.0, %v2592
        %2594 = vmatmul.bf16.gmra.mxu0 %v2526
        %v2595 = vpop.f32.mrf.mxu0
        %v2596 = vadd.f32 0.0, %v2595
        %v2597 = vpop.f32.mrf.mxu0
        %v2598 = vadd.f32 0.0, %v2597
        %2599 = vmatmul.bf16.gmra.mxu0 %v2527
        %v2600 = vpop.f32.mrf.mxu0
        %v2601 = vadd.f32 0.0, %v2600
        %v2602 = vpop.f32.mrf.mxu0
        %v2603 = vadd.f32 0.0, %v2602
        %2604 = vmatmul.bf16.gmra.mxu0 %v2528
        %v2605 = vpop.f32.mrf.mxu0
        %v2606 = vadd.f32 0.0, %v2605
        %v2607 = vpop.f32.mrf.mxu0
        %v2608 = vadd.f32 0.0, %v2607
        %2609 = vdwg.mxu0
        %v2610 = vunpack.c.l.b16 %v2384
        %v2611 = vunpack.c.l.b16 %v2397
        %v2612 = vunpack.c.l.b16 %v2410
        %v2613 = vunpack.c.l.b16 %v2423
        %v2614 = vunpack.c.l.b16 %v2436
        %v2615 = vunpack.c.l.b16 %v2449
        %v2616 = vunpack.c.l.b16 %v2462
        %v2617 = vunpack.c.l.b16 %v2475
        %v2618 = vpack.c.b16 %v2611, %v2610
        %v2619 = vpack.c.b16 %v2613, %v2612
        %v2620 = vpack.c.b16 %v2615, %v2614
        %v2621 = vpack.c.b16 %v2617, %v2616
        %v2642 = vunpack.c.l.b16 %v2476
        %v2643 = vunpack.c.l.b16 %v2477
        %v2644 = vunpack.c.l.b16 %v2478
        %v2645 = vunpack.c.l.b16 %v2479
        %v2646 = vunpack.c.l.b16 %v2480
        %v2647 = vunpack.c.l.b16 %v2481
        %v2648 = vunpack.c.l.b16 %v2482
        %v2649 = vunpack.c.l.b16 %v2483
        %v2650 = vunpack.c.l.b16 %v2484
        %v2651 = vunpack.c.l.b16 %v2485
        %v2652 = vunpack.c.l.b16 %v2486
        %v2653 = vunpack.c.l.b16 %v2487
        %v2654 = vunpack.c.l.b16 %v2488
        %v2655 = vunpack.c.l.b16 %v2489
        %v2656 = vunpack.c.l.b16 %v2490
        %v2657 = vunpack.c.l.b16 %v2491
        %v2658 = vpack.c.b16 %v2643, %v2642
        %v2659 = vpack.c.b16 %v2645, %v2644
        %v2660 = vpack.c.b16 %v2647, %v2646
        %v2661 = vpack.c.b16 %v2649, %v2648
        %v2662 = vpack.c.b16 %v2651, %v2650
        %v2663 = vpack.c.b16 %v2653, %v2652
        %v2664 = vpack.c.b16 %v2655, %v2654
        %v2665 = vpack.c.b16 %v2657, %v2656
        %2674 = vmatpush.bf16.msra.mxu0 %v2665
        %2675 = vmatpush.bf16.msra.mxu0 %v2664
        %2676 = vmatpush.bf16.msra.mxu0 %v2663
        %2677 = vmatpush.bf16.msra.mxu0 %v2662
        %2678 = vmatpush.bf16.msra.mxu0 %v2661
        %2679 = vmatpush.bf16.msra.mxu0 %v2660
        %2680 = vmatpush.bf16.msra.mxu0 %v2659
        %2681 = vmatpush.bf16.msra.mxu0 %v2658
        %2682 = vmatmul.bf16.gmra.mxu0 %v2618
        %v2683 = vpop.f32.mrf.mxu0
        %v2684 = vadd.f32 %v2591, %v2683
        %v2685 = vpop.f32.mrf.mxu0
        %v2686 = vadd.f32 %v2593, %v2685
        %2687 = vmatmul.bf16.gmra.mxu0 %v2619
        %v2688 = vpop.f32.mrf.mxu0
        %v2689 = vadd.f32 %v2596, %v2688
        %v2690 = vpop.f32.mrf.mxu0
        %v2691 = vadd.f32 %v2598, %v2690
        %2692 = vmatmul.bf16.gmra.mxu0 %v2620
        %v2693 = vpop.f32.mrf.mxu0
        %v2694 = vadd.f32 %v2601, %v2693
        %v2695 = vpop.f32.mrf.mxu0
        %v2696 = vadd.f32 %v2603, %v2695
        %2697 = vmatmul.bf16.gmra.mxu0 %v2621
        %v2698 = vpop.f32.mrf.mxu0
        %v2699 = vadd.f32 %v2606, %v2698
        %v2700 = vpop.f32.mrf.mxu0
        %v2701 = vadd.f32 %v2608, %v2700
        %2702 = vdwg.mxu0
        %v2703 = vld [vmem:[#allocation3 + $0x4] sm:$0xf]
        %v2704 = vld [vmem:[#allocation3 + $0x8] sm:$0x1]
        %v2705 = vld [vmem:[#allocation3 + $0x10] sm:$0xf]
        %v2706 = vld [vmem:[#allocation3 + $0x14] sm:$0x1]
        %v2707 = vld [vmem:[#allocation3 + $0x1c] sm:$0xf]
        %v2708 = vld [vmem:[#allocation3 + $0x20] sm:$0x1]
        %v2709 = vld [vmem:[#allocation3 + $0x28] sm:$0xf]
        %v2710 = vld [vmem:[#allocation3 + $0x2c] sm:$0x1]
        %v2711 = vld [vmem:[#allocation3 + $0x34] sm:$0xf]
        %v2712 = vld [vmem:[#allocation3 + $0x38] sm:$0x1]
        %v2713 = vld [vmem:[#allocation3 + $0x40] sm:$0xf]
        %v2714 = vld [vmem:[#allocation3 + $0x44] sm:$0x1]
        %v2715 = vld [vmem:[#allocation3 + $0x4c] sm:$0xf]
        %v2716 = vld [vmem:[#allocation3 + $0x50] sm:$0x1]
        %v2717 = vld [vmem:[#allocation3 + $0x58] sm:$0xf]
        %v2718 = vld [vmem:[#allocation3 + $0x5c] sm:$0x1]
        %v2720 = vshrl.u32 %v2703, 16
        %v2722 = vrot.slane %v2720, 4
        %v2723 = vshll.u32 %v2703, 16
        %v2725 = vrot.slane %v2723, 5
        %v2726 = vor.u32 %v2722, %v2725
        %v2727 = vrot.slane %v2726, 4
        %v2729 = vshll.u32 %v2704, 16
        %v2731 = vrot.slane %v2729, 5
        %v2732 = vsel %vm867, %v2727, %v2731
        %v2734 = vshrl.u32 %v2705, 16
        %v2736 = vrot.slane %v2734, 4
        %v2737 = vshll.u32 %v2705, 16
        %v2739 = vrot.slane %v2737, 5
        %v2740 = vor.u32 %v2736, %v2739
        %v2741 = vrot.slane %v2740, 4
        %v2743 = vshll.u32 %v2706, 16
        %v2745 = vrot.slane %v2743, 5
        %v2746 = vsel %vm867, %v2741, %v2745
        %v2748 = vshrl.u32 %v2707, 16
        %v2750 = vrot.slane %v2748, 4
        %v2751 = vshll.u32 %v2707, 16
        %v2753 = vrot.slane %v2751, 5
        %v2754 = vor.u32 %v2750, %v2753
        %v2755 = vrot.slane %v2754, 4
        %v2757 = vshll.u32 %v2708, 16
        %v2759 = vrot.slane %v2757, 5
        %v2760 = vsel %vm867, %v2755, %v2759
        %v2762 = vshrl.u32 %v2709, 16
        %v2764 = vrot.slane %v2762, 4
        %v2765 = vshll.u32 %v2709, 16
        %v2767 = vrot.slane %v2765, 5
        %v2768 = vor.u32 %v2764, %v2767
        %v2769 = vrot.slane %v2768, 4
        %v2771 = vshll.u32 %v2710, 16
        %v2773 = vrot.slane %v2771, 5
        %v2774 = vsel %vm867, %v2769, %v2773
        %v2776 = vshrl.u32 %v2711, 16
        %v2778 = vrot.slane %v2776, 4
        %v2779 = vshll.u32 %v2711, 16
        %v2781 = vrot.slane %v2779, 5
        %v2782 = vor.u32 %v2778, %v2781
        %v2783 = vrot.slane %v2782, 4
        %v2785 = vshll.u32 %v2712, 16
        %v2787 = vrot.slane %v2785, 5
        %v2788 = vsel %vm867, %v2783, %v2787
        %v2790 = vshrl.u32 %v2713, 16
        %v2792 = vrot.slane %v2790, 4
        %v2793 = vshll.u32 %v2713, 16
        %v2795 = vrot.slane %v2793, 5
        %v2796 = vor.u32 %v2792, %v2795
        %v2797 = vrot.slane %v2796, 4
        %v2799 = vshll.u32 %v2714, 16
        %v2801 = vrot.slane %v2799, 5
        %v2802 = vsel %vm867, %v2797, %v2801
        %v2804 = vshrl.u32 %v2715, 16
        %v2806 = vrot.slane %v2804, 4
        %v2807 = vshll.u32 %v2715, 16
        %v2809 = vrot.slane %v2807, 5
        %v2810 = vor.u32 %v2806, %v2809
        %v2811 = vrot.slane %v2810, 4
        %v2813 = vshll.u32 %v2716, 16
        %v2815 = vrot.slane %v2813, 5
        %v2816 = vsel %vm867, %v2811, %v2815
        %v2818 = vshrl.u32 %v2717, 16
        %v2820 = vrot.slane %v2818, 4
        %v2821 = vshll.u32 %v2717, 16
        %v2823 = vrot.slane %v2821, 5
        %v2824 = vor.u32 %v2820, %v2823
        %v2825 = vrot.slane %v2824, 4
        %v2827 = vshll.u32 %v2718, 16
        %v2829 = vrot.slane %v2827, 5
        %v2830 = vsel %vm867, %v2825, %v2829
        %s2831 = scalar_lea.vmem [#allocation9], 128
        %v2832 = vld [vmem:[%s2831] sm:$0xf]
        %v2833 = vld [vmem:[%s2831 + $0x4] sm:$0xf]
        %v2834 = vld [vmem:[%s2831 + $0x8] sm:$0xf]
        %v2835 = vld [vmem:[%s2831 + $0xc] sm:$0xf]
        %v2836 = vld [vmem:[%s2831 + $0x10] sm:$0xf]
        %v2837 = vld [vmem:[%s2831 + $0x14] sm:$0xf]
        %v2838 = vld [vmem:[%s2831 + $0x18] sm:$0xf]
        %v2839 = vld [vmem:[%s2831 + $0x1c] sm:$0xf]
        %v2840 = vld [vmem:[%s2831 + $0x20] sm:$0xf]
        %v2841 = vld [vmem:[%s2831 + $0x24] sm:$0xf]
        %v2842 = vld [vmem:[%s2831 + $0x28] sm:$0xf]
        %v2843 = vld [vmem:[%s2831 + $0x2c] sm:$0xf]
        %v2844 = vld [vmem:[%s2831 + $0x30] sm:$0xf]
        %v2845 = vld [vmem:[%s2831 + $0x34] sm:$0xf]
        %v2846 = vld [vmem:[%s2831 + $0x38] sm:$0xf]
        %v2847 = vld [vmem:[%s2831 + $0x3c] sm:$0xf]
        %v2848 = vunpack.c.l.b16 %v2732
        %v2849 = vunpack.c.l.b16 %v2746
        %v2850 = vunpack.c.l.b16 %v2760
        %v2851 = vunpack.c.l.b16 %v2774
        %v2852 = vunpack.c.l.b16 %v2788
        %v2853 = vunpack.c.l.b16 %v2802
        %v2854 = vunpack.c.l.b16 %v2816
        %v2855 = vunpack.c.l.b16 %v2830
        %v2856 = vpack.c.b16 %v2849, %v2848
        %v2857 = vpack.c.b16 %v2851, %v2850
        %v2858 = vpack.c.b16 %v2853, %v2852
        %v2859 = vpack.c.b16 %v2855, %v2854
        %v2880 = vunpack.c.l.b16 %v2832
        %v2881 = vunpack.c.l.b16 %v2833
        %v2882 = vunpack.c.l.b16 %v2834
        %v2883 = vunpack.c.l.b16 %v2835
        %v2884 = vunpack.c.l.b16 %v2836
        %v2885 = vunpack.c.l.b16 %v2837
        %v2886 = vunpack.c.l.b16 %v2838
        %v2887 = vunpack.c.l.b16 %v2839
        %v2888 = vunpack.c.l.b16 %v2840
        %v2889 = vunpack.c.l.b16 %v2841
        %v2890 = vunpack.c.l.b16 %v2842
        %v2891 = vunpack.c.l.b16 %v2843
        %v2892 = vunpack.c.l.b16 %v2844
        %v2893 = vunpack.c.l.b16 %v2845
        %v2894 = vunpack.c.l.b16 %v2846
        %v2895 = vunpack.c.l.b16 %v2847
        %v2896 = vpack.c.b16 %v2881, %v2880
        %v2897 = vpack.c.b16 %v2883, %v2882
        %v2898 = vpack.c.b16 %v2885, %v2884
        %v2899 = vpack.c.b16 %v2887, %v2886
        %v2900 = vpack.c.b16 %v2889, %v2888
        %v2901 = vpack.c.b16 %v2891, %v2890
        %v2902 = vpack.c.b16 %v2893, %v2892
        %v2903 = vpack.c.b16 %v2895, %v2894
        %2912 = vmatpush.bf16.msra.mxu0 %v2903
        %2913 = vmatpush.bf16.msra.mxu0 %v2902
        %2914 = vmatpush.bf16.msra.mxu0 %v2901
        %2915 = vmatpush.bf16.msra.mxu0 %v2900
        %2916 = vmatpush.bf16.msra.mxu0 %v2899
        %2917 = vmatpush.bf16.msra.mxu0 %v2898
        %2918 = vmatpush.bf16.msra.mxu0 %v2897
        %2919 = vmatpush.bf16.msra.mxu0 %v2896
        %2920 = vmatmul.bf16.gmra.mxu0 %v2856
        %v2921 = vpop.f32.mrf.mxu0
        %v2922 = vadd.f32 0.0, %v2921
        %v2923 = vpop.f32.mrf.mxu0
        %v2924 = vadd.f32 0.0, %v2923
        %2925 = vmatmul.bf16.gmra.mxu0 %v2857
        %v2926 = vpop.f32.mrf.mxu0
        %v2927 = vadd.f32 0.0, %v2926
        %v2928 = vpop.f32.mrf.mxu0
        %v2929 = vadd.f32 0.0, %v2928
        %2930 = vmatmul.bf16.gmra.mxu0 %v2858
        %v2931 = vpop.f32.mrf.mxu0
        %v2932 = vadd.f32 0.0, %v2931
        %v2933 = vpop.f32.mrf.mxu0
        %v2934 = vadd.f32 0.0, %v2933
        %2935 = vmatmul.bf16.gmra.mxu0 %v2859
        %v2936 = vpop.f32.mrf.mxu0
        %v2937 = vadd.f32 0.0, %v2936
        %v2938 = vpop.f32.mrf.mxu0
        %v2939 = vadd.f32 0.0, %v2938
        %2940 = vdwg.mxu0
        %v2941 = vadd.f32 %v2684, %v2922
        %v2942 = vadd.f32 %v2686, %v2924
        %v2943 = vadd.f32 %v2689, %v2927
        %v2944 = vadd.f32 %v2691, %v2929
        %v2945 = vadd.f32 %v2694, %v2932
        %v2946 = vadd.f32 %v2696, %v2934
        %v2947 = vadd.f32 %v2699, %v2937
        %v2948 = vadd.f32 %v2701, %v2939
        %v2949 = vld [vmem:[%s2346] sm:$0x8]
        %v2950 = vld [vmem:[%s2346 + $0x4] sm:$0xf]
        %v2951 = vld [vmem:[%s2346 + $0xc] sm:$0x8]
        %v2952 = vld [vmem:[%s2346 + $0x10] sm:$0xf]
        %v2953 = vld [vmem:[%s2346 + $0x18] sm:$0x8]
        %v2954 = vld [vmem:[%s2346 + $0x1c] sm:$0xf]
        %v2955 = vld [vmem:[%s2346 + $0x24] sm:$0x8]
        %v2956 = vld [vmem:[%s2346 + $0x28] sm:$0xf]
        %v2957 = vld [vmem:[%s2346 + $0x30] sm:$0x8]
        %v2958 = vld [vmem:[%s2346 + $0x34] sm:$0xf]
        %v2959 = vld [vmem:[%s2346 + $0x3c] sm:$0x8]
        %v2960 = vld [vmem:[%s2346 + $0x40] sm:$0xf]
        %v2961 = vld [vmem:[%s2346 + $0x48] sm:$0x8]
        %v2962 = vld [vmem:[%s2346 + $0x4c] sm:$0xf]
        %v2963 = vld [vmem:[%s2346 + $0x54] sm:$0x8]
        %v2964 = vld [vmem:[%s2346 + $0x58] sm:$0xf]
        %v2966 = vshrl.u32 %v2949, 16
        %v2968 = vrot.slane %v2966, 7
        %v2969 = vrot.slane %v2968, 4
        %v2971 = vshrl.u32 %v2950, 16
        %v2973 = vrot.slane %v2971, 7
        %v2974 = vshll.u32 %v2950, 16
        %v2976 = vor.u32 %v2973, %v2974
        %v2977 = vsel %vm517, %v2969, %v2976
        %v2979 = vshrl.u32 %v2951, 16
        %v2981 = vrot.slane %v2979, 7
        %v2982 = vrot.slane %v2981, 4
        %v2984 = vshrl.u32 %v2952, 16
        %v2986 = vrot.slane %v2984, 7
        %v2987 = vshll.u32 %v2952, 16
        %v2989 = vor.u32 %v2986, %v2987
        %v2990 = vsel %vm517, %v2982, %v2989
        %v2992 = vshrl.u32 %v2953, 16
        %v2994 = vrot.slane %v2992, 7
        %v2995 = vrot.slane %v2994, 4
        %v2997 = vshrl.u32 %v2954, 16
        %v2999 = vrot.slane %v2997, 7
        %v3000 = vshll.u32 %v2954, 16
        %v3002 = vor.u32 %v2999, %v3000
        %v3003 = vsel %vm517, %v2995, %v3002
        %v3005 = vshrl.u32 %v2955, 16
        %v3007 = vrot.slane %v3005, 7
        %v3008 = vrot.slane %v3007, 4
        %v3010 = vshrl.u32 %v2956, 16
        %v3012 = vrot.slane %v3010, 7
        %v3013 = vshll.u32 %v2956, 16
        %v3015 = vor.u32 %v3012, %v3013
        %v3016 = vsel %vm517, %v3008, %v3015
        %v3018 = vshrl.u32 %v2957, 16
        %v3020 = vrot.slane %v3018, 7
        %v3021 = vrot.slane %v3020, 4
        %v3023 = vshrl.u32 %v2958, 16
        %v3025 = vrot.slane %v3023, 7
        %v3026 = vshll.u32 %v2958, 16
        %v3028 = vor.u32 %v3025, %v3026
        %v3029 = vsel %vm517, %v3021, %v3028
        %v3031 = vshrl.u32 %v2959, 16
        %v3033 = vrot.slane %v3031, 7
        %v3034 = vrot.slane %v3033, 4
        %v3036 = vshrl.u32 %v2960, 16
        %v3038 = vrot.slane %v3036, 7
        %v3039 = vshll.u32 %v2960, 16
        %v3041 = vor.u32 %v3038, %v3039
        %v3042 = vsel %vm517, %v3034, %v3041
        %v3044 = vshrl.u32 %v2961, 16
        %v3046 = vrot.slane %v3044, 7
        %v3047 = vrot.slane %v3046, 4
        %v3049 = vshrl.u32 %v2962, 16
        %v3051 = vrot.slane %v3049, 7
        %v3052 = vshll.u32 %v2962, 16
        %v3054 = vor.u32 %v3051, %v3052
        %v3055 = vsel %vm517, %v3047, %v3054
        %v3057 = vshrl.u32 %v2963, 16
        %v3059 = vrot.slane %v3057, 7
        %v3060 = vrot.slane %v3059, 4
        %v3062 = vshrl.u32 %v2964, 16
        %v3064 = vrot.slane %v3062, 7
        %v3065 = vshll.u32 %v2964, 16
        %v3067 = vor.u32 %v3064, %v3065
        %v3068 = vsel %vm517, %v3060, %v3067
        %s3069 = scalar_lea.vmem [#allocation9], 192
        %v3070 = vld [vmem:[%s3069] sm:$0xf]
        %v3071 = vld [vmem:[%s3069 + $0x4] sm:$0xf]
        %v3072 = vld [vmem:[%s3069 + $0x8] sm:$0xf]
        %v3073 = vld [vmem:[%s3069 + $0xc] sm:$0xf]
        %v3074 = vld [vmem:[%s3069 + $0x10] sm:$0xf]
        %v3075 = vld [vmem:[%s3069 + $0x14] sm:$0xf]
        %v3076 = vld [vmem:[%s3069 + $0x18] sm:$0xf]
        %v3077 = vld [vmem:[%s3069 + $0x1c] sm:$0xf]
        %v3078 = vld [vmem:[%s3069 + $0x20] sm:$0xf]
        %v3079 = vld [vmem:[%s3069 + $0x24] sm:$0xf]
        %v3080 = vld [vmem:[%s3069 + $0x28] sm:$0xf]
        %v3081 = vld [vmem:[%s3069 + $0x2c] sm:$0xf]
        %v3082 = vld [vmem:[%s3069 + $0x30] sm:$0xf]
        %v3083 = vld [vmem:[%s3069 + $0x34] sm:$0xf]
        %v3084 = vld [vmem:[%s3069 + $0x38] sm:$0xf]
        %v3085 = vld [vmem:[%s3069 + $0x3c] sm:$0xf]
        %v3086 = vunpack.c.l.b16 %v2977
        %v3087 = vunpack.c.l.b16 %v2990
        %v3088 = vunpack.c.l.b16 %v3003
        %v3089 = vunpack.c.l.b16 %v3016
        %v3090 = vunpack.c.l.b16 %v3029
        %v3091 = vunpack.c.l.b16 %v3042
        %v3092 = vunpack.c.l.b16 %v3055
        %v3093 = vunpack.c.l.b16 %v3068
        %v3094 = vpack.c.b16 %v3087, %v3086
        %v3095 = vpack.c.b16 %v3089, %v3088
        %v3096 = vpack.c.b16 %v3091, %v3090
        %v3097 = vpack.c.b16 %v3093, %v3092
        %v3118 = vunpack.c.l.b16 %v3070
        %v3119 = vunpack.c.l.b16 %v3071
        %v3120 = vunpack.c.l.b16 %v3072
        %v3121 = vunpack.c.l.b16 %v3073
        %v3122 = vunpack.c.l.b16 %v3074
        %v3123 = vunpack.c.l.b16 %v3075
        %v3124 = vunpack.c.l.b16 %v3076
        %v3125 = vunpack.c.l.b16 %v3077
        %v3126 = vunpack.c.l.b16 %v3078
        %v3127 = vunpack.c.l.b16 %v3079
        %v3128 = vunpack.c.l.b16 %v3080
        %v3129 = vunpack.c.l.b16 %v3081
        %v3130 = vunpack.c.l.b16 %v3082
        %v3131 = vunpack.c.l.b16 %v3083
        %v3132 = vunpack.c.l.b16 %v3084
        %v3133 = vunpack.c.l.b16 %v3085
        %v3134 = vpack.c.b16 %v3119, %v3118
        %v3135 = vpack.c.b16 %v3121, %v3120
        %v3136 = vpack.c.b16 %v3123, %v3122
        %v3137 = vpack.c.b16 %v3125, %v3124
        %v3138 = vpack.c.b16 %v3127, %v3126
        %v3139 = vpack.c.b16 %v3129, %v3128
        %v3140 = vpack.c.b16 %v3131, %v3130
        %v3141 = vpack.c.b16 %v3133, %v3132
        %3150 = vmatpush.bf16.msra.mxu0 %v3141
        %3151 = vmatpush.bf16.msra.mxu0 %v3140
        %3152 = vmatpush.bf16.msra.mxu0 %v3139
        %3153 = vmatpush.bf16.msra.mxu0 %v3138
        %3154 = vmatpush.bf16.msra.mxu0 %v3137
        %3155 = vmatpush.bf16.msra.mxu0 %v3136
        %3156 = vmatpush.bf16.msra.mxu0 %v3135
        %3157 = vmatpush.bf16.msra.mxu0 %v3134
        %3158 = vmatmul.bf16.gmra.mxu0 %v3094
        %v3159 = vpop.f32.mrf.mxu0
        %v3160 = vadd.f32 0.0, %v3159
        %v3161 = vpop.f32.mrf.mxu0
        %v3162 = vadd.f32 0.0, %v3161
        %3163 = vmatmul.bf16.gmra.mxu0 %v3095
        %v3164 = vpop.f32.mrf.mxu0
        %v3165 = vadd.f32 0.0, %v3164
        %v3166 = vpop.f32.mrf.mxu0
        %v3167 = vadd.f32 0.0, %v3166
        %3168 = vmatmul.bf16.gmra.mxu0 %v3096
        %v3169 = vpop.f32.mrf.mxu0
        %v3170 = vadd.f32 0.0, %v3169
        %v3171 = vpop.f32.mrf.mxu0
        %v3172 = vadd.f32 0.0, %v3171
        %3173 = vmatmul.bf16.gmra.mxu0 %v3097
        %v3174 = vpop.f32.mrf.mxu0
        %v3175 = vadd.f32 0.0, %v3174
        %v3176 = vpop.f32.mrf.mxu0
        %v3177 = vadd.f32 0.0, %v3176
        %3178 = vdwg.mxu0
        %v3179 = vadd.f32 %v2941, %v3160
        %v3180 = vadd.f32 %v2942, %v3162
        %v3181 = vadd.f32 %v2943, %v3165
        %v3182 = vadd.f32 %v2944, %v3167
        %v3183 = vadd.f32 %v2945, %v3170
        %v3184 = vadd.f32 %v2946, %v3172
        %v3185 = vadd.f32 %v2947, %v3175
        %v3186 = vadd.f32 %v2948, %v3177
        %s3187 = scalar_lea.vmem [#allocation9], 256
        %v3188 = vld [vmem:[%s3187] sm:$0xf]
        %v3189 = vld [vmem:[%s3187 + $0x4] sm:$0xf]
        %v3190 = vld [vmem:[%s3187 + $0x8] sm:$0xf]
        %v3191 = vld [vmem:[%s3187 + $0xc] sm:$0xf]
        %v3192 = vld [vmem:[%s3187 + $0x10] sm:$0xf]
        %v3193 = vld [vmem:[%s3187 + $0x14] sm:$0xf]
        %v3194 = vld [vmem:[%s3187 + $0x18] sm:$0xf]
        %v3195 = vld [vmem:[%s3187 + $0x1c] sm:$0xf]
        %v3196 = vld [vmem:[%s3187 + $0x20] sm:$0xf]
        %v3197 = vld [vmem:[%s3187 + $0x24] sm:$0xf]
        %v3198 = vld [vmem:[%s3187 + $0x28] sm:$0xf]
        %v3199 = vld [vmem:[%s3187 + $0x2c] sm:$0xf]
        %v3200 = vld [vmem:[%s3187 + $0x30] sm:$0xf]
        %v3201 = vld [vmem:[%s3187 + $0x34] sm:$0xf]
        %v3202 = vld [vmem:[%s3187 + $0x38] sm:$0xf]
        %v3203 = vld [vmem:[%s3187 + $0x3c] sm:$0xf]
        %v3212 = vunpack.c.l.b16 %v2950
        %v3213 = vunpack.c.l.b16 %v2952
        %v3214 = vunpack.c.l.b16 %v2954
        %v3215 = vunpack.c.l.b16 %v2956
        %v3216 = vunpack.c.l.b16 %v2958
        %v3217 = vunpack.c.l.b16 %v2960
        %v3218 = vunpack.c.l.b16 %v2962
        %v3219 = vunpack.c.l.b16 %v2964
        %v3220 = vpack.c.b16 %v3213, %v3212
        %v3221 = vpack.c.b16 %v3215, %v3214
        %v3222 = vpack.c.b16 %v3217, %v3216
        %v3223 = vpack.c.b16 %v3219, %v3218
        %v3244 = vunpack.c.l.b16 %v3188
        %v3245 = vunpack.c.l.b16 %v3189
        %v3246 = vunpack.c.l.b16 %v3190
        %v3247 = vunpack.c.l.b16 %v3191
        %v3248 = vunpack.c.l.b16 %v3192
        %v3249 = vunpack.c.l.b16 %v3193
        %v3250 = vunpack.c.l.b16 %v3194
        %v3251 = vunpack.c.l.b16 %v3195
        %v3252 = vunpack.c.l.b16 %v3196
        %v3253 = vunpack.c.l.b16 %v3197
        %v3254 = vunpack.c.l.b16 %v3198
        %v3255 = vunpack.c.l.b16 %v3199
        %v3256 = vunpack.c.l.b16 %v3200
        %v3257 = vunpack.c.l.b16 %v3201
        %v3258 = vunpack.c.l.b16 %v3202
        %v3259 = vunpack.c.l.b16 %v3203
        %v3260 = vpack.c.b16 %v3245, %v3244
        %v3261 = vpack.c.b16 %v3247, %v3246
        %v3262 = vpack.c.b16 %v3249, %v3248
        %v3263 = vpack.c.b16 %v3251, %v3250
        %v3264 = vpack.c.b16 %v3253, %v3252
        %v3265 = vpack.c.b16 %v3255, %v3254
        %v3266 = vpack.c.b16 %v3257, %v3256
        %v3267 = vpack.c.b16 %v3259, %v3258
        %3276 = vmatpush.bf16.msra.mxu0 %v3267
        %3277 = vmatpush.bf16.msra.mxu0 %v3266
        %3278 = vmatpush.bf16.msra.mxu0 %v3265
        %3279 = vmatpush.bf16.msra.mxu0 %v3264
        %3280 = vmatpush.bf16.msra.mxu0 %v3263
        %3281 = vmatpush.bf16.msra.mxu0 %v3262
        %3282 = vmatpush.bf16.msra.mxu0 %v3261
        %3283 = vmatpush.bf16.msra.mxu0 %v3260
        %3284 = vmatmul.bf16.gmra.mxu0 %v3220
        %v3285 = vpop.f32.mrf.mxu0
        %v3286 = vadd.f32 0.0, %v3285
        %v3287 = vpop.f32.mrf.mxu0
        %v3288 = vadd.f32 0.0, %v3287
        %3289 = vmatmul.bf16.gmra.mxu0 %v3221
        %v3290 = vpop.f32.mrf.mxu0
        %v3291 = vadd.f32 0.0, %v3290
        %v3292 = vpop.f32.mrf.mxu0
        %v3293 = vadd.f32 0.0, %v3292
        %3294 = vmatmul.bf16.gmra.mxu0 %v3222
        %v3295 = vpop.f32.mrf.mxu0
        %v3296 = vadd.f32 0.0, %v3295
        %v3297 = vpop.f32.mrf.mxu0
        %v3298 = vadd.f32 0.0, %v3297
        %3299 = vmatmul.bf16.gmra.mxu0 %v3223
        %v3300 = vpop.f32.mrf.mxu0
        %v3301 = vadd.f32 0.0, %v3300
        %v3302 = vpop.f32.mrf.mxu0
        %v3303 = vadd.f32 0.0, %v3302
        %3304 = vdwg.mxu0
        %v3305 = vadd.f32 %v3179, %v3286
        %v3306 = vadd.f32 %v3180, %v3288
        %v3307 = vadd.f32 %v3181, %v3291
        %v3308 = vadd.f32 %v3182, %v3293
        %v3309 = vadd.f32 %v3183, %v3296
        %v3310 = vadd.f32 %v3184, %v3298
        %v3311 = vadd.f32 %v3185, %v3301
        %v3312 = vadd.f32 %v3186, %v3303
        %v3313 = vld [vmem:[%s2346 + $0x4] sm:$0xf]
        %v3314 = vld [vmem:[%s2346 + $0x8] sm:$0x1]
        %v3315 = vld [vmem:[%s2346 + $0x10] sm:$0xf]
        %v3316 = vld [vmem:[%s2346 + $0x14] sm:$0x1]
        %v3317 = vld [vmem:[%s2346 + $0x1c] sm:$0xf]
        %v3318 = vld [vmem:[%s2346 + $0x20] sm:$0x1]
        %v3319 = vld [vmem:[%s2346 + $0x28] sm:$0xf]
        %v3320 = vld [vmem:[%s2346 + $0x2c] sm:$0x1]
        %v3321 = vld [vmem:[%s2346 + $0x34] sm:$0xf]
        %v3322 = vld [vmem:[%s2346 + $0x38] sm:$0x1]
        %v3323 = vld [vmem:[%s2346 + $0x40] sm:$0xf]
        %v3324 = vld [vmem:[%s2346 + $0x44] sm:$0x1]
        %v3325 = vld [vmem:[%s2346 + $0x4c] sm:$0xf]
        %v3326 = vld [vmem:[%s2346 + $0x50] sm:$0x1]
        %v3327 = vld [vmem:[%s2346 + $0x58] sm:$0xf]
        %v3328 = vld [vmem:[%s2346 + $0x5c] sm:$0x1]
        %v3330 = vshrl.u32 %v3313, 16
        %v3332 = vrot.slane %v3330, 4
        %v3333 = vshll.u32 %v3313, 16
        %v3335 = vrot.slane %v3333, 5
        %v3336 = vor.u32 %v3332, %v3335
        %v3337 = vrot.slane %v3336, 4
        %v3339 = vshll.u32 %v3314, 16
        %v3341 = vrot.slane %v3339, 5
        %v3342 = vsel %vm867, %v3337, %v3341
        %v3344 = vshrl.u32 %v3315, 16
        %v3346 = vrot.slane %v3344, 4
        %v3347 = vshll.u32 %v3315, 16
        %v3349 = vrot.slane %v3347, 5
        %v3350 = vor.u32 %v3346, %v3349
        %v3351 = vrot.slane %v3350, 4
        %v3353 = vshll.u32 %v3316, 16
        %v3355 = vrot.slane %v3353, 5
        %v3356 = vsel %vm867, %v3351, %v3355
        %v3358 = vshrl.u32 %v3317, 16
        %v3360 = vrot.slane %v3358, 4
        %v3361 = vshll.u32 %v3317, 16
        %v3363 = vrot.slane %v3361, 5
        %v3364 = vor.u32 %v3360, %v3363
        %v3365 = vrot.slane %v3364, 4
        %v3367 = vshll.u32 %v3318, 16
        %v3369 = vrot.slane %v3367, 5
        %v3370 = vsel %vm867, %v3365, %v3369
        %v3372 = vshrl.u32 %v3319, 16
        %v3374 = vrot.slane %v3372, 4
        %v3375 = vshll.u32 %v3319, 16
        %v3377 = vrot.slane %v3375, 5
        %v3378 = vor.u32 %v3374, %v3377
        %v3379 = vrot.slane %v3378, 4
        %v3381 = vshll.u32 %v3320, 16
        %v3383 = vrot.slane %v3381, 5
        %v3384 = vsel %vm867, %v3379, %v3383
        %v3386 = vshrl.u32 %v3321, 16
        %v3388 = vrot.slane %v3386, 4
        %v3389 = vshll.u32 %v3321, 16
        %v3391 = vrot.slane %v3389, 5
        %v3392 = vor.u32 %v3388, %v3391
        %v3393 = vrot.slane %v3392, 4
        %v3395 = vshll.u32 %v3322, 16
        %v3397 = vrot.slane %v3395, 5
        %v3398 = vsel %vm867, %v3393, %v3397
        %v3400 = vshrl.u32 %v3323, 16
        %v3402 = vrot.slane %v3400, 4
        %v3403 = vshll.u32 %v3323, 16
        %v3405 = vrot.slane %v3403, 5
        %v3406 = vor.u32 %v3402, %v3405
        %v3407 = vrot.slane %v3406, 4
        %v3409 = vshll.u32 %v3324, 16
        %v3411 = vrot.slane %v3409, 5
        %v3412 = vsel %vm867, %v3407, %v3411
        %v3414 = vshrl.u32 %v3325, 16
        %v3416 = vrot.slane %v3414, 4
        %v3417 = vshll.u32 %v3325, 16
        %v3419 = vrot.slane %v3417, 5
        %v3420 = vor.u32 %v3416, %v3419
        %v3421 = vrot.slane %v3420, 4
        %v3423 = vshll.u32 %v3326, 16
        %v3425 = vrot.slane %v3423, 5
        %v3426 = vsel %vm867, %v3421, %v3425
        %v3428 = vshrl.u32 %v3327, 16
        %v3430 = vrot.slane %v3428, 4
        %v3431 = vshll.u32 %v3327, 16
        %v3433 = vrot.slane %v3431, 5
        %v3434 = vor.u32 %v3430, %v3433
        %v3435 = vrot.slane %v3434, 4
        %v3437 = vshll.u32 %v3328, 16
        %v3439 = vrot.slane %v3437, 5
        %v3440 = vsel %vm867, %v3435, %v3439
        %s3441 = scalar_lea.vmem [#allocation9], 320
        %v3442 = vld [vmem:[%s3441] sm:$0xf]
        %v3443 = vld [vmem:[%s3441 + $0x4] sm:$0xf]
        %v3444 = vld [vmem:[%s3441 + $0x8] sm:$0xf]
        %v3445 = vld [vmem:[%s3441 + $0xc] sm:$0xf]
        %v3446 = vld [vmem:[%s3441 + $0x10] sm:$0xf]
        %v3447 = vld [vmem:[%s3441 + $0x14] sm:$0xf]
        %v3448 = vld [vmem:[%s3441 + $0x18] sm:$0xf]
        %v3449 = vld [vmem:[%s3441 + $0x1c] sm:$0xf]
        %v3450 = vld [vmem:[%s3441 + $0x20] sm:$0xf]
        %v3451 = vld [vmem:[%s3441 + $0x24] sm:$0xf]
        %v3452 = vld [vmem:[%s3441 + $0x28] sm:$0xf]
        %v3453 = vld [vmem:[%s3441 + $0x2c] sm:$0xf]
        %v3454 = vld [vmem:[%s3441 + $0x30] sm:$0xf]
        %v3455 = vld [vmem:[%s3441 + $0x34] sm:$0xf]
        %v3456 = vld [vmem:[%s3441 + $0x38] sm:$0xf]
        %v3457 = vld [vmem:[%s3441 + $0x3c] sm:$0xf]
        %v3458 = vunpack.c.l.b16 %v3342
        %v3459 = vunpack.c.l.b16 %v3356
        %v3460 = vunpack.c.l.b16 %v3370
        %v3461 = vunpack.c.l.b16 %v3384
        %v3462 = vunpack.c.l.b16 %v3398
        %v3463 = vunpack.c.l.b16 %v3412
        %v3464 = vunpack.c.l.b16 %v3426
        %v3465 = vunpack.c.l.b16 %v3440
        %v3466 = vpack.c.b16 %v3459, %v3458
        %v3467 = vpack.c.b16 %v3461, %v3460
        %v3468 = vpack.c.b16 %v3463, %v3462
        %v3469 = vpack.c.b16 %v3465, %v3464
        %v3490 = vunpack.c.l.b16 %v3442
        %v3491 = vunpack.c.l.b16 %v3443
        %v3492 = vunpack.c.l.b16 %v3444
        %v3493 = vunpack.c.l.b16 %v3445
        %v3494 = vunpack.c.l.b16 %v3446
        %v3495 = vunpack.c.l.b16 %v3447
        %v3496 = vunpack.c.l.b16 %v3448
        %v3497 = vunpack.c.l.b16 %v3449
        %v3498 = vunpack.c.l.b16 %v3450
        %v3499 = vunpack.c.l.b16 %v3451
        %v3500 = vunpack.c.l.b16 %v3452
        %v3501 = vunpack.c.l.b16 %v3453
        %v3502 = vunpack.c.l.b16 %v3454
        %v3503 = vunpack.c.l.b16 %v3455
        %v3504 = vunpack.c.l.b16 %v3456
        %v3505 = vunpack.c.l.b16 %v3457
        %v3506 = vpack.c.b16 %v3491, %v3490
        %v3507 = vpack.c.b16 %v3493, %v3492
        %v3508 = vpack.c.b16 %v3495, %v3494
        %v3509 = vpack.c.b16 %v3497, %v3496
        %v3510 = vpack.c.b16 %v3499, %v3498
        %v3511 = vpack.c.b16 %v3501, %v3500
        %v3512 = vpack.c.b16 %v3503, %v3502
        %v3513 = vpack.c.b16 %v3505, %v3504
        %3522 = vmatpush.bf16.msra.mxu0 %v3513
        %3523 = vmatpush.bf16.msra.mxu0 %v3512
        %3524 = vmatpush.bf16.msra.mxu0 %v3511
        %3525 = vmatpush.bf16.msra.mxu0 %v3510
        %3526 = vmatpush.bf16.msra.mxu0 %v3509
        %3527 = vmatpush.bf16.msra.mxu0 %v3508
        %3528 = vmatpush.bf16.msra.mxu0 %v3507
        %3529 = vmatpush.bf16.msra.mxu0 %v3506
        %3530 = vmatmul.bf16.gmra.mxu0 %v3466
        %v3531 = vpop.f32.mrf.mxu0
        %v3532 = vadd.f32 0.0, %v3531
        %v3533 = vpop.f32.mrf.mxu0
        %v3534 = vadd.f32 0.0, %v3533
        %3535 = vmatmul.bf16.gmra.mxu0 %v3467
        %v3536 = vpop.f32.mrf.mxu0
        %v3537 = vadd.f32 0.0, %v3536
        %v3538 = vpop.f32.mrf.mxu0
        %v3539 = vadd.f32 0.0, %v3538
        %3540 = vmatmul.bf16.gmra.mxu0 %v3468
        %v3541 = vpop.f32.mrf.mxu0
        %v3542 = vadd.f32 0.0, %v3541
        %v3543 = vpop.f32.mrf.mxu0
        %v3544 = vadd.f32 0.0, %v3543
        %3545 = vmatmul.bf16.gmra.mxu0 %v3469
        %v3546 = vpop.f32.mrf.mxu0
        %v3547 = vadd.f32 0.0, %v3546
        %v3548 = vpop.f32.mrf.mxu0
        %v3549 = vadd.f32 0.0, %v3548
        %3550 = vdwg.mxu0
        %v3551 = vadd.f32 %v3305, %v3532
        %v3552 = vadd.f32 %v3306, %v3534
        %v3553 = vadd.f32 %v3307, %v3537
        %v3554 = vadd.f32 %v3308, %v3539
        %v3555 = vadd.f32 %v3309, %v3542
        %v3556 = vadd.f32 %v3310, %v3544
        %v3557 = vadd.f32 %v3311, %v3547
        %v3558 = vadd.f32 %v3312, %v3549
        %s3559 = scalar_lea.vmem [#allocation3], 24
        %v3560 = vld [vmem:[%s3559] sm:$0x8]
        %v3561 = vld [vmem:[%s3559 + $0x4] sm:$0xf]
        %v3562 = vld [vmem:[%s3559 + $0xc] sm:$0x8]
        %v3563 = vld [vmem:[%s3559 + $0x10] sm:$0xf]
        %v3564 = vld [vmem:[%s3559 + $0x18] sm:$0x8]
        %v3565 = vld [vmem:[%s3559 + $0x1c] sm:$0xf]
        %v3566 = vld [vmem:[%s3559 + $0x24] sm:$0x8]
        %v3567 = vld [vmem:[%s3559 + $0x28] sm:$0xf]
        %v3568 = vld [vmem:[%s3559 + $0x30] sm:$0x8]
        %v3569 = vld [vmem:[%s3559 + $0x34] sm:$0xf]
        %v3570 = vld [vmem:[%s3559 + $0x3c] sm:$0x8]
        %v3571 = vld [vmem:[%s3559 + $0x40] sm:$0xf]
        %v3572 = vld [vmem:[%s3559 + $0x48] sm:$0x8]
        %v3573 = vld [vmem:[%s3559 + $0x4c] sm:$0xf]
        %v3574 = vld [vmem:[%s3559 + $0x54] sm:$0x8]
        %v3575 = vld [vmem:[%s3559 + $0x58] sm:$0xf]
        %v3577 = vshrl.u32 %v3560, 16
        %v3579 = vrot.slane %v3577, 7
        %v3580 = vrot.slane %v3579, 4
        %v3582 = vshrl.u32 %v3561, 16
        %v3584 = vrot.slane %v3582, 7
        %v3585 = vshll.u32 %v3561, 16
        %v3587 = vor.u32 %v3584, %v3585
        %v3588 = vsel %vm517, %v3580, %v3587
        %v3590 = vshrl.u32 %v3562, 16
        %v3592 = vrot.slane %v3590, 7
        %v3593 = vrot.slane %v3592, 4
        %v3595 = vshrl.u32 %v3563, 16
        %v3597 = vrot.slane %v3595, 7
        %v3598 = vshll.u32 %v3563, 16
        %v3600 = vor.u32 %v3597, %v3598
        %v3601 = vsel %vm517, %v3593, %v3600
        %v3603 = vshrl.u32 %v3564, 16
        %v3605 = vrot.slane %v3603, 7
        %v3606 = vrot.slane %v3605, 4
        %v3608 = vshrl.u32 %v3565, 16
        %v3610 = vrot.slane %v3608, 7
        %v3611 = vshll.u32 %v3565, 16
        %v3613 = vor.u32 %v3610, %v3611
        %v3614 = vsel %vm517, %v3606, %v3613
        %v3616 = vshrl.u32 %v3566, 16
        %v3618 = vrot.slane %v3616, 7
        %v3619 = vrot.slane %v3618, 4
        %v3621 = vshrl.u32 %v3567, 16
        %v3623 = vrot.slane %v3621, 7
        %v3624 = vshll.u32 %v3567, 16
        %v3626 = vor.u32 %v3623, %v3624
        %v3627 = vsel %vm517, %v3619, %v3626
        %v3629 = vshrl.u32 %v3568, 16
        %v3631 = vrot.slane %v3629, 7
        %v3632 = vrot.slane %v3631, 4
        %v3634 = vshrl.u32 %v3569, 16
        %v3636 = vrot.slane %v3634, 7
        %v3637 = vshll.u32 %v3569, 16
        %v3639 = vor.u32 %v3636, %v3637
        %v3640 = vsel %vm517, %v3632, %v3639
        %v3642 = vshrl.u32 %v3570, 16
        %v3644 = vrot.slane %v3642, 7
        %v3645 = vrot.slane %v3644, 4
        %v3647 = vshrl.u32 %v3571, 16
        %v3649 = vrot.slane %v3647, 7
        %v3650 = vshll.u32 %v3571, 16
        %v3652 = vor.u32 %v3649, %v3650
        %v3653 = vsel %vm517, %v3645, %v3652
        %v3655 = vshrl.u32 %v3572, 16
        %v3657 = vrot.slane %v3655, 7
        %v3658 = vrot.slane %v3657, 4
        %v3660 = vshrl.u32 %v3573, 16
        %v3662 = vrot.slane %v3660, 7
        %v3663 = vshll.u32 %v3573, 16
        %v3665 = vor.u32 %v3662, %v3663
        %v3666 = vsel %vm517, %v3658, %v3665
        %v3668 = vshrl.u32 %v3574, 16
        %v3670 = vrot.slane %v3668, 7
        %v3671 = vrot.slane %v3670, 4
        %v3673 = vshrl.u32 %v3575, 16
        %v3675 = vrot.slane %v3673, 7
        %v3676 = vshll.u32 %v3575, 16
        %v3678 = vor.u32 %v3675, %v3676
        %v3679 = vsel %vm517, %v3671, %v3678
        %s3680 = scalar_lea.vmem [#allocation9], 384
        %v3681 = vld [vmem:[%s3680] sm:$0xf]
        %v3682 = vld [vmem:[%s3680 + $0x4] sm:$0xf]
        %v3683 = vld [vmem:[%s3680 + $0x8] sm:$0xf]
        %v3684 = vld [vmem:[%s3680 + $0xc] sm:$0xf]
        %v3685 = vld [vmem:[%s3680 + $0x10] sm:$0xf]
        %v3686 = vld [vmem:[%s3680 + $0x14] sm:$0xf]
        %v3687 = vld [vmem:[%s3680 + $0x18] sm:$0xf]
        %v3688 = vld [vmem:[%s3680 + $0x1c] sm:$0xf]
        %v3689 = vld [vmem:[%s3680 + $0x20] sm:$0xf]
        %v3690 = vld [vmem:[%s3680 + $0x24] sm:$0xf]
        %v3691 = vld [vmem:[%s3680 + $0x28] sm:$0xf]
        %v3692 = vld [vmem:[%s3680 + $0x2c] sm:$0xf]
        %v3693 = vld [vmem:[%s3680 + $0x30] sm:$0xf]
        %v3694 = vld [vmem:[%s3680 + $0x34] sm:$0xf]
        %v3695 = vld [vmem:[%s3680 + $0x38] sm:$0xf]
        %v3696 = vld [vmem:[%s3680 + $0x3c] sm:$0xf]
        %v3697 = vunpack.c.l.b16 %v3588
        %v3698 = vunpack.c.l.b16 %v3601
        %v3699 = vunpack.c.l.b16 %v3614
        %v3700 = vunpack.c.l.b16 %v3627
        %v3701 = vunpack.c.l.b16 %v3640
        %v3702 = vunpack.c.l.b16 %v3653
        %v3703 = vunpack.c.l.b16 %v3666
        %v3704 = vunpack.c.l.b16 %v3679
        %v3705 = vpack.c.b16 %v3698, %v3697
        %v3706 = vpack.c.b16 %v3700, %v3699
        %v3707 = vpack.c.b16 %v3702, %v3701
        %v3708 = vpack.c.b16 %v3704, %v3703
        %v3729 = vunpack.c.l.b16 %v3681
        %v3730 = vunpack.c.l.b16 %v3682
        %v3731 = vunpack.c.l.b16 %v3683
        %v3732 = vunpack.c.l.b16 %v3684
        %v3733 = vunpack.c.l.b16 %v3685
        %v3734 = vunpack.c.l.b16 %v3686
        %v3735 = vunpack.c.l.b16 %v3687
        %v3736 = vunpack.c.l.b16 %v3688
        %v3737 = vunpack.c.l.b16 %v3689
        %v3738 = vunpack.c.l.b16 %v3690
        %v3739 = vunpack.c.l.b16 %v3691
        %v3740 = vunpack.c.l.b16 %v3692
        %v3741 = vunpack.c.l.b16 %v3693
        %v3742 = vunpack.c.l.b16 %v3694
        %v3743 = vunpack.c.l.b16 %v3695
        %v3744 = vunpack.c.l.b16 %v3696
        %v3745 = vpack.c.b16 %v3730, %v3729
        %v3746 = vpack.c.b16 %v3732, %v3731
        %v3747 = vpack.c.b16 %v3734, %v3733
        %v3748 = vpack.c.b16 %v3736, %v3735
        %v3749 = vpack.c.b16 %v3738, %v3737
        %v3750 = vpack.c.b16 %v3740, %v3739
        %v3751 = vpack.c.b16 %v3742, %v3741
        %v3752 = vpack.c.b16 %v3744, %v3743
        %3761 = vmatpush.bf16.msra.mxu0 %v3752
        %3762 = vmatpush.bf16.msra.mxu0 %v3751
        %3763 = vmatpush.bf16.msra.mxu0 %v3750
        %3764 = vmatpush.bf16.msra.mxu0 %v3749
        %3765 = vmatpush.bf16.msra.mxu0 %v3748
        %3766 = vmatpush.bf16.msra.mxu0 %v3747
        %3767 = vmatpush.bf16.msra.mxu0 %v3746
        %3768 = vmatpush.bf16.msra.mxu0 %v3745
        %3769 = vmatmul.bf16.gmra.mxu0 %v3705
        %v3770 = vpop.f32.mrf.mxu0
        %v3771 = vadd.f32 0.0, %v3770
        %v3772 = vpop.f32.mrf.mxu0
        %v3773 = vadd.f32 0.0, %v3772
        %3774 = vmatmul.bf16.gmra.mxu0 %v3706
        %v3775 = vpop.f32.mrf.mxu0
        %v3776 = vadd.f32 0.0, %v3775
        %v3777 = vpop.f32.mrf.mxu0
        %v3778 = vadd.f32 0.0, %v3777
        %3779 = vmatmul.bf16.gmra.mxu0 %v3707
        %v3780 = vpop.f32.mrf.mxu0
        %v3781 = vadd.f32 0.0, %v3780
        %v3782 = vpop.f32.mrf.mxu0
        %v3783 = vadd.f32 0.0, %v3782
        %3784 = vmatmul.bf16.gmra.mxu0 %v3708
        %v3785 = vpop.f32.mrf.mxu0
        %v3786 = vadd.f32 0.0, %v3785
        %v3787 = vpop.f32.mrf.mxu0
        %v3788 = vadd.f32 0.0, %v3787
        %3789 = vdwg.mxu0
        %v3790 = vadd.f32 %v3551, %v3771
        %v3791 = vadd.f32 %v3552, %v3773
        %v3792 = vadd.f32 %v3553, %v3776
        %v3793 = vadd.f32 %v3554, %v3778
        %v3794 = vadd.f32 %v3555, %v3781
        %v3795 = vadd.f32 %v3556, %v3783
        %v3796 = vadd.f32 %v3557, %v3786
        %v3797 = vadd.f32 %v3558, %v3788
        %s3798 = scalar_lea.vmem [#allocation9], 448
        %v3799 = vld [vmem:[%s3798] sm:$0xf]
        %v3800 = vld [vmem:[%s3798 + $0x4] sm:$0xf]
        %v3801 = vld [vmem:[%s3798 + $0x8] sm:$0xf]
        %v3802 = vld [vmem:[%s3798 + $0xc] sm:$0xf]
        %v3803 = vld [vmem:[%s3798 + $0x10] sm:$0xf]
        %v3804 = vld [vmem:[%s3798 + $0x14] sm:$0xf]
        %v3805 = vld [vmem:[%s3798 + $0x18] sm:$0xf]
        %v3806 = vld [vmem:[%s3798 + $0x1c] sm:$0xf]
        %v3807 = vld [vmem:[%s3798 + $0x20] sm:$0xf]
        %v3808 = vld [vmem:[%s3798 + $0x24] sm:$0xf]
        %v3809 = vld [vmem:[%s3798 + $0x28] sm:$0xf]
        %v3810 = vld [vmem:[%s3798 + $0x2c] sm:$0xf]
        %v3811 = vld [vmem:[%s3798 + $0x30] sm:$0xf]
        %v3812 = vld [vmem:[%s3798 + $0x34] sm:$0xf]
        %v3813 = vld [vmem:[%s3798 + $0x38] sm:$0xf]
        %v3814 = vld [vmem:[%s3798 + $0x3c] sm:$0xf]
        %v3823 = vunpack.c.l.b16 %v3561
        %v3824 = vunpack.c.l.b16 %v3563
        %v3825 = vunpack.c.l.b16 %v3565
        %v3826 = vunpack.c.l.b16 %v3567
        %v3827 = vunpack.c.l.b16 %v3569
        %v3828 = vunpack.c.l.b16 %v3571
        %v3829 = vunpack.c.l.b16 %v3573
        %v3830 = vunpack.c.l.b16 %v3575
        %v3831 = vpack.c.b16 %v3824, %v3823
        %v3832 = vpack.c.b16 %v3826, %v3825
        %v3833 = vpack.c.b16 %v3828, %v3827
        %v3834 = vpack.c.b16 %v3830, %v3829
        %v3855 = vunpack.c.l.b16 %v3799
        %v3856 = vunpack.c.l.b16 %v3800
        %v3857 = vunpack.c.l.b16 %v3801
        %v3858 = vunpack.c.l.b16 %v3802
        %v3859 = vunpack.c.l.b16 %v3803
        %v3860 = vunpack.c.l.b16 %v3804
        %v3861 = vunpack.c.l.b16 %v3805
        %v3862 = vunpack.c.l.b16 %v3806
        %v3863 = vunpack.c.l.b16 %v3807
        %v3864 = vunpack.c.l.b16 %v3808
        %v3865 = vunpack.c.l.b16 %v3809
        %v3866 = vunpack.c.l.b16 %v3810
        %v3867 = vunpack.c.l.b16 %v3811
        %v3868 = vunpack.c.l.b16 %v3812
        %v3869 = vunpack.c.l.b16 %v3813
        %v3870 = vunpack.c.l.b16 %v3814
        %v3871 = vpack.c.b16 %v3856, %v3855
        %v3872 = vpack.c.b16 %v3858, %v3857
        %v3873 = vpack.c.b16 %v3860, %v3859
        %v3874 = vpack.c.b16 %v3862, %v3861
        %v3875 = vpack.c.b16 %v3864, %v3863
        %v3876 = vpack.c.b16 %v3866, %v3865
        %v3877 = vpack.c.b16 %v3868, %v3867
        %v3878 = vpack.c.b16 %v3870, %v3869
        %3887 = vmatpush.bf16.msra.mxu0 %v3878
        %3888 = vmatpush.bf16.msra.mxu0 %v3877
        %3889 = vmatpush.bf16.msra.mxu0 %v3876
        %3890 = vmatpush.bf16.msra.mxu0 %v3875
        %3891 = vmatpush.bf16.msra.mxu0 %v3874
        %3892 = vmatpush.bf16.msra.mxu0 %v3873
        %3893 = vmatpush.bf16.msra.mxu0 %v3872
        %3894 = vmatpush.bf16.msra.mxu0 %v3871
        %3895 = vmatmul.bf16.gmra.mxu0 %v3831
        %v3896 = vpop.f32.mrf.mxu0
        %v3897 = vadd.f32 0.0, %v3896
        %v3898 = vpop.f32.mrf.mxu0
        %v3899 = vadd.f32 0.0, %v3898
        %3900 = vmatmul.bf16.gmra.mxu0 %v3832
        %v3901 = vpop.f32.mrf.mxu0
        %v3902 = vadd.f32 0.0, %v3901
        %v3903 = vpop.f32.mrf.mxu0
        %v3904 = vadd.f32 0.0, %v3903
        %3905 = vmatmul.bf16.gmra.mxu0 %v3833
        %v3906 = vpop.f32.mrf.mxu0
        %v3907 = vadd.f32 0.0, %v3906
        %v3908 = vpop.f32.mrf.mxu0
        %v3909 = vadd.f32 0.0, %v3908
        %3910 = vmatmul.bf16.gmra.mxu0 %v3834
        %v3911 = vpop.f32.mrf.mxu0
        %v3912 = vadd.f32 0.0, %v3911
        %v3913 = vpop.f32.mrf.mxu0
        %v3914 = vadd.f32 0.0, %v3913
        %3915 = vdwg.mxu0
        %v3916 = vadd.f32 %v3790, %v3897
        %v3917 = vadd.f32 %v3791, %v3899
        %v3918 = vadd.f32 %v3792, %v3902
        %v3919 = vadd.f32 %v3793, %v3904
        %v3920 = vadd.f32 %v3794, %v3907
        %v3921 = vadd.f32 %v3795, %v3909
        %v3922 = vadd.f32 %v3796, %v3912
        %v3923 = vadd.f32 %v3797, %v3914
        %v3924 = vld [vmem:[%s3559 + $0x4] sm:$0xf]
        %v3925 = vld [vmem:[%s3559 + $0x8] sm:$0x1]
        %v3926 = vld [vmem:[%s3559 + $0x10] sm:$0xf]
        %v3927 = vld [vmem:[%s3559 + $0x14] sm:$0x1]
        %v3928 = vld [vmem:[%s3559 + $0x1c] sm:$0xf]
        %v3929 = vld [vmem:[%s3559 + $0x20] sm:$0x1]
        %v3930 = vld [vmem:[%s3559 + $0x28] sm:$0xf]
        %v3931 = vld [vmem:[%s3559 + $0x2c] sm:$0x1]
        %v3932 = vld [vmem:[%s3559 + $0x34] sm:$0xf]
        %v3933 = vld [vmem:[%s3559 + $0x38] sm:$0x1]
        %v3934 = vld [vmem:[%s3559 + $0x40] sm:$0xf]
        %v3935 = vld [vmem:[%s3559 + $0x44] sm:$0x1]
        %v3936 = vld [vmem:[%s3559 + $0x4c] sm:$0xf]
        %v3937 = vld [vmem:[%s3559 + $0x50] sm:$0x1]
        %v3938 = vld [vmem:[%s3559 + $0x58] sm:$0xf]
        %v3939 = vld [vmem:[%s3559 + $0x5c] sm:$0x1]
        %v3941 = vshrl.u32 %v3924, 16
        %v3943 = vrot.slane %v3941, 4
        %v3944 = vshll.u32 %v3924, 16
        %v3946 = vrot.slane %v3944, 5
        %v3947 = vor.u32 %v3943, %v3946
        %v3948 = vrot.slane %v3947, 4
        %v3950 = vshll.u32 %v3925, 16
        %v3952 = vrot.slane %v3950, 5
        %v3953 = vsel %vm867, %v3948, %v3952
        %v3955 = vshrl.u32 %v3926, 16
        %v3957 = vrot.slane %v3955, 4
        %v3958 = vshll.u32 %v3926, 16
        %v3960 = vrot.slane %v3958, 5
        %v3961 = vor.u32 %v3957, %v3960
        %v3962 = vrot.slane %v3961, 4
        %v3964 = vshll.u32 %v3927, 16
        %v3966 = vrot.slane %v3964, 5
        %v3967 = vsel %vm867, %v3962, %v3966
        %v3969 = vshrl.u32 %v3928, 16
        %v3971 = vrot.slane %v3969, 4
        %v3972 = vshll.u32 %v3928, 16
        %v3974 = vrot.slane %v3972, 5
        %v3975 = vor.u32 %v3971, %v3974
        %v3976 = vrot.slane %v3975, 4
        %v3978 = vshll.u32 %v3929, 16
        %v3980 = vrot.slane %v3978, 5
        %v3981 = vsel %vm867, %v3976, %v3980
        %v3983 = vshrl.u32 %v3930, 16
        %v3985 = vrot.slane %v3983, 4
        %v3986 = vshll.u32 %v3930, 16
        %v3988 = vrot.slane %v3986, 5
        %v3989 = vor.u32 %v3985, %v3988
        %v3990 = vrot.slane %v3989, 4
        %v3992 = vshll.u32 %v3931, 16
        %v3994 = vrot.slane %v3992, 5
        %v3995 = vsel %vm867, %v3990, %v3994
        %v3997 = vshrl.u32 %v3932, 16
        %v3999 = vrot.slane %v3997, 4
        %v4000 = vshll.u32 %v3932, 16
        %v4002 = vrot.slane %v4000, 5
        %v4003 = vor.u32 %v3999, %v4002
        %v4004 = vrot.slane %v4003, 4
        %v4006 = vshll.u32 %v3933, 16
        %v4008 = vrot.slane %v4006, 5
        %v4009 = vsel %vm867, %v4004, %v4008
        %v4011 = vshrl.u32 %v3934, 16
        %v4013 = vrot.slane %v4011, 4
        %v4014 = vshll.u32 %v3934, 16
        %v4016 = vrot.slane %v4014, 5
        %v4017 = vor.u32 %v4013, %v4016
        %v4018 = vrot.slane %v4017, 4
        %v4020 = vshll.u32 %v3935, 16
        %v4022 = vrot.slane %v4020, 5
        %v4023 = vsel %vm867, %v4018, %v4022
        %v4025 = vshrl.u32 %v3936, 16
        %v4027 = vrot.slane %v4025, 4
        %v4028 = vshll.u32 %v3936, 16
        %v4030 = vrot.slane %v4028, 5
        %v4031 = vor.u32 %v4027, %v4030
        %v4032 = vrot.slane %v4031, 4
        %v4034 = vshll.u32 %v3937, 16
        %v4036 = vrot.slane %v4034, 5
        %v4037 = vsel %vm867, %v4032, %v4036
        %v4039 = vshrl.u32 %v3938, 16
        %v4041 = vrot.slane %v4039, 4
        %v4042 = vshll.u32 %v3938, 16
        %v4044 = vrot.slane %v4042, 5
        %v4045 = vor.u32 %v4041, %v4044
        %v4046 = vrot.slane %v4045, 4
        %v4048 = vshll.u32 %v3939, 16
        %v4050 = vrot.slane %v4048, 5
        %v4051 = vsel %vm867, %v4046, %v4050
        %s4052 = scalar_lea.vmem [#allocation9], 512
        %v4053 = vld [vmem:[%s4052] sm:$0xf]
        %v4054 = vld [vmem:[%s4052 + $0x4] sm:$0xf]
        %v4055 = vld [vmem:[%s4052 + $0x8] sm:$0xf]
        %v4056 = vld [vmem:[%s4052 + $0xc] sm:$0xf]
        %v4057 = vld [vmem:[%s4052 + $0x10] sm:$0xf]
        %v4058 = vld [vmem:[%s4052 + $0x14] sm:$0xf]
        %v4059 = vld [vmem:[%s4052 + $0x18] sm:$0xf]
        %v4060 = vld [vmem:[%s4052 + $0x1c] sm:$0xf]
        %v4061 = vld [vmem:[%s4052 + $0x20] sm:$0xf]
        %v4062 = vld [vmem:[%s4052 + $0x24] sm:$0xf]
        %v4063 = vld [vmem:[%s4052 + $0x28] sm:$0xf]
        %v4064 = vld [vmem:[%s4052 + $0x2c] sm:$0xf]
        %v4065 = vld [vmem:[%s4052 + $0x30] sm:$0xf]
        %v4066 = vld [vmem:[%s4052 + $0x34] sm:$0xf]
        %v4067 = vld [vmem:[%s4052 + $0x38] sm:$0xf]
        %v4068 = vld [vmem:[%s4052 + $0x3c] sm:$0xf]
        %v4069 = vunpack.c.l.b16 %v3953
        %v4070 = vunpack.c.l.b16 %v3967
        %v4071 = vunpack.c.l.b16 %v3981
        %v4072 = vunpack.c.l.b16 %v3995
        %v4073 = vunpack.c.l.b16 %v4009
        %v4074 = vunpack.c.l.b16 %v4023
        %v4075 = vunpack.c.l.b16 %v4037
        %v4076 = vunpack.c.l.b16 %v4051
        %v4077 = vpack.c.b16 %v4070, %v4069
        %v4078 = vpack.c.b16 %v4072, %v4071
        %v4079 = vpack.c.b16 %v4074, %v4073
        %v4080 = vpack.c.b16 %v4076, %v4075
        %v4101 = vunpack.c.l.b16 %v4053
        %v4102 = vunpack.c.l.b16 %v4054
        %v4103 = vunpack.c.l.b16 %v4055
        %v4104 = vunpack.c.l.b16 %v4056
        %v4105 = vunpack.c.l.b16 %v4057
        %v4106 = vunpack.c.l.b16 %v4058
        %v4107 = vunpack.c.l.b16 %v4059
        %v4108 = vunpack.c.l.b16 %v4060
        %v4109 = vunpack.c.l.b16 %v4061
        %v4110 = vunpack.c.l.b16 %v4062
        %v4111 = vunpack.c.l.b16 %v4063
        %v4112 = vunpack.c.l.b16 %v4064
        %v4113 = vunpack.c.l.b16 %v4065
        %v4114 = vunpack.c.l.b16 %v4066
        %v4115 = vunpack.c.l.b16 %v4067
        %v4116 = vunpack.c.l.b16 %v4068
        %v4117 = vpack.c.b16 %v4102, %v4101
        %v4118 = vpack.c.b16 %v4104, %v4103
        %v4119 = vpack.c.b16 %v4106, %v4105
        %v4120 = vpack.c.b16 %v4108, %v4107
        %v4121 = vpack.c.b16 %v4110, %v4109
        %v4122 = vpack.c.b16 %v4112, %v4111
        %v4123 = vpack.c.b16 %v4114, %v4113
        %v4124 = vpack.c.b16 %v4116, %v4115
        %4133 = vmatpush.bf16.msra.mxu0 %v4124
        %4134 = vmatpush.bf16.msra.mxu0 %v4123
        %4135 = vmatpush.bf16.msra.mxu0 %v4122
        %4136 = vmatpush.bf16.msra.mxu0 %v4121
        %4137 = vmatpush.bf16.msra.mxu0 %v4120
        %4138 = vmatpush.bf16.msra.mxu0 %v4119
        %4139 = vmatpush.bf16.msra.mxu0 %v4118
        %4140 = vmatpush.bf16.msra.mxu0 %v4117
        %4141 = vmatmul.bf16.gmra.mxu0 %v4077
        %v4142 = vpop.f32.mrf.mxu0
        %v4143 = vadd.f32 0.0, %v4142
        %v4144 = vpop.f32.mrf.mxu0
        %v4145 = vadd.f32 0.0, %v4144
        %4146 = vmatmul.bf16.gmra.mxu0 %v4078
        %v4147 = vpop.f32.mrf.mxu0
        %v4148 = vadd.f32 0.0, %v4147
        %v4149 = vpop.f32.mrf.mxu0
        %v4150 = vadd.f32 0.0, %v4149
        %4151 = vmatmul.bf16.gmra.mxu0 %v4079
        %v4152 = vpop.f32.mrf.mxu0
        %v4153 = vadd.f32 0.0, %v4152
        %v4154 = vpop.f32.mrf.mxu0
        %v4155 = vadd.f32 0.0, %v4154
        %4156 = vmatmul.bf16.gmra.mxu0 %v4080
        %v4157 = vpop.f32.mrf.mxu0
        %v4158 = vadd.f32 0.0, %v4157
        %v4159 = vpop.f32.mrf.mxu0
        %v4160 = vadd.f32 0.0, %v4159
        %4161 = vdwg.mxu0
        %v4162 = vadd.f32 %v3916, %v4143
        %v4163 = vadd.f32 %v3917, %v4145
        %v4164 = vadd.f32 %v3918, %v4148
        %v4165 = vadd.f32 %v3919, %v4150
        %v4166 = vadd.f32 %v3920, %v4153
        %v4167 = vadd.f32 %v3921, %v4155
        %v4168 = vadd.f32 %v3922, %v4158
        %v4169 = vadd.f32 %v3923, %v4160
        %v4171 = vperm.slane %v2355, 0
        %v4173 = vadd.f32 %v4162, %v4171
        %v4174 = vadd.f32 %v4163, %v4171
        %v4175 = vadd.f32 %v4164, %v4171
        %v4176 = vadd.f32 %v4165, %v4171
        %v4177 = vadd.f32 %v4166, %v4171
        %v4178 = vadd.f32 %v4167, %v4171
        %v4179 = vadd.f32 %v4168, %v4171
        %v4180 = vadd.f32 %v4169, %v4171
        %v4181 = vmax.f32 %v4173, 0.0
        %v4182 = vmax.f32 %v4174, 0.0
        %v4183 = vmax.f32 %v4175, 0.0
        %v4184 = vmax.f32 %v4176, 0.0
        %v4185 = vmax.f32 %v4177, 0.0
        %v4186 = vmax.f32 %v4178, 0.0
        %v4187 = vmax.f32 %v4179, 0.0
        %v4188 = vmax.f32 %v4180, 0.0
        %v4189 = vpack.c.bf16 %v4181, %v4181
        %v4190 = vpack.c.bf16 %v4182, %v4182
        %v4191 = vpack.c.bf16 %v4183, %v4183
        %v4192 = vpack.c.bf16 %v4184, %v4184
        %v4193 = vpack.c.bf16 %v4185, %v4185
        %v4194 = vpack.c.bf16 %v4186, %v4186
        %v4195 = vpack.c.bf16 %v4187, %v4187
        %v4196 = vpack.c.bf16 %v4188, %v4188
        %s4197 = scalar_lea.vmem [#allocation4], 12
        %4198 = vst [vmem:[%s4197 + $0x4] sm:$0xf] %v4189
        %4199 = vst [vmem:[%s4197 + $0x10] sm:$0xf] %v4190
        %4200 = vst [vmem:[%s4197 + $0x1c] sm:$0xf] %v4191
        %4201 = vst [vmem:[%s4197 + $0x28] sm:$0xf] %v4192
        %4202 = vst [vmem:[%s4197 + $0x34] sm:$0xf] %v4193
        %4203 = vst [vmem:[%s4197 + $0x40] sm:$0xf] %v4194
        %4204 = vst [vmem:[%s4197 + $0x4c] sm:$0xf] %v4195
        %4205 = vst [vmem:[%s4197 + $0x58] sm:$0xf] %v4196
        %v4206 = vld [vmem:[%s4] sm:$0x1]
        %v4207 = vld [vmem:[#allocation4] sm:$0x8]
        %v4208 = vld [vmem:[#allocation4 + $0x4] sm:$0xf]
        %v4209 = vld [vmem:[#allocation4 + $0xc] sm:$0x8]
        %v4210 = vld [vmem:[#allocation4 + $0x10] sm:$0xf]
        %v4211 = vld [vmem:[#allocation4 + $0x18] sm:$0x8]
        %v4212 = vld [vmem:[#allocation4 + $0x1c] sm:$0xf]
        %v4213 = vld [vmem:[#allocation4 + $0x24] sm:$0x8]
        %v4214 = vld [vmem:[#allocation4 + $0x28] sm:$0xf]
        %v4215 = vld [vmem:[#allocation4 + $0x30] sm:$0x8]
        %v4216 = vld [vmem:[#allocation4 + $0x34] sm:$0xf]
        %v4217 = vld [vmem:[#allocation4 + $0x3c] sm:$0x8]
        %v4218 = vld [vmem:[#allocation4 + $0x40] sm:$0xf]
        %v4219 = vld [vmem:[#allocation4 + $0x48] sm:$0x8]
        %v4220 = vld [vmem:[#allocation4 + $0x4c] sm:$0xf]
        %v4221 = vld [vmem:[#allocation4 + $0x54] sm:$0x8]
        %v4222 = vld [vmem:[#allocation4 + $0x58] sm:$0xf]
        %v4224 = vshrl.u32 %v4207, 16
        %v4226 = vrot.slane %v4224, 7
        %v4227 = vrot.slane %v4226, 4
        %v4229 = vshrl.u32 %v4208, 16
        %v4231 = vrot.slane %v4229, 7
        %v4232 = vshll.u32 %v4208, 16
        %v4234 = vor.u32 %v4231, %v4232
        %v4235 = vsel %vm517, %v4227, %v4234
        %v4237 = vshrl.u32 %v4209, 16
        %v4239 = vrot.slane %v4237, 7
        %v4240 = vrot.slane %v4239, 4
        %v4242 = vshrl.u32 %v4210, 16
        %v4244 = vrot.slane %v4242, 7
        %v4245 = vshll.u32 %v4210, 16
        %v4247 = vor.u32 %v4244, %v4245
        %v4248 = vsel %vm517, %v4240, %v4247
        %v4250 = vshrl.u32 %v4211, 16
        %v4252 = vrot.slane %v4250, 7
        %v4253 = vrot.slane %v4252, 4
        %v4255 = vshrl.u32 %v4212, 16
        %v4257 = vrot.slane %v4255, 7
        %v4258 = vshll.u32 %v4212, 16
        %v4260 = vor.u32 %v4257, %v4258
        %v4261 = vsel %vm517, %v4253, %v4260
        %v4263 = vshrl.u32 %v4213, 16
        %v4265 = vrot.slane %v4263, 7
        %v4266 = vrot.slane %v4265, 4
        %v4268 = vshrl.u32 %v4214, 16
        %v4270 = vrot.slane %v4268, 7
        %v4271 = vshll.u32 %v4214, 16
        %v4273 = vor.u32 %v4270, %v4271
        %v4274 = vsel %vm517, %v4266, %v4273
        %v4276 = vshrl.u32 %v4215, 16
        %v4278 = vrot.slane %v4276, 7
        %v4279 = vrot.slane %v4278, 4
        %v4281 = vshrl.u32 %v4216, 16
        %v4283 = vrot.slane %v4281, 7
        %v4284 = vshll.u32 %v4216, 16
        %v4286 = vor.u32 %v4283, %v4284
        %v4287 = vsel %vm517, %v4279, %v4286
        %v4289 = vshrl.u32 %v4217, 16
        %v4291 = vrot.slane %v4289, 7
        %v4292 = vrot.slane %v4291, 4
        %v4294 = vshrl.u32 %v4218, 16
        %v4296 = vrot.slane %v4294, 7
        %v4297 = vshll.u32 %v4218, 16
        %v4299 = vor.u32 %v4296, %v4297
        %v4300 = vsel %vm517, %v4292, %v4299
        %v4302 = vshrl.u32 %v4219, 16
        %v4304 = vrot.slane %v4302, 7
        %v4305 = vrot.slane %v4304, 4
        %v4307 = vshrl.u32 %v4220, 16
        %v4309 = vrot.slane %v4307, 7
        %v4310 = vshll.u32 %v4220, 16
        %v4312 = vor.u32 %v4309, %v4310
        %v4313 = vsel %vm517, %v4305, %v4312
        %v4315 = vshrl.u32 %v4221, 16
        %v4317 = vrot.slane %v4315, 7
        %v4318 = vrot.slane %v4317, 4
        %v4320 = vshrl.u32 %v4222, 16
        %v4322 = vrot.slane %v4320, 7
        %v4323 = vshll.u32 %v4222, 16
        %v4325 = vor.u32 %v4322, %v4323
        %v4326 = vsel %vm517, %v4318, %v4325
        %v4327 = vld [vmem:[#allocation9] sm:$0xf]
        %v4328 = vld [vmem:[#allocation9 + $0x4] sm:$0xf]
        %v4329 = vld [vmem:[#allocation9 + $0x8] sm:$0xf]
        %v4330 = vld [vmem:[#allocation9 + $0xc] sm:$0xf]
        %v4331 = vld [vmem:[#allocation9 + $0x10] sm:$0xf]
        %v4332 = vld [vmem:[#allocation9 + $0x14] sm:$0xf]
        %v4333 = vld [vmem:[#allocation9 + $0x18] sm:$0xf]
        %v4334 = vld [vmem:[#allocation9 + $0x1c] sm:$0xf]
        %v4335 = vld [vmem:[#allocation9 + $0x20] sm:$0xf]
        %v4336 = vld [vmem:[#allocation9 + $0x24] sm:$0xf]
        %v4337 = vld [vmem:[#allocation9 + $0x28] sm:$0xf]
        %v4338 = vld [vmem:[#allocation9 + $0x2c] sm:$0xf]
        %v4339 = vld [vmem:[#allocation9 + $0x30] sm:$0xf]
        %v4340 = vld [vmem:[#allocation9 + $0x34] sm:$0xf]
        %v4341 = vld [vmem:[#allocation9 + $0x38] sm:$0xf]
        %v4342 = vld [vmem:[#allocation9 + $0x3c] sm:$0xf]
        %v4343 = vld [vmem:[%s2492] sm:$0xf]
        %v4344 = vld [vmem:[%s2492 + $0x4] sm:$0xf]
        %v4345 = vld [vmem:[%s2492 + $0x8] sm:$0xf]
        %v4346 = vld [vmem:[%s2492 + $0xc] sm:$0xf]
        %v4347 = vld [vmem:[%s2492 + $0x10] sm:$0xf]
        %v4348 = vld [vmem:[%s2492 + $0x14] sm:$0xf]
        %v4349 = vld [vmem:[%s2492 + $0x18] sm:$0xf]
        %v4350 = vld [vmem:[%s2492 + $0x1c] sm:$0xf]
        %v4351 = vld [vmem:[%s2492 + $0x20] sm:$0xf]
        %v4352 = vld [vmem:[%s2492 + $0x24] sm:$0xf]
        %v4353 = vld [vmem:[%s2492 + $0x28] sm:$0xf]
        %v4354 = vld [vmem:[%s2492 + $0x2c] sm:$0xf]
        %v4355 = vld [vmem:[%s2492 + $0x30] sm:$0xf]
        %v4356 = vld [vmem:[%s2492 + $0x34] sm:$0xf]
        %v4357 = vld [vmem:[%s2492 + $0x38] sm:$0xf]
        %v4358 = vld [vmem:[%s2492 + $0x3c] sm:$0xf]
        %v4367 = vunpack.c.l.b16 %v4208
        %v4368 = vunpack.c.l.b16 %v4210
        %v4369 = vunpack.c.l.b16 %v4212
        %v4370 = vunpack.c.l.b16 %v4214
        %v4371 = vunpack.c.l.b16 %v4216
        %v4372 = vunpack.c.l.b16 %v4218
        %v4373 = vunpack.c.l.b16 %v4220
        %v4374 = vunpack.c.l.b16 %v4222
        %v4375 = vpack.c.b16 %v4368, %v4367
        %v4376 = vpack.c.b16 %v4370, %v4369
        %v4377 = vpack.c.b16 %v4372, %v4371
        %v4378 = vpack.c.b16 %v4374, %v4373
        %v4399 = vunpack.c.l.b16 %v4343
        %v4400 = vunpack.c.l.b16 %v4344
        %v4401 = vunpack.c.l.b16 %v4345
        %v4402 = vunpack.c.l.b16 %v4346
        %v4403 = vunpack.c.l.b16 %v4347
        %v4404 = vunpack.c.l.b16 %v4348
        %v4405 = vunpack.c.l.b16 %v4349
        %v4406 = vunpack.c.l.b16 %v4350
        %v4407 = vunpack.c.l.b16 %v4351
        %v4408 = vunpack.c.l.b16 %v4352
        %v4409 = vunpack.c.l.b16 %v4353
        %v4410 = vunpack.c.l.b16 %v4354
        %v4411 = vunpack.c.l.b16 %v4355
        %v4412 = vunpack.c.l.b16 %v4356
        %v4413 = vunpack.c.l.b16 %v4357
        %v4414 = vunpack.c.l.b16 %v4358
        %v4415 = vpack.c.b16 %v4400, %v4399
        %v4416 = vpack.c.b16 %v4402, %v4401
        %v4417 = vpack.c.b16 %v4404, %v4403
        %v4418 = vpack.c.b16 %v4406, %v4405
        %v4419 = vpack.c.b16 %v4408, %v4407
        %v4420 = vpack.c.b16 %v4410, %v4409
        %v4421 = vpack.c.b16 %v4412, %v4411
        %v4422 = vpack.c.b16 %v4414, %v4413
        %4431 = vmatpush.bf16.msra.mxu0 %v4422
        %4432 = vmatpush.bf16.msra.mxu0 %v4421
        %4433 = vmatpush.bf16.msra.mxu0 %v4420
        %4434 = vmatpush.bf16.msra.mxu0 %v4419
        %4435 = vmatpush.bf16.msra.mxu0 %v4418
        %4436 = vmatpush.bf16.msra.mxu0 %v4417
        %4437 = vmatpush.bf16.msra.mxu0 %v4416
        %4438 = vmatpush.bf16.msra.mxu0 %v4415
        %4439 = vmatmul.bf16.gmra.mxu0 %v4375
        %v4440 = vpop.f32.mrf.mxu0
        %v4441 = vadd.f32 0.0, %v4440
        %v4442 = vpop.f32.mrf.mxu0
        %v4443 = vadd.f32 0.0, %v4442
        %4444 = vmatmul.bf16.gmra.mxu0 %v4376
        %v4445 = vpop.f32.mrf.mxu0
        %v4446 = vadd.f32 0.0, %v4445
        %v4447 = vpop.f32.mrf.mxu0
        %v4448 = vadd.f32 0.0, %v4447
        %4449 = vmatmul.bf16.gmra.mxu0 %v4377
        %v4450 = vpop.f32.mrf.mxu0
        %v4451 = vadd.f32 0.0, %v4450
        %v4452 = vpop.f32.mrf.mxu0
        %v4453 = vadd.f32 0.0, %v4452
        %4454 = vmatmul.bf16.gmra.mxu0 %v4378
        %v4455 = vpop.f32.mrf.mxu0
        %v4456 = vadd.f32 0.0, %v4455
        %v4457 = vpop.f32.mrf.mxu0
        %v4458 = vadd.f32 0.0, %v4457
        %4459 = vdwg.mxu0
        %v4460 = vunpack.c.l.b16 %v4235
        %v4461 = vunpack.c.l.b16 %v4248
        %v4462 = vunpack.c.l.b16 %v4261
        %v4463 = vunpack.c.l.b16 %v4274
        %v4464 = vunpack.c.l.b16 %v4287
        %v4465 = vunpack.c.l.b16 %v4300
        %v4466 = vunpack.c.l.b16 %v4313
        %v4467 = vunpack.c.l.b16 %v4326
        %v4468 = vpack.c.b16 %v4461, %v4460
        %v4469 = vpack.c.b16 %v4463, %v4462
        %v4470 = vpack.c.b16 %v4465, %v4464
        %v4471 = vpack.c.b16 %v4467, %v4466
        %v4492 = vunpack.c.l.b16 %v4327
        %v4493 = vunpack.c.l.b16 %v4328
        %v4494 = vunpack.c.l.b16 %v4329
        %v4495 = vunpack.c.l.b16 %v4330
        %v4496 = vunpack.c.l.b16 %v4331
        %v4497 = vunpack.c.l.b16 %v4332
        %v4498 = vunpack.c.l.b16 %v4333
        %v4499 = vunpack.c.l.b16 %v4334
        %v4500 = vunpack.c.l.b16 %v4335
        %v4501 = vunpack.c.l.b16 %v4336
        %v4502 = vunpack.c.l.b16 %v4337
        %v4503 = vunpack.c.l.b16 %v4338
        %v4504 = vunpack.c.l.b16 %v4339
        %v4505 = vunpack.c.l.b16 %v4340
        %v4506 = vunpack.c.l.b16 %v4341
        %v4507 = vunpack.c.l.b16 %v4342
        %v4508 = vpack.c.b16 %v4493, %v4492
        %v4509 = vpack.c.b16 %v4495, %v4494
        %v4510 = vpack.c.b16 %v4497, %v4496
        %v4511 = vpack.c.b16 %v4499, %v4498
        %v4512 = vpack.c.b16 %v4501, %v4500
        %v4513 = vpack.c.b16 %v4503, %v4502
        %v4514 = vpack.c.b16 %v4505, %v4504
        %v4515 = vpack.c.b16 %v4507, %v4506
        %4524 = vmatpush.bf16.msra.mxu0 %v4515
        %4525 = vmatpush.bf16.msra.mxu0 %v4514
        %4526 = vmatpush.bf16.msra.mxu0 %v4513
        %4527 = vmatpush.bf16.msra.mxu0 %v4512
        %4528 = vmatpush.bf16.msra.mxu0 %v4511
        %4529 = vmatpush.bf16.msra.mxu0 %v4510
        %4530 = vmatpush.bf16.msra.mxu0 %v4509
        %4531 = vmatpush.bf16.msra.mxu0 %v4508
        %4532 = vmatmul.bf16.gmra.mxu0 %v4468
        %v4533 = vpop.f32.mrf.mxu0
        %v4534 = vadd.f32 %v4441, %v4533
        %v4535 = vpop.f32.mrf.mxu0
        %v4536 = vadd.f32 %v4443, %v4535
        %4537 = vmatmul.bf16.gmra.mxu0 %v4469
        %v4538 = vpop.f32.mrf.mxu0
        %v4539 = vadd.f32 %v4446, %v4538
        %v4540 = vpop.f32.mrf.mxu0
        %v4541 = vadd.f32 %v4448, %v4540
        %4542 = vmatmul.bf16.gmra.mxu0 %v4470
        %v4543 = vpop.f32.mrf.mxu0
        %v4544 = vadd.f32 %v4451, %v4543
        %v4545 = vpop.f32.mrf.mxu0
        %v4546 = vadd.f32 %v4453, %v4545
        %4547 = vmatmul.bf16.gmra.mxu0 %v4471
        %v4548 = vpop.f32.mrf.mxu0
        %v4549 = vadd.f32 %v4456, %v4548
        %v4550 = vpop.f32.mrf.mxu0
        %v4551 = vadd.f32 %v4458, %v4550
        %4552 = vdwg.mxu0
        %v4553 = vld [vmem:[#allocation4 + $0x4] sm:$0xf]
        %v4554 = vld [vmem:[#allocation4 + $0x8] sm:$0x1]
        %v4555 = vld [vmem:[#allocation4 + $0x10] sm:$0xf]
        %v4556 = vld [vmem:[#allocation4 + $0x14] sm:$0x1]
        %v4557 = vld [vmem:[#allocation4 + $0x1c] sm:$0xf]
        %v4558 = vld [vmem:[#allocation4 + $0x20] sm:$0x1]
        %v4559 = vld [vmem:[#allocation4 + $0x28] sm:$0xf]
        %v4560 = vld [vmem:[#allocation4 + $0x2c] sm:$0x1]
        %v4561 = vld [vmem:[#allocation4 + $0x34] sm:$0xf]
        %v4562 = vld [vmem:[#allocation4 + $0x38] sm:$0x1]
        %v4563 = vld [vmem:[#allocation4 + $0x40] sm:$0xf]
        %v4564 = vld [vmem:[#allocation4 + $0x44] sm:$0x1]
        %v4565 = vld [vmem:[#allocation4 + $0x4c] sm:$0xf]
        %v4566 = vld [vmem:[#allocation4 + $0x50] sm:$0x1]
        %v4567 = vld [vmem:[#allocation4 + $0x58] sm:$0xf]
        %v4568 = vld [vmem:[#allocation4 + $0x5c] sm:$0x1]
        %v4570 = vshrl.u32 %v4553, 16
        %v4572 = vrot.slane %v4570, 4
        %v4573 = vshll.u32 %v4553, 16
        %v4575 = vrot.slane %v4573, 5
        %v4576 = vor.u32 %v4572, %v4575
        %v4577 = vrot.slane %v4576, 4
        %v4579 = vshll.u32 %v4554, 16
        %v4581 = vrot.slane %v4579, 5
        %v4582 = vsel %vm867, %v4577, %v4581
        %v4584 = vshrl.u32 %v4555, 16
        %v4586 = vrot.slane %v4584, 4
        %v4587 = vshll.u32 %v4555, 16
        %v4589 = vrot.slane %v4587, 5
        %v4590 = vor.u32 %v4586, %v4589
        %v4591 = vrot.slane %v4590, 4
        %v4593 = vshll.u32 %v4556, 16
        %v4595 = vrot.slane %v4593, 5
        %v4596 = vsel %vm867, %v4591, %v4595
        %v4598 = vshrl.u32 %v4557, 16
        %v4600 = vrot.slane %v4598, 4
        %v4601 = vshll.u32 %v4557, 16
        %v4603 = vrot.slane %v4601, 5
        %v4604 = vor.u32 %v4600, %v4603
        %v4605 = vrot.slane %v4604, 4
        %v4607 = vshll.u32 %v4558, 16
        %v4609 = vrot.slane %v4607, 5
        %v4610 = vsel %vm867, %v4605, %v4609
        %v4612 = vshrl.u32 %v4559, 16
        %v4614 = vrot.slane %v4612, 4
        %v4615 = vshll.u32 %v4559, 16
        %v4617 = vrot.slane %v4615, 5
        %v4618 = vor.u32 %v4614, %v4617
        %v4619 = vrot.slane %v4618, 4
        %v4621 = vshll.u32 %v4560, 16
        %v4623 = vrot.slane %v4621, 5
        %v4624 = vsel %vm867, %v4619, %v4623
        %v4626 = vshrl.u32 %v4561, 16
        %v4628 = vrot.slane %v4626, 4
        %v4629 = vshll.u32 %v4561, 16
        %v4631 = vrot.slane %v4629, 5
        %v4632 = vor.u32 %v4628, %v4631
        %v4633 = vrot.slane %v4632, 4
        %v4635 = vshll.u32 %v4562, 16
        %v4637 = vrot.slane %v4635, 5
        %v4638 = vsel %vm867, %v4633, %v4637
        %v4640 = vshrl.u32 %v4563, 16
        %v4642 = vrot.slane %v4640, 4
        %v4643 = vshll.u32 %v4563, 16
        %v4645 = vrot.slane %v4643, 5
        %v4646 = vor.u32 %v4642, %v4645
        %v4647 = vrot.slane %v4646, 4
        %v4649 = vshll.u32 %v4564, 16
        %v4651 = vrot.slane %v4649, 5
        %v4652 = vsel %vm867, %v4647, %v4651
        %v4654 = vshrl.u32 %v4565, 16
        %v4656 = vrot.slane %v4654, 4
        %v4657 = vshll.u32 %v4565, 16
        %v4659 = vrot.slane %v4657, 5
        %v4660 = vor.u32 %v4656, %v4659
        %v4661 = vrot.slane %v4660, 4
        %v4663 = vshll.u32 %v4566, 16
        %v4665 = vrot.slane %v4663, 5
        %v4666 = vsel %vm867, %v4661, %v4665
        %v4668 = vshrl.u32 %v4567, 16
        %v4670 = vrot.slane %v4668, 4
        %v4671 = vshll.u32 %v4567, 16
        %v4673 = vrot.slane %v4671, 5
        %v4674 = vor.u32 %v4670, %v4673
        %v4675 = vrot.slane %v4674, 4
        %v4677 = vshll.u32 %v4568, 16
        %v4679 = vrot.slane %v4677, 5
        %v4680 = vsel %vm867, %v4675, %v4679
        %v4681 = vld [vmem:[%s2831] sm:$0xf]
        %v4682 = vld [vmem:[%s2831 + $0x4] sm:$0xf]
        %v4683 = vld [vmem:[%s2831 + $0x8] sm:$0xf]
        %v4684 = vld [vmem:[%s2831 + $0xc] sm:$0xf]
        %v4685 = vld [vmem:[%s2831 + $0x10] sm:$0xf]
        %v4686 = vld [vmem:[%s2831 + $0x14] sm:$0xf]
        %v4687 = vld [vmem:[%s2831 + $0x18] sm:$0xf]
        %v4688 = vld [vmem:[%s2831 + $0x1c] sm:$0xf]
        %v4689 = vld [vmem:[%s2831 + $0x20] sm:$0xf]
        %v4690 = vld [vmem:[%s2831 + $0x24] sm:$0xf]
        %v4691 = vld [vmem:[%s2831 + $0x28] sm:$0xf]
        %v4692 = vld [vmem:[%s2831 + $0x2c] sm:$0xf]
        %v4693 = vld [vmem:[%s2831 + $0x30] sm:$0xf]
        %v4694 = vld [vmem:[%s2831 + $0x34] sm:$0xf]
        %v4695 = vld [vmem:[%s2831 + $0x38] sm:$0xf]
        %v4696 = vld [vmem:[%s2831 + $0x3c] sm:$0xf]
        %v4697 = vunpack.c.l.b16 %v4582
        %v4698 = vunpack.c.l.b16 %v4596
        %v4699 = vunpack.c.l.b16 %v4610
        %v4700 = vunpack.c.l.b16 %v4624
        %v4701 = vunpack.c.l.b16 %v4638
        %v4702 = vunpack.c.l.b16 %v4652
        %v4703 = vunpack.c.l.b16 %v4666
        %v4704 = vunpack.c.l.b16 %v4680
        %v4705 = vpack.c.b16 %v4698, %v4697
        %v4706 = vpack.c.b16 %v4700, %v4699
        %v4707 = vpack.c.b16 %v4702, %v4701
        %v4708 = vpack.c.b16 %v4704, %v4703
        %v4729 = vunpack.c.l.b16 %v4681
        %v4730 = vunpack.c.l.b16 %v4682
        %v4731 = vunpack.c.l.b16 %v4683
        %v4732 = vunpack.c.l.b16 %v4684
        %v4733 = vunpack.c.l.b16 %v4685
        %v4734 = vunpack.c.l.b16 %v4686
        %v4735 = vunpack.c.l.b16 %v4687
        %v4736 = vunpack.c.l.b16 %v4688
        %v4737 = vunpack.c.l.b16 %v4689
        %v4738 = vunpack.c.l.b16 %v4690
        %v4739 = vunpack.c.l.b16 %v4691
        %v4740 = vunpack.c.l.b16 %v4692
        %v4741 = vunpack.c.l.b16 %v4693
        %v4742 = vunpack.c.l.b16 %v4694
        %v4743 = vunpack.c.l.b16 %v4695
        %v4744 = vunpack.c.l.b16 %v4696
        %v4745 = vpack.c.b16 %v4730, %v4729
        %v4746 = vpack.c.b16 %v4732, %v4731
        %v4747 = vpack.c.b16 %v4734, %v4733
        %v4748 = vpack.c.b16 %v4736, %v4735
        %v4749 = vpack.c.b16 %v4738, %v4737
        %v4750 = vpack.c.b16 %v4740, %v4739
        %v4751 = vpack.c.b16 %v4742, %v4741
        %v4752 = vpack.c.b16 %v4744, %v4743
        %4761 = vmatpush.bf16.msra.mxu0 %v4752
        %4762 = vmatpush.bf16.msra.mxu0 %v4751
        %4763 = vmatpush.bf16.msra.mxu0 %v4750
        %4764 = vmatpush.bf16.msra.mxu0 %v4749
        %4765 = vmatpush.bf16.msra.mxu0 %v4748
        %4766 = vmatpush.bf16.msra.mxu0 %v4747
        %4767 = vmatpush.bf16.msra.mxu0 %v4746
        %4768 = vmatpush.bf16.msra.mxu0 %v4745
        %4769 = vmatmul.bf16.gmra.mxu0 %v4705
        %v4770 = vpop.f32.mrf.mxu0
        %v4771 = vadd.f32 0.0, %v4770
        %v4772 = vpop.f32.mrf.mxu0
        %v4773 = vadd.f32 0.0, %v4772
        %4774 = vmatmul.bf16.gmra.mxu0 %v4706
        %v4775 = vpop.f32.mrf.mxu0
        %v4776 = vadd.f32 0.0, %v4775
        %v4777 = vpop.f32.mrf.mxu0
        %v4778 = vadd.f32 0.0, %v4777
        %4779 = vmatmul.bf16.gmra.mxu0 %v4707
        %v4780 = vpop.f32.mrf.mxu0
        %v4781 = vadd.f32 0.0, %v4780
        %v4782 = vpop.f32.mrf.mxu0
        %v4783 = vadd.f32 0.0, %v4782
        %4784 = vmatmul.bf16.gmra.mxu0 %v4708
        %v4785 = vpop.f32.mrf.mxu0
        %v4786 = vadd.f32 0.0, %v4785
        %v4787 = vpop.f32.mrf.mxu0
        %v4788 = vadd.f32 0.0, %v4787
        %4789 = vdwg.mxu0
        %v4790 = vadd.f32 %v4534, %v4771
        %v4791 = vadd.f32 %v4536, %v4773
        %v4792 = vadd.f32 %v4539, %v4776
        %v4793 = vadd.f32 %v4541, %v4778
        %v4794 = vadd.f32 %v4544, %v4781
        %v4795 = vadd.f32 %v4546, %v4783
        %v4796 = vadd.f32 %v4549, %v4786
        %v4797 = vadd.f32 %v4551, %v4788
        %v4798 = vld [vmem:[%s4197] sm:$0x8]
        %v4799 = vld [vmem:[%s4197 + $0x4] sm:$0xf]
        %v4800 = vld [vmem:[%s4197 + $0xc] sm:$0x8]
        %v4801 = vld [vmem:[%s4197 + $0x10] sm:$0xf]
        %v4802 = vld [vmem:[%s4197 + $0x18] sm:$0x8]
        %v4803 = vld [vmem:[%s4197 + $0x1c] sm:$0xf]
        %v4804 = vld [vmem:[%s4197 + $0x24] sm:$0x8]
        %v4805 = vld [vmem:[%s4197 + $0x28] sm:$0xf]
        %v4806 = vld [vmem:[%s4197 + $0x30] sm:$0x8]
        %v4807 = vld [vmem:[%s4197 + $0x34] sm:$0xf]
        %v4808 = vld [vmem:[%s4197 + $0x3c] sm:$0x8]
        %v4809 = vld [vmem:[%s4197 + $0x40] sm:$0xf]
        %v4810 = vld [vmem:[%s4197 + $0x48] sm:$0x8]
        %v4811 = vld [vmem:[%s4197 + $0x4c] sm:$0xf]
        %v4812 = vld [vmem:[%s4197 + $0x54] sm:$0x8]
        %v4813 = vld [vmem:[%s4197 + $0x58] sm:$0xf]
        %v4815 = vshrl.u32 %v4798, 16
        %v4817 = vrot.slane %v4815, 7
        %v4818 = vrot.slane %v4817, 4
        %v4820 = vshrl.u32 %v4799, 16
        %v4822 = vrot.slane %v4820, 7
        %v4823 = vshll.u32 %v4799, 16
        %v4825 = vor.u32 %v4822, %v4823
        %v4826 = vsel %vm517, %v4818, %v4825
        %v4828 = vshrl.u32 %v4800, 16
        %v4830 = vrot.slane %v4828, 7
        %v4831 = vrot.slane %v4830, 4
        %v4833 = vshrl.u32 %v4801, 16
        %v4835 = vrot.slane %v4833, 7
        %v4836 = vshll.u32 %v4801, 16
        %v4838 = vor.u32 %v4835, %v4836
        %v4839 = vsel %vm517, %v4831, %v4838
        %v4841 = vshrl.u32 %v4802, 16
        %v4843 = vrot.slane %v4841, 7
        %v4844 = vrot.slane %v4843, 4
        %v4846 = vshrl.u32 %v4803, 16
        %v4848 = vrot.slane %v4846, 7
        %v4849 = vshll.u32 %v4803, 16
        %v4851 = vor.u32 %v4848, %v4849
        %v4852 = vsel %vm517, %v4844, %v4851
        %v4854 = vshrl.u32 %v4804, 16
        %v4856 = vrot.slane %v4854, 7
        %v4857 = vrot.slane %v4856, 4
        %v4859 = vshrl.u32 %v4805, 16
        %v4861 = vrot.slane %v4859, 7
        %v4862 = vshll.u32 %v4805, 16
        %v4864 = vor.u32 %v4861, %v4862
        %v4865 = vsel %vm517, %v4857, %v4864
        %v4867 = vshrl.u32 %v4806, 16
        %v4869 = vrot.slane %v4867, 7
        %v4870 = vrot.slane %v4869, 4
        %v4872 = vshrl.u32 %v4807, 16
        %v4874 = vrot.slane %v4872, 7
        %v4875 = vshll.u32 %v4807, 16
        %v4877 = vor.u32 %v4874, %v4875
        %v4878 = vsel %vm517, %v4870, %v4877
        %v4880 = vshrl.u32 %v4808, 16
        %v4882 = vrot.slane %v4880, 7
        %v4883 = vrot.slane %v4882, 4
        %v4885 = vshrl.u32 %v4809, 16
        %v4887 = vrot.slane %v4885, 7
        %v4888 = vshll.u32 %v4809, 16
        %v4890 = vor.u32 %v4887, %v4888
        %v4891 = vsel %vm517, %v4883, %v4890
        %v4893 = vshrl.u32 %v4810, 16
        %v4895 = vrot.slane %v4893, 7
        %v4896 = vrot.slane %v4895, 4
        %v4898 = vshrl.u32 %v4811, 16
        %v4900 = vrot.slane %v4898, 7
        %v4901 = vshll.u32 %v4811, 16
        %v4903 = vor.u32 %v4900, %v4901
        %v4904 = vsel %vm517, %v4896, %v4903
        %v4906 = vshrl.u32 %v4812, 16
        %v4908 = vrot.slane %v4906, 7
        %v4909 = vrot.slane %v4908, 4
        %v4911 = vshrl.u32 %v4813, 16
        %v4913 = vrot.slane %v4911, 7
        %v4914 = vshll.u32 %v4813, 16
        %v4916 = vor.u32 %v4913, %v4914
        %v4917 = vsel %vm517, %v4909, %v4916
        %v4918 = vld [vmem:[%s3069] sm:$0xf]
        %v4919 = vld [vmem:[%s3069 + $0x4] sm:$0xf]
        %v4920 = vld [vmem:[%s3069 + $0x8] sm:$0xf]
        %v4921 = vld [vmem:[%s3069 + $0xc] sm:$0xf]
        %v4922 = vld [vmem:[%s3069 + $0x10] sm:$0xf]
        %v4923 = vld [vmem:[%s3069 + $0x14] sm:$0xf]
        %v4924 = vld [vmem:[%s3069 + $0x18] sm:$0xf]
        %v4925 = vld [vmem:[%s3069 + $0x1c] sm:$0xf]
        %v4926 = vld [vmem:[%s3069 + $0x20] sm:$0xf]
        %v4927 = vld [vmem:[%s3069 + $0x24] sm:$0xf]
        %v4928 = vld [vmem:[%s3069 + $0x28] sm:$0xf]
        %v4929 = vld [vmem:[%s3069 + $0x2c] sm:$0xf]
        %v4930 = vld [vmem:[%s3069 + $0x30] sm:$0xf]
        %v4931 = vld [vmem:[%s3069 + $0x34] sm:$0xf]
        %v4932 = vld [vmem:[%s3069 + $0x38] sm:$0xf]
        %v4933 = vld [vmem:[%s3069 + $0x3c] sm:$0xf]
        %v4934 = vunpack.c.l.b16 %v4826
        %v4935 = vunpack.c.l.b16 %v4839
        %v4936 = vunpack.c.l.b16 %v4852
        %v4937 = vunpack.c.l.b16 %v4865
        %v4938 = vunpack.c.l.b16 %v4878
        %v4939 = vunpack.c.l.b16 %v4891
        %v4940 = vunpack.c.l.b16 %v4904
        %v4941 = vunpack.c.l.b16 %v4917
        %v4942 = vpack.c.b16 %v4935, %v4934
        %v4943 = vpack.c.b16 %v4937, %v4936
        %v4944 = vpack.c.b16 %v4939, %v4938
        %v4945 = vpack.c.b16 %v4941, %v4940
        %v4966 = vunpack.c.l.b16 %v4918
        %v4967 = vunpack.c.l.b16 %v4919
        %v4968 = vunpack.c.l.b16 %v4920
        %v4969 = vunpack.c.l.b16 %v4921
        %v4970 = vunpack.c.l.b16 %v4922
        %v4971 = vunpack.c.l.b16 %v4923
        %v4972 = vunpack.c.l.b16 %v4924
        %v4973 = vunpack.c.l.b16 %v4925
        %v4974 = vunpack.c.l.b16 %v4926
        %v4975 = vunpack.c.l.b16 %v4927
        %v4976 = vunpack.c.l.b16 %v4928
        %v4977 = vunpack.c.l.b16 %v4929
        %v4978 = vunpack.c.l.b16 %v4930
        %v4979 = vunpack.c.l.b16 %v4931
        %v4980 = vunpack.c.l.b16 %v4932
        %v4981 = vunpack.c.l.b16 %v4933
        %v4982 = vpack.c.b16 %v4967, %v4966
        %v4983 = vpack.c.b16 %v4969, %v4968
        %v4984 = vpack.c.b16 %v4971, %v4970
        %v4985 = vpack.c.b16 %v4973, %v4972
        %v4986 = vpack.c.b16 %v4975, %v4974
        %v4987 = vpack.c.b16 %v4977, %v4976
        %v4988 = vpack.c.b16 %v4979, %v4978
        %v4989 = vpack.c.b16 %v4981, %v4980
        %4998 = vmatpush.bf16.msra.mxu0 %v4989
        %4999 = vmatpush.bf16.msra.mxu0 %v4988
        %5000 = vmatpush.bf16.msra.mxu0 %v4987
        %5001 = vmatpush.bf16.msra.mxu0 %v4986
        %5002 = vmatpush.bf16.msra.mxu0 %v4985
        %5003 = vmatpush.bf16.msra.mxu0 %v4984
        %5004 = vmatpush.bf16.msra.mxu0 %v4983
        %5005 = vmatpush.bf16.msra.mxu0 %v4982
        %5006 = vmatmul.bf16.gmra.mxu0 %v4942
        %v5007 = vpop.f32.mrf.mxu0
        %v5008 = vadd.f32 0.0, %v5007
        %v5009 = vpop.f32.mrf.mxu0
        %v5010 = vadd.f32 0.0, %v5009
        %5011 = vmatmul.bf16.gmra.mxu0 %v4943
        %v5012 = vpop.f32.mrf.mxu0
        %v5013 = vadd.f32 0.0, %v5012
        %v5014 = vpop.f32.mrf.mxu0
        %v5015 = vadd.f32 0.0, %v5014
        %5016 = vmatmul.bf16.gmra.mxu0 %v4944
        %v5017 = vpop.f32.mrf.mxu0
        %v5018 = vadd.f32 0.0, %v5017
        %v5019 = vpop.f32.mrf.mxu0
        %v5020 = vadd.f32 0.0, %v5019
        %5021 = vmatmul.bf16.gmra.mxu0 %v4945
        %v5022 = vpop.f32.mrf.mxu0
        %v5023 = vadd.f32 0.0, %v5022
        %v5024 = vpop.f32.mrf.mxu0
        %v5025 = vadd.f32 0.0, %v5024
        %5026 = vdwg.mxu0
        %v5027 = vadd.f32 %v4790, %v5008
        %v5028 = vadd.f32 %v4791, %v5010
        %v5029 = vadd.f32 %v4792, %v5013
        %v5030 = vadd.f32 %v4793, %v5015
        %v5031 = vadd.f32 %v4794, %v5018
        %v5032 = vadd.f32 %v4795, %v5020
        %v5033 = vadd.f32 %v4796, %v5023
        %v5034 = vadd.f32 %v4797, %v5025
        %v5035 = vld [vmem:[%s3187] sm:$0xf]
        %v5036 = vld [vmem:[%s3187 + $0x4] sm:$0xf]
        %v5037 = vld [vmem:[%s3187 + $0x8] sm:$0xf]
        %v5038 = vld [vmem:[%s3187 + $0xc] sm:$0xf]
        %v5039 = vld [vmem:[%s3187 + $0x10] sm:$0xf]
        %v5040 = vld [vmem:[%s3187 + $0x14] sm:$0xf]
        %v5041 = vld [vmem:[%s3187 + $0x18] sm:$0xf]
        %v5042 = vld [vmem:[%s3187 + $0x1c] sm:$0xf]
        %v5043 = vld [vmem:[%s3187 + $0x20] sm:$0xf]
        %v5044 = vld [vmem:[%s3187 + $0x24] sm:$0xf]
        %v5045 = vld [vmem:[%s3187 + $0x28] sm:$0xf]
        %v5046 = vld [vmem:[%s3187 + $0x2c] sm:$0xf]
        %v5047 = vld [vmem:[%s3187 + $0x30] sm:$0xf]
        %v5048 = vld [vmem:[%s3187 + $0x34] sm:$0xf]
        %v5049 = vld [vmem:[%s3187 + $0x38] sm:$0xf]
        %v5050 = vld [vmem:[%s3187 + $0x3c] sm:$0xf]
        %v5059 = vunpack.c.l.b16 %v4799
        %v5060 = vunpack.c.l.b16 %v4801
        %v5061 = vunpack.c.l.b16 %v4803
        %v5062 = vunpack.c.l.b16 %v4805
        %v5063 = vunpack.c.l.b16 %v4807
        %v5064 = vunpack.c.l.b16 %v4809
        %v5065 = vunpack.c.l.b16 %v4811
        %v5066 = vunpack.c.l.b16 %v4813
        %v5067 = vpack.c.b16 %v5060, %v5059
        %v5068 = vpack.c.b16 %v5062, %v5061
        %v5069 = vpack.c.b16 %v5064, %v5063
        %v5070 = vpack.c.b16 %v5066, %v5065
        %v5091 = vunpack.c.l.b16 %v5035
        %v5092 = vunpack.c.l.b16 %v5036
        %v5093 = vunpack.c.l.b16 %v5037
        %v5094 = vunpack.c.l.b16 %v5038
        %v5095 = vunpack.c.l.b16 %v5039
        %v5096 = vunpack.c.l.b16 %v5040
        %v5097 = vunpack.c.l.b16 %v5041
        %v5098 = vunpack.c.l.b16 %v5042
        %v5099 = vunpack.c.l.b16 %v5043
        %v5100 = vunpack.c.l.b16 %v5044
        %v5101 = vunpack.c.l.b16 %v5045
        %v5102 = vunpack.c.l.b16 %v5046
        %v5103 = vunpack.c.l.b16 %v5047
        %v5104 = vunpack.c.l.b16 %v5048
        %v5105 = vunpack.c.l.b16 %v5049
        %v5106 = vunpack.c.l.b16 %v5050
        %v5107 = vpack.c.b16 %v5092, %v5091
        %v5108 = vpack.c.b16 %v5094, %v5093
        %v5109 = vpack.c.b16 %v5096, %v5095
        %v5110 = vpack.c.b16 %v5098, %v5097
        %v5111 = vpack.c.b16 %v5100, %v5099
        %v5112 = vpack.c.b16 %v5102, %v5101
        %v5113 = vpack.c.b16 %v5104, %v5103
        %v5114 = vpack.c.b16 %v5106, %v5105
        %5123 = vmatpush.bf16.msra.mxu0 %v5114
        %5124 = vmatpush.bf16.msra.mxu0 %v5113
        %5125 = vmatpush.bf16.msra.mxu0 %v5112
        %5126 = vmatpush.bf16.msra.mxu0 %v5111
        %5127 = vmatpush.bf16.msra.mxu0 %v5110
        %5128 = vmatpush.bf16.msra.mxu0 %v5109
        %5129 = vmatpush.bf16.msra.mxu0 %v5108
        %5130 = vmatpush.bf16.msra.mxu0 %v5107
        %5131 = vmatmul.bf16.gmra.mxu0 %v5067
        %v5132 = vpop.f32.mrf.mxu0
        %v5133 = vadd.f32 0.0, %v5132
        %v5134 = vpop.f32.mrf.mxu0
        %v5135 = vadd.f32 0.0, %v5134
        %5136 = vmatmul.bf16.gmra.mxu0 %v5068
        %v5137 = vpop.f32.mrf.mxu0
        %v5138 = vadd.f32 0.0, %v5137
        %v5139 = vpop.f32.mrf.mxu0
        %v5140 = vadd.f32 0.0, %v5139
        %5141 = vmatmul.bf16.gmra.mxu0 %v5069
        %v5142 = vpop.f32.mrf.mxu0
        %v5143 = vadd.f32 0.0, %v5142
        %v5144 = vpop.f32.mrf.mxu0
        %v5145 = vadd.f32 0.0, %v5144
        %5146 = vmatmul.bf16.gmra.mxu0 %v5070
        %v5147 = vpop.f32.mrf.mxu0
        %v5148 = vadd.f32 0.0, %v5147
        %v5149 = vpop.f32.mrf.mxu0
        %v5150 = vadd.f32 0.0, %v5149
        %5151 = vdwg.mxu0
        %v5152 = vadd.f32 %v5027, %v5133
        %v5153 = vadd.f32 %v5028, %v5135
        %v5154 = vadd.f32 %v5029, %v5138
        %v5155 = vadd.f32 %v5030, %v5140
        %v5156 = vadd.f32 %v5031, %v5143
        %v5157 = vadd.f32 %v5032, %v5145
        %v5158 = vadd.f32 %v5033, %v5148
        %v5159 = vadd.f32 %v5034, %v5150
        %v5160 = vld [vmem:[%s4197 + $0x4] sm:$0xf]
        %v5161 = vld [vmem:[%s4197 + $0x8] sm:$0x1]
        %v5162 = vld [vmem:[%s4197 + $0x10] sm:$0xf]
        %v5163 = vld [vmem:[%s4197 + $0x14] sm:$0x1]
        %v5164 = vld [vmem:[%s4197 + $0x1c] sm:$0xf]
        %v5165 = vld [vmem:[%s4197 + $0x20] sm:$0x1]
        %v5166 = vld [vmem:[%s4197 + $0x28] sm:$0xf]
        %v5167 = vld [vmem:[%s4197 + $0x2c] sm:$0x1]
        %v5168 = vld [vmem:[%s4197 + $0x34] sm:$0xf]
        %v5169 = vld [vmem:[%s4197 + $0x38] sm:$0x1]
        %v5170 = vld [vmem:[%s4197 + $0x40] sm:$0xf]
        %v5171 = vld [vmem:[%s4197 + $0x44] sm:$0x1]
        %v5172 = vld [vmem:[%s4197 + $0x4c] sm:$0xf]
        %v5173 = vld [vmem:[%s4197 + $0x50] sm:$0x1]
        %v5174 = vld [vmem:[%s4197 + $0x58] sm:$0xf]
        %v5175 = vld [vmem:[%s4197 + $0x5c] sm:$0x1]
        %v5177 = vshrl.u32 %v5160, 16
        %v5179 = vrot.slane %v5177, 4
        %v5180 = vshll.u32 %v5160, 16
        %v5182 = vrot.slane %v5180, 5
        %v5183 = vor.u32 %v5179, %v5182
        %v5184 = vrot.slane %v5183, 4
        %v5186 = vshll.u32 %v5161, 16
        %v5188 = vrot.slane %v5186, 5
        %v5189 = vsel %vm867, %v5184, %v5188
        %v5191 = vshrl.u32 %v5162, 16
        %v5193 = vrot.slane %v5191, 4
        %v5194 = vshll.u32 %v5162, 16
        %v5196 = vrot.slane %v5194, 5
        %v5197 = vor.u32 %v5193, %v5196
        %v5198 = vrot.slane %v5197, 4
        %v5200 = vshll.u32 %v5163, 16
        %v5202 = vrot.slane %v5200, 5
        %v5203 = vsel %vm867, %v5198, %v5202
        %v5205 = vshrl.u32 %v5164, 16
        %v5207 = vrot.slane %v5205, 4
        %v5208 = vshll.u32 %v5164, 16
        %v5210 = vrot.slane %v5208, 5
        %v5211 = vor.u32 %v5207, %v5210
        %v5212 = vrot.slane %v5211, 4
        %v5214 = vshll.u32 %v5165, 16
        %v5216 = vrot.slane %v5214, 5
        %v5217 = vsel %vm867, %v5212, %v5216
        %v5219 = vshrl.u32 %v5166, 16
        %v5221 = vrot.slane %v5219, 4
        %v5222 = vshll.u32 %v5166, 16
        %v5224 = vrot.slane %v5222, 5
        %v5225 = vor.u32 %v5221, %v5224
        %v5226 = vrot.slane %v5225, 4
        %v5228 = vshll.u32 %v5167, 16
        %v5230 = vrot.slane %v5228, 5
        %v5231 = vsel %vm867, %v5226, %v5230
        %v5233 = vshrl.u32 %v5168, 16
        %v5235 = vrot.slane %v5233, 4
        %v5236 = vshll.u32 %v5168, 16
        %v5238 = vrot.slane %v5236, 5
        %v5239 = vor.u32 %v5235, %v5238
        %v5240 = vrot.slane %v5239, 4
        %v5242 = vshll.u32 %v5169, 16
        %v5244 = vrot.slane %v5242, 5
        %v5245 = vsel %vm867, %v5240, %v5244
        %v5247 = vshrl.u32 %v5170, 16
        %v5249 = vrot.slane %v5247, 4
        %v5250 = vshll.u32 %v5170, 16
        %v5252 = vrot.slane %v5250, 5
        %v5253 = vor.u32 %v5249, %v5252
        %v5254 = vrot.slane %v5253, 4
        %v5256 = vshll.u32 %v5171, 16
        %v5258 = vrot.slane %v5256, 5
        %v5259 = vsel %vm867, %v5254, %v5258
        %v5261 = vshrl.u32 %v5172, 16
        %v5263 = vrot.slane %v5261, 4
        %v5264 = vshll.u32 %v5172, 16
        %v5266 = vrot.slane %v5264, 5
        %v5267 = vor.u32 %v5263, %v5266
        %v5268 = vrot.slane %v5267, 4
        %v5270 = vshll.u32 %v5173, 16
        %v5272 = vrot.slane %v5270, 5
        %v5273 = vsel %vm867, %v5268, %v5272
        %v5275 = vshrl.u32 %v5174, 16
        %v5277 = vrot.slane %v5275, 4
        %v5278 = vshll.u32 %v5174, 16
        %v5280 = vrot.slane %v5278, 5
        %v5281 = vor.u32 %v5277, %v5280
        %v5282 = vrot.slane %v5281, 4
        %v5284 = vshll.u32 %v5175, 16
        %v5286 = vrot.slane %v5284, 5
        %v5287 = vsel %vm867, %v5282, %v5286
        %v5288 = vld [vmem:[%s3441] sm:$0xf]
        %v5289 = vld [vmem:[%s3441 + $0x4] sm:$0xf]
        %v5290 = vld [vmem:[%s3441 + $0x8] sm:$0xf]
        %v5291 = vld [vmem:[%s3441 + $0xc] sm:$0xf]
        %v5292 = vld [vmem:[%s3441 + $0x10] sm:$0xf]
        %v5293 = vld [vmem:[%s3441 + $0x14] sm:$0xf]
        %v5294 = vld [vmem:[%s3441 + $0x18] sm:$0xf]
        %v5295 = vld [vmem:[%s3441 + $0x1c] sm:$0xf]
        %v5296 = vld [vmem:[%s3441 + $0x20] sm:$0xf]
        %v5297 = vld [vmem:[%s3441 + $0x24] sm:$0xf]
        %v5298 = vld [vmem:[%s3441 + $0x28] sm:$0xf]
        %v5299 = vld [vmem:[%s3441 + $0x2c] sm:$0xf]
        %v5300 = vld [vmem:[%s3441 + $0x30] sm:$0xf]
        %v5301 = vld [vmem:[%s3441 + $0x34] sm:$0xf]
        %v5302 = vld [vmem:[%s3441 + $0x38] sm:$0xf]
        %v5303 = vld [vmem:[%s3441 + $0x3c] sm:$0xf]
        %v5304 = vunpack.c.l.b16 %v5189
        %v5305 = vunpack.c.l.b16 %v5203
        %v5306 = vunpack.c.l.b16 %v5217
        %v5307 = vunpack.c.l.b16 %v5231
        %v5308 = vunpack.c.l.b16 %v5245
        %v5309 = vunpack.c.l.b16 %v5259
        %v5310 = vunpack.c.l.b16 %v5273
        %v5311 = vunpack.c.l.b16 %v5287
        %v5312 = vpack.c.b16 %v5305, %v5304
        %v5313 = vpack.c.b16 %v5307, %v5306
        %v5314 = vpack.c.b16 %v5309, %v5308
        %v5315 = vpack.c.b16 %v5311, %v5310
        %v5336 = vunpack.c.l.b16 %v5288
        %v5337 = vunpack.c.l.b16 %v5289
        %v5338 = vunpack.c.l.b16 %v5290
        %v5339 = vunpack.c.l.b16 %v5291
        %v5340 = vunpack.c.l.b16 %v5292
        %v5341 = vunpack.c.l.b16 %v5293
        %v5342 = vunpack.c.l.b16 %v5294
        %v5343 = vunpack.c.l.b16 %v5295
        %v5344 = vunpack.c.l.b16 %v5296
        %v5345 = vunpack.c.l.b16 %v5297
        %v5346 = vunpack.c.l.b16 %v5298
        %v5347 = vunpack.c.l.b16 %v5299
        %v5348 = vunpack.c.l.b16 %v5300
        %v5349 = vunpack.c.l.b16 %v5301
        %v5350 = vunpack.c.l.b16 %v5302
        %v5351 = vunpack.c.l.b16 %v5303
        %v5352 = vpack.c.b16 %v5337, %v5336
        %v5353 = vpack.c.b16 %v5339, %v5338
        %v5354 = vpack.c.b16 %v5341, %v5340
        %v5355 = vpack.c.b16 %v5343, %v5342
        %v5356 = vpack.c.b16 %v5345, %v5344
        %v5357 = vpack.c.b16 %v5347, %v5346
        %v5358 = vpack.c.b16 %v5349, %v5348
        %v5359 = vpack.c.b16 %v5351, %v5350
        %5368 = vmatpush.bf16.msra.mxu0 %v5359
        %5369 = vmatpush.bf16.msra.mxu0 %v5358
        %5370 = vmatpush.bf16.msra.mxu0 %v5357
        %5371 = vmatpush.bf16.msra.mxu0 %v5356
        %5372 = vmatpush.bf16.msra.mxu0 %v5355
        %5373 = vmatpush.bf16.msra.mxu0 %v5354
        %5374 = vmatpush.bf16.msra.mxu0 %v5353
        %5375 = vmatpush.bf16.msra.mxu0 %v5352
        %5376 = vmatmul.bf16.gmra.mxu0 %v5312
        %v5377 = vpop.f32.mrf.mxu0
        %v5378 = vadd.f32 0.0, %v5377
        %v5379 = vpop.f32.mrf.mxu0
        %v5380 = vadd.f32 0.0, %v5379
        %5381 = vmatmul.bf16.gmra.mxu0 %v5313
        %v5382 = vpop.f32.mrf.mxu0
        %v5383 = vadd.f32 0.0, %v5382
        %v5384 = vpop.f32.mrf.mxu0
        %v5385 = vadd.f32 0.0, %v5384
        %5386 = vmatmul.bf16.gmra.mxu0 %v5314
        %v5387 = vpop.f32.mrf.mxu0
        %v5388 = vadd.f32 0.0, %v5387
        %v5389 = vpop.f32.mrf.mxu0
        %v5390 = vadd.f32 0.0, %v5389
        %5391 = vmatmul.bf16.gmra.mxu0 %v5315
        %v5392 = vpop.f32.mrf.mxu0
        %v5393 = vadd.f32 0.0, %v5392
        %v5394 = vpop.f32.mrf.mxu0
        %v5395 = vadd.f32 0.0, %v5394
        %5396 = vdwg.mxu0
        %v5397 = vadd.f32 %v5152, %v5378
        %v5398 = vadd.f32 %v5153, %v5380
        %v5399 = vadd.f32 %v5154, %v5383
        %v5400 = vadd.f32 %v5155, %v5385
        %v5401 = vadd.f32 %v5156, %v5388
        %v5402 = vadd.f32 %v5157, %v5390
        %v5403 = vadd.f32 %v5158, %v5393
        %v5404 = vadd.f32 %v5159, %v5395
        %s5405 = scalar_lea.vmem [#allocation4], 24
        %v5406 = vld [vmem:[%s5405] sm:$0x8]
        %v5407 = vld [vmem:[%s5405 + $0x4] sm:$0xf]
        %v5408 = vld [vmem:[%s5405 + $0xc] sm:$0x8]
        %v5409 = vld [vmem:[%s5405 + $0x10] sm:$0xf]
        %v5410 = vld [vmem:[%s5405 + $0x18] sm:$0x8]
        %v5411 = vld [vmem:[%s5405 + $0x1c] sm:$0xf]
        %v5412 = vld [vmem:[%s5405 + $0x24] sm:$0x8]
        %v5413 = vld [vmem:[%s5405 + $0x28] sm:$0xf]
        %v5414 = vld [vmem:[%s5405 + $0x30] sm:$0x8]
        %v5415 = vld [vmem:[%s5405 + $0x34] sm:$0xf]
        %v5416 = vld [vmem:[%s5405 + $0x3c] sm:$0x8]
        %v5417 = vld [vmem:[%s5405 + $0x40] sm:$0xf]
        %v5418 = vld [vmem:[%s5405 + $0x48] sm:$0x8]
        %v5419 = vld [vmem:[%s5405 + $0x4c] sm:$0xf]
        %v5420 = vld [vmem:[%s5405 + $0x54] sm:$0x8]
        %v5421 = vld [vmem:[%s5405 + $0x58] sm:$0xf]
        %v5423 = vshrl.u32 %v5406, 16
        %v5425 = vrot.slane %v5423, 7
        %v5426 = vrot.slane %v5425, 4
        %v5428 = vshrl.u32 %v5407, 16
        %v5430 = vrot.slane %v5428, 7
        %v5431 = vshll.u32 %v5407, 16
        %v5433 = vor.u32 %v5430, %v5431
        %v5434 = vsel %vm517, %v5426, %v5433
        %v5436 = vshrl.u32 %v5408, 16
        %v5438 = vrot.slane %v5436, 7
        %v5439 = vrot.slane %v5438, 4
        %v5441 = vshrl.u32 %v5409, 16
        %v5443 = vrot.slane %v5441, 7
        %v5444 = vshll.u32 %v5409, 16
        %v5446 = vor.u32 %v5443, %v5444
        %v5447 = vsel %vm517, %v5439, %v5446
        %v5449 = vshrl.u32 %v5410, 16
        %v5451 = vrot.slane %v5449, 7
        %v5452 = vrot.slane %v5451, 4
        %v5454 = vshrl.u32 %v5411, 16
        %v5456 = vrot.slane %v5454, 7
        %v5457 = vshll.u32 %v5411, 16
        %v5459 = vor.u32 %v5456, %v5457
        %v5460 = vsel %vm517, %v5452, %v5459
        %v5462 = vshrl.u32 %v5412, 16
        %v5464 = vrot.slane %v5462, 7
        %v5465 = vrot.slane %v5464, 4
        %v5467 = vshrl.u32 %v5413, 16
        %v5469 = vrot.slane %v5467, 7
        %v5470 = vshll.u32 %v5413, 16
        %v5472 = vor.u32 %v5469, %v5470
        %v5473 = vsel %vm517, %v5465, %v5472
        %v5475 = vshrl.u32 %v5414, 16
        %v5477 = vrot.slane %v5475, 7
        %v5478 = vrot.slane %v5477, 4
        %v5480 = vshrl.u32 %v5415, 16
        %v5482 = vrot.slane %v5480, 7
        %v5483 = vshll.u32 %v5415, 16
        %v5485 = vor.u32 %v5482, %v5483
        %v5486 = vsel %vm517, %v5478, %v5485
        %v5488 = vshrl.u32 %v5416, 16
        %v5490 = vrot.slane %v5488, 7
        %v5491 = vrot.slane %v5490, 4
        %v5493 = vshrl.u32 %v5417, 16
        %v5495 = vrot.slane %v5493, 7
        %v5496 = vshll.u32 %v5417, 16
        %v5498 = vor.u32 %v5495, %v5496
        %v5499 = vsel %vm517, %v5491, %v5498
        %v5501 = vshrl.u32 %v5418, 16
        %v5503 = vrot.slane %v5501, 7
        %v5504 = vrot.slane %v5503, 4
        %v5506 = vshrl.u32 %v5419, 16
        %v5508 = vrot.slane %v5506, 7
        %v5509 = vshll.u32 %v5419, 16
        %v5511 = vor.u32 %v5508, %v5509
        %v5512 = vsel %vm517, %v5504, %v5511
        %v5514 = vshrl.u32 %v5420, 16
        %v5516 = vrot.slane %v5514, 7
        %v5517 = vrot.slane %v5516, 4
        %v5519 = vshrl.u32 %v5421, 16
        %v5521 = vrot.slane %v5519, 7
        %v5522 = vshll.u32 %v5421, 16
        %v5524 = vor.u32 %v5521, %v5522
        %v5525 = vsel %vm517, %v5517, %v5524
        %v5526 = vld [vmem:[%s3680] sm:$0xf]
        %v5527 = vld [vmem:[%s3680 + $0x4] sm:$0xf]
        %v5528 = vld [vmem:[%s3680 + $0x8] sm:$0xf]
        %v5529 = vld [vmem:[%s3680 + $0xc] sm:$0xf]
        %v5530 = vld [vmem:[%s3680 + $0x10] sm:$0xf]
        %v5531 = vld [vmem:[%s3680 + $0x14] sm:$0xf]
        %v5532 = vld [vmem:[%s3680 + $0x18] sm:$0xf]
        %v5533 = vld [vmem:[%s3680 + $0x1c] sm:$0xf]
        %v5534 = vld [vmem:[%s3680 + $0x20] sm:$0xf]
        %v5535 = vld [vmem:[%s3680 + $0x24] sm:$0xf]
        %v5536 = vld [vmem:[%s3680 + $0x28] sm:$0xf]
        %v5537 = vld [vmem:[%s3680 + $0x2c] sm:$0xf]
        %v5538 = vld [vmem:[%s3680 + $0x30] sm:$0xf]
        %v5539 = vld [vmem:[%s3680 + $0x34] sm:$0xf]
        %v5540 = vld [vmem:[%s3680 + $0x38] sm:$0xf]
        %v5541 = vld [vmem:[%s3680 + $0x3c] sm:$0xf]
        %v5542 = vunpack.c.l.b16 %v5434
        %v5543 = vunpack.c.l.b16 %v5447
        %v5544 = vunpack.c.l.b16 %v5460
        %v5545 = vunpack.c.l.b16 %v5473
        %v5546 = vunpack.c.l.b16 %v5486
        %v5547 = vunpack.c.l.b16 %v5499
        %v5548 = vunpack.c.l.b16 %v5512
        %v5549 = vunpack.c.l.b16 %v5525
        %v5550 = vpack.c.b16 %v5543, %v5542
        %v5551 = vpack.c.b16 %v5545, %v5544
        %v5552 = vpack.c.b16 %v5547, %v5546
        %v5553 = vpack.c.b16 %v5549, %v5548
        %v5574 = vunpack.c.l.b16 %v5526
        %v5575 = vunpack.c.l.b16 %v5527
        %v5576 = vunpack.c.l.b16 %v5528
        %v5577 = vunpack.c.l.b16 %v5529
        %v5578 = vunpack.c.l.b16 %v5530
        %v5579 = vunpack.c.l.b16 %v5531
        %v5580 = vunpack.c.l.b16 %v5532
        %v5581 = vunpack.c.l.b16 %v5533
        %v5582 = vunpack.c.l.b16 %v5534
        %v5583 = vunpack.c.l.b16 %v5535
        %v5584 = vunpack.c.l.b16 %v5536
        %v5585 = vunpack.c.l.b16 %v5537
        %v5586 = vunpack.c.l.b16 %v5538
        %v5587 = vunpack.c.l.b16 %v5539
        %v5588 = vunpack.c.l.b16 %v5540
        %v5589 = vunpack.c.l.b16 %v5541
        %v5590 = vpack.c.b16 %v5575, %v5574
        %v5591 = vpack.c.b16 %v5577, %v5576
        %v5592 = vpack.c.b16 %v5579, %v5578
        %v5593 = vpack.c.b16 %v5581, %v5580
        %v5594 = vpack.c.b16 %v5583, %v5582
        %v5595 = vpack.c.b16 %v5585, %v5584
        %v5596 = vpack.c.b16 %v5587, %v5586
        %v5597 = vpack.c.b16 %v5589, %v5588
        %5606 = vmatpush.bf16.msra.mxu0 %v5597
        %5607 = vmatpush.bf16.msra.mxu0 %v5596
        %5608 = vmatpush.bf16.msra.mxu0 %v5595
        %5609 = vmatpush.bf16.msra.mxu0 %v5594
        %5610 = vmatpush.bf16.msra.mxu0 %v5593
        %5611 = vmatpush.bf16.msra.mxu0 %v5592
        %5612 = vmatpush.bf16.msra.mxu0 %v5591
        %5613 = vmatpush.bf16.msra.mxu0 %v5590
        %5614 = vmatmul.bf16.gmra.mxu0 %v5550
        %v5615 = vpop.f32.mrf.mxu0
        %v5616 = vadd.f32 0.0, %v5615
        %v5617 = vpop.f32.mrf.mxu0
        %v5618 = vadd.f32 0.0, %v5617
        %5619 = vmatmul.bf16.gmra.mxu0 %v5551
        %v5620 = vpop.f32.mrf.mxu0
        %v5621 = vadd.f32 0.0, %v5620
        %v5622 = vpop.f32.mrf.mxu0
        %v5623 = vadd.f32 0.0, %v5622
        %5624 = vmatmul.bf16.gmra.mxu0 %v5552
        %v5625 = vpop.f32.mrf.mxu0
        %v5626 = vadd.f32 0.0, %v5625
        %v5627 = vpop.f32.mrf.mxu0
        %v5628 = vadd.f32 0.0, %v5627
        %5629 = vmatmul.bf16.gmra.mxu0 %v5553
        %v5630 = vpop.f32.mrf.mxu0
        %v5631 = vadd.f32 0.0, %v5630
        %v5632 = vpop.f32.mrf.mxu0
        %v5633 = vadd.f32 0.0, %v5632
        %5634 = vdwg.mxu0
        %v5635 = vadd.f32 %v5397, %v5616
        %v5636 = vadd.f32 %v5398, %v5618
        %v5637 = vadd.f32 %v5399, %v5621
        %v5638 = vadd.f32 %v5400, %v5623
        %v5639 = vadd.f32 %v5401, %v5626
        %v5640 = vadd.f32 %v5402, %v5628
        %v5641 = vadd.f32 %v5403, %v5631
        %v5642 = vadd.f32 %v5404, %v5633
        %v5643 = vld [vmem:[%s3798] sm:$0xf]
        %v5644 = vld [vmem:[%s3798 + $0x4] sm:$0xf]
        %v5645 = vld [vmem:[%s3798 + $0x8] sm:$0xf]
        %v5646 = vld [vmem:[%s3798 + $0xc] sm:$0xf]
        %v5647 = vld [vmem:[%s3798 + $0x10] sm:$0xf]
        %v5648 = vld [vmem:[%s3798 + $0x14] sm:$0xf]
        %v5649 = vld [vmem:[%s3798 + $0x18] sm:$0xf]
        %v5650 = vld [vmem:[%s3798 + $0x1c] sm:$0xf]
        %v5651 = vld [vmem:[%s3798 + $0x20] sm:$0xf]
        %v5652 = vld [vmem:[%s3798 + $0x24] sm:$0xf]
        %v5653 = vld [vmem:[%s3798 + $0x28] sm:$0xf]
        %v5654 = vld [vmem:[%s3798 + $0x2c] sm:$0xf]
        %v5655 = vld [vmem:[%s3798 + $0x30] sm:$0xf]
        %v5656 = vld [vmem:[%s3798 + $0x34] sm:$0xf]
        %v5657 = vld [vmem:[%s3798 + $0x38] sm:$0xf]
        %v5658 = vld [vmem:[%s3798 + $0x3c] sm:$0xf]
        %v5667 = vunpack.c.l.b16 %v5407
        %v5668 = vunpack.c.l.b16 %v5409
        %v5669 = vunpack.c.l.b16 %v5411
        %v5670 = vunpack.c.l.b16 %v5413
        %v5671 = vunpack.c.l.b16 %v5415
        %v5672 = vunpack.c.l.b16 %v5417
        %v5673 = vunpack.c.l.b16 %v5419
        %v5674 = vunpack.c.l.b16 %v5421
        %v5675 = vpack.c.b16 %v5668, %v5667
        %v5676 = vpack.c.b16 %v5670, %v5669
        %v5677 = vpack.c.b16 %v5672, %v5671
        %v5678 = vpack.c.b16 %v5674, %v5673
        %v5699 = vunpack.c.l.b16 %v5643
        %v5700 = vunpack.c.l.b16 %v5644
        %v5701 = vunpack.c.l.b16 %v5645
        %v5702 = vunpack.c.l.b16 %v5646
        %v5703 = vunpack.c.l.b16 %v5647
        %v5704 = vunpack.c.l.b16 %v5648
        %v5705 = vunpack.c.l.b16 %v5649
        %v5706 = vunpack.c.l.b16 %v5650
        %v5707 = vunpack.c.l.b16 %v5651
        %v5708 = vunpack.c.l.b16 %v5652
        %v5709 = vunpack.c.l.b16 %v5653
        %v5710 = vunpack.c.l.b16 %v5654
        %v5711 = vunpack.c.l.b16 %v5655
        %v5712 = vunpack.c.l.b16 %v5656
        %v5713 = vunpack.c.l.b16 %v5657
        %v5714 = vunpack.c.l.b16 %v5658
        %v5715 = vpack.c.b16 %v5700, %v5699
        %v5716 = vpack.c.b16 %v5702, %v5701
        %v5717 = vpack.c.b16 %v5704, %v5703
        %v5718 = vpack.c.b16 %v5706, %v5705
        %v5719 = vpack.c.b16 %v5708, %v5707
        %v5720 = vpack.c.b16 %v5710, %v5709
        %v5721 = vpack.c.b16 %v5712, %v5711
        %v5722 = vpack.c.b16 %v5714, %v5713
        %5731 = vmatpush.bf16.msra.mxu0 %v5722
        %5732 = vmatpush.bf16.msra.mxu0 %v5721
        %5733 = vmatpush.bf16.msra.mxu0 %v5720
        %5734 = vmatpush.bf16.msra.mxu0 %v5719
        %5735 = vmatpush.bf16.msra.mxu0 %v5718
        %5736 = vmatpush.bf16.msra.mxu0 %v5717
        %5737 = vmatpush.bf16.msra.mxu0 %v5716
        %5738 = vmatpush.bf16.msra.mxu0 %v5715
        %5739 = vmatmul.bf16.gmra.mxu0 %v5675
        %v5740 = vpop.f32.mrf.mxu0
        %v5741 = vadd.f32 0.0, %v5740
        %v5742 = vpop.f32.mrf.mxu0
        %v5743 = vadd.f32 0.0, %v5742
        %5744 = vmatmul.bf16.gmra.mxu0 %v5676
        %v5745 = vpop.f32.mrf.mxu0
        %v5746 = vadd.f32 0.0, %v5745
        %v5747 = vpop.f32.mrf.mxu0
        %v5748 = vadd.f32 0.0, %v5747
        %5749 = vmatmul.bf16.gmra.mxu0 %v5677
        %v5750 = vpop.f32.mrf.mxu0
        %v5751 = vadd.f32 0.0, %v5750
        %v5752 = vpop.f32.mrf.mxu0
        %v5753 = vadd.f32 0.0, %v5752
        %5754 = vmatmul.bf16.gmra.mxu0 %v5678
        %v5755 = vpop.f32.mrf.mxu0
        %v5756 = vadd.f32 0.0, %v5755
        %v5757 = vpop.f32.mrf.mxu0
        %v5758 = vadd.f32 0.0, %v5757
        %5759 = vdwg.mxu0
        %v5760 = vadd.f32 %v5635, %v5741
        %v5761 = vadd.f32 %v5636, %v5743
        %v5762 = vadd.f32 %v5637, %v5746
        %v5763 = vadd.f32 %v5638, %v5748
        %v5764 = vadd.f32 %v5639, %v5751
        %v5765 = vadd.f32 %v5640, %v5753
        %v5766 = vadd.f32 %v5641, %v5756
        %v5767 = vadd.f32 %v5642, %v5758
        %v5768 = vld [vmem:[%s5405 + $0x4] sm:$0xf]
        %v5769 = vld [vmem:[%s5405 + $0x8] sm:$0x1]
        %v5770 = vld [vmem:[%s5405 + $0x10] sm:$0xf]
        %v5771 = vld [vmem:[%s5405 + $0x14] sm:$0x1]
        %v5772 = vld [vmem:[%s5405 + $0x1c] sm:$0xf]
        %v5773 = vld [vmem:[%s5405 + $0x20] sm:$0x1]
        %v5774 = vld [vmem:[%s5405 + $0x28] sm:$0xf]
        %v5775 = vld [vmem:[%s5405 + $0x2c] sm:$0x1]
        %v5776 = vld [vmem:[%s5405 + $0x34] sm:$0xf]
        %v5777 = vld [vmem:[%s5405 + $0x38] sm:$0x1]
        %v5778 = vld [vmem:[%s5405 + $0x40] sm:$0xf]
        %v5779 = vld [vmem:[%s5405 + $0x44] sm:$0x1]
        %v5780 = vld [vmem:[%s5405 + $0x4c] sm:$0xf]
        %v5781 = vld [vmem:[%s5405 + $0x50] sm:$0x1]
        %v5782 = vld [vmem:[%s5405 + $0x58] sm:$0xf]
        %v5783 = vld [vmem:[%s5405 + $0x5c] sm:$0x1]
        %v5785 = vshrl.u32 %v5768, 16
        %v5787 = vrot.slane %v5785, 4
        %v5788 = vshll.u32 %v5768, 16
        %v5790 = vrot.slane %v5788, 5
        %v5791 = vor.u32 %v5787, %v5790
        %v5792 = vrot.slane %v5791, 4
        %v5794 = vshll.u32 %v5769, 16
        %v5796 = vrot.slane %v5794, 5
        %v5797 = vsel %vm867, %v5792, %v5796
        %v5799 = vshrl.u32 %v5770, 16
        %v5801 = vrot.slane %v5799, 4
        %v5802 = vshll.u32 %v5770, 16
        %v5804 = vrot.slane %v5802, 5
        %v5805 = vor.u32 %v5801, %v5804
        %v5806 = vrot.slane %v5805, 4
        %v5808 = vshll.u32 %v5771, 16
        %v5810 = vrot.slane %v5808, 5
        %v5811 = vsel %vm867, %v5806, %v5810
        %v5813 = vshrl.u32 %v5772, 16
        %v5815 = vrot.slane %v5813, 4
        %v5816 = vshll.u32 %v5772, 16
        %v5818 = vrot.slane %v5816, 5
        %v5819 = vor.u32 %v5815, %v5818
        %v5820 = vrot.slane %v5819, 4
        %v5822 = vshll.u32 %v5773, 16
        %v5824 = vrot.slane %v5822, 5
        %v5825 = vsel %vm867, %v5820, %v5824
        %v5827 = vshrl.u32 %v5774, 16
        %v5829 = vrot.slane %v5827, 4
        %v5830 = vshll.u32 %v5774, 16
        %v5832 = vrot.slane %v5830, 5
        %v5833 = vor.u32 %v5829, %v5832
        %v5834 = vrot.slane %v5833, 4
        %v5836 = vshll.u32 %v5775, 16
        %v5838 = vrot.slane %v5836, 5
        %v5839 = vsel %vm867, %v5834, %v5838
        %v5841 = vshrl.u32 %v5776, 16
        %v5843 = vrot.slane %v5841, 4
        %v5844 = vshll.u32 %v5776, 16
        %v5846 = vrot.slane %v5844, 5
        %v5847 = vor.u32 %v5843, %v5846
        %v5848 = vrot.slane %v5847, 4
        %v5850 = vshll.u32 %v5777, 16
        %v5852 = vrot.slane %v5850, 5
        %v5853 = vsel %vm867, %v5848, %v5852
        %v5855 = vshrl.u32 %v5778, 16
        %v5857 = vrot.slane %v5855, 4
        %v5858 = vshll.u32 %v5778, 16
        %v5860 = vrot.slane %v5858, 5
        %v5861 = vor.u32 %v5857, %v5860
        %v5862 = vrot.slane %v5861, 4
        %v5864 = vshll.u32 %v5779, 16
        %v5866 = vrot.slane %v5864, 5
        %v5867 = vsel %vm867, %v5862, %v5866
        %v5869 = vshrl.u32 %v5780, 16
        %v5871 = vrot.slane %v5869, 4
        %v5872 = vshll.u32 %v5780, 16
        %v5874 = vrot.slane %v5872, 5
        %v5875 = vor.u32 %v5871, %v5874
        %v5876 = vrot.slane %v5875, 4
        %v5878 = vshll.u32 %v5781, 16
        %v5880 = vrot.slane %v5878, 5
        %v5881 = vsel %vm867, %v5876, %v5880
        %v5883 = vshrl.u32 %v5782, 16
        %v5885 = vrot.slane %v5883, 4
        %v5886 = vshll.u32 %v5782, 16
        %v5888 = vrot.slane %v5886, 5
        %v5889 = vor.u32 %v5885, %v5888
        %v5890 = vrot.slane %v5889, 4
        %v5892 = vshll.u32 %v5783, 16
        %v5894 = vrot.slane %v5892, 5
        %v5895 = vsel %vm867, %v5890, %v5894
        %v5896 = vld [vmem:[%s4052] sm:$0xf]
        %v5897 = vld [vmem:[%s4052 + $0x4] sm:$0xf]
        %v5898 = vld [vmem:[%s4052 + $0x8] sm:$0xf]
        %v5899 = vld [vmem:[%s4052 + $0xc] sm:$0xf]
        %v5900 = vld [vmem:[%s4052 + $0x10] sm:$0xf]
        %v5901 = vld [vmem:[%s4052 + $0x14] sm:$0xf]
        %v5902 = vld [vmem:[%s4052 + $0x18] sm:$0xf]
        %v5903 = vld [vmem:[%s4052 + $0x1c] sm:$0xf]
        %v5904 = vld [vmem:[%s4052 + $0x20] sm:$0xf]
        %v5905 = vld [vmem:[%s4052 + $0x24] sm:$0xf]
        %v5906 = vld [vmem:[%s4052 + $0x28] sm:$0xf]
        %v5907 = vld [vmem:[%s4052 + $0x2c] sm:$0xf]
        %v5908 = vld [vmem:[%s4052 + $0x30] sm:$0xf]
        %v5909 = vld [vmem:[%s4052 + $0x34] sm:$0xf]
        %v5910 = vld [vmem:[%s4052 + $0x38] sm:$0xf]
        %v5911 = vld [vmem:[%s4052 + $0x3c] sm:$0xf]
        %v5912 = vunpack.c.l.b16 %v5797
        %v5913 = vunpack.c.l.b16 %v5811
        %v5914 = vunpack.c.l.b16 %v5825
        %v5915 = vunpack.c.l.b16 %v5839
        %v5916 = vunpack.c.l.b16 %v5853
        %v5917 = vunpack.c.l.b16 %v5867
        %v5918 = vunpack.c.l.b16 %v5881
        %v5919 = vunpack.c.l.b16 %v5895
        %v5920 = vpack.c.b16 %v5913, %v5912
        %v5921 = vpack.c.b16 %v5915, %v5914
        %v5922 = vpack.c.b16 %v5917, %v5916
        %v5923 = vpack.c.b16 %v5919, %v5918
        %v5944 = vunpack.c.l.b16 %v5896
        %v5945 = vunpack.c.l.b16 %v5897
        %v5946 = vunpack.c.l.b16 %v5898
        %v5947 = vunpack.c.l.b16 %v5899
        %v5948 = vunpack.c.l.b16 %v5900
        %v5949 = vunpack.c.l.b16 %v5901
        %v5950 = vunpack.c.l.b16 %v5902
        %v5951 = vunpack.c.l.b16 %v5903
        %v5952 = vunpack.c.l.b16 %v5904
        %v5953 = vunpack.c.l.b16 %v5905
        %v5954 = vunpack.c.l.b16 %v5906
        %v5955 = vunpack.c.l.b16 %v5907
        %v5956 = vunpack.c.l.b16 %v5908
        %v5957 = vunpack.c.l.b16 %v5909
        %v5958 = vunpack.c.l.b16 %v5910
        %v5959 = vunpack.c.l.b16 %v5911
        %v5960 = vpack.c.b16 %v5945, %v5944
        %v5961 = vpack.c.b16 %v5947, %v5946
        %v5962 = vpack.c.b16 %v5949, %v5948
        %v5963 = vpack.c.b16 %v5951, %v5950
        %v5964 = vpack.c.b16 %v5953, %v5952
        %v5965 = vpack.c.b16 %v5955, %v5954
        %v5966 = vpack.c.b16 %v5957, %v5956
        %v5967 = vpack.c.b16 %v5959, %v5958
        %5976 = vmatpush.bf16.msra.mxu0 %v5967
        %5977 = vmatpush.bf16.msra.mxu0 %v5966
        %5978 = vmatpush.bf16.msra.mxu0 %v5965
        %5979 = vmatpush.bf16.msra.mxu0 %v5964
        %5980 = vmatpush.bf16.msra.mxu0 %v5963
        %5981 = vmatpush.bf16.msra.mxu0 %v5962
        %5982 = vmatpush.bf16.msra.mxu0 %v5961
        %5983 = vmatpush.bf16.msra.mxu0 %v5960
        %5984 = vmatmul.bf16.gmra.mxu0 %v5920
        %v5985 = vpop.f32.mrf.mxu0
        %v5986 = vadd.f32 0.0, %v5985
        %v5987 = vpop.f32.mrf.mxu0
        %v5988 = vadd.f32 0.0, %v5987
        %5989 = vmatmul.bf16.gmra.mxu0 %v5921
        %v5990 = vpop.f32.mrf.mxu0
        %v5991 = vadd.f32 0.0, %v5990
        %v5992 = vpop.f32.mrf.mxu0
        %v5993 = vadd.f32 0.0, %v5992
        %5994 = vmatmul.bf16.gmra.mxu0 %v5922
        %v5995 = vpop.f32.mrf.mxu0
        %v5996 = vadd.f32 0.0, %v5995
        %v5997 = vpop.f32.mrf.mxu0
        %v5998 = vadd.f32 0.0, %v5997
        %5999 = vmatmul.bf16.gmra.mxu0 %v5923
        %v6000 = vpop.f32.mrf.mxu0
        %v6001 = vadd.f32 0.0, %v6000
        %v6002 = vpop.f32.mrf.mxu0
        %v6003 = vadd.f32 0.0, %v6002
        %6004 = vdwg.mxu0
        %v6005 = vadd.f32 %v5760, %v5986
        %v6006 = vadd.f32 %v5761, %v5988
        %v6007 = vadd.f32 %v5762, %v5991
        %v6008 = vadd.f32 %v5763, %v5993
        %v6009 = vadd.f32 %v5764, %v5996
        %v6010 = vadd.f32 %v5765, %v5998
        %v6011 = vadd.f32 %v5766, %v6001
        %v6012 = vadd.f32 %v5767, %v6003
        %v6014 = vperm.slane %v4206, 0
        %v6016 = vadd.f32 %v6005, %v6014
        %v6017 = vadd.f32 %v6006, %v6014
        %v6018 = vadd.f32 %v6007, %v6014
        %v6019 = vadd.f32 %v6008, %v6014
        %v6020 = vadd.f32 %v6009, %v6014
        %v6021 = vadd.f32 %v6010, %v6014
        %v6022 = vadd.f32 %v6011, %v6014
        %v6023 = vadd.f32 %v6012, %v6014
        %v6024 = vmax.f32 %v6016, 0.0
        %v6025 = vmax.f32 %v6017, 0.0
        %v6026 = vmax.f32 %v6018, 0.0
        %v6027 = vmax.f32 %v6019, 0.0
        %v6028 = vmax.f32 %v6020, 0.0
        %v6029 = vmax.f32 %v6021, 0.0
        %v6030 = vmax.f32 %v6022, 0.0
        %v6031 = vmax.f32 %v6023, 0.0
        %v6032 = vpack.c.bf16 %v6024, %v6024
        %v6033 = vpack.c.bf16 %v6025, %v6025
        %v6034 = vpack.c.bf16 %v6026, %v6026
        %v6035 = vpack.c.bf16 %v6027, %v6027
        %v6036 = vpack.c.bf16 %v6028, %v6028
        %v6037 = vpack.c.bf16 %v6029, %v6029
        %v6038 = vpack.c.bf16 %v6030, %v6030
        %v6039 = vpack.c.bf16 %v6031, %v6031
        %vm6040 = vcmask 27648
        %6041 = vst.msk [vmem:[%s279] sm:$0xf] %vm6040, %v6032
        %6042 = vst.msk [vmem:[%s279 + $0x4] sm:$0xf] %vm6040, %v6033
        %6043 = vst.msk [vmem:[%s279 + $0x8] sm:$0xf] %vm6040, %v6034
        %6044 = vst.msk [vmem:[%s279 + $0xc] sm:$0xf] %vm6040, %v6035
        %6045 = vst.msk [vmem:[%s279 + $0x10] sm:$0xf] %vm6040, %v6036
        %6046 = vst.msk [vmem:[%s279 + $0x14] sm:$0xf] %vm6040, %v6037
        %6047 = vst.msk [vmem:[%s279 + $0x18] sm:$0xf] %vm6040, %v6038
        %6048 = vst.msk [vmem:[%s279 + $0x1c] sm:$0xf] %vm6040, %v6039
        %p6049 = scmp.lt.s32.totalorder %s20, 1
        %s6050 = scalar_select %p6049, %s20, 1
        %s6051 = smul.addr %s6050, 8
        %s6052 = smul.addr %s6051, 4
        %s6053 = scalar_lea.vmem %s5, %s6052
        // Predicated region
        $region53: #{tpu_custom_call.1} parent=39 // pred_check
          %p6054 = pneg %p148
        $region54: #{tpu_custom_call.1} parent=39 // pred_check_branch
          %6056 = sbr.rel (%p6054) target = $region56
        $region55: #{tpu_custom_call.1} parent=39 // pred_region
          _
        $region56: #{tpu_custom_call.1} parent=39 // pred_fallthru
          _
      $region40: #{tpu_custom_call.1} parent=5 // pred_fallthru
        _
      %p6057 = scmp.le.s32.totalorder 2, %s15
      // Predicated region
      $region57: #{tpu_custom_call.1} parent=5 // pred_check
        %p6058 = pneg %p6057
      $region58: #{tpu_custom_call.1} parent=5 // pred_check_branch
        %6060 = sbr.rel (%p6058) target = $region60
      $region59: #{tpu_custom_call.1} parent=5 // pred_region
        %s6061 = ssub.s32 %s15, 2
        // Predicated region
        $region61: #{tpu_custom_call.1} parent=59 // pred_check
          %p6062 = pneg %p154
        $region62: #{tpu_custom_call.1} parent=59 // pred_check_branch
          %6064 = sbr.rel (%p6062) target = $region64
        $region63: #{tpu_custom_call.1} parent=59 // pred_region
          %p6065 = scmp.lt.s32.totalorder %s21, 1
          %s6066 = scalar_select %p6065, %s21, 1
          %s6067 = smul.addr %s6066, 8
          %s6068 = smul.addr %s6067, 4
          %s6069 = scalar_lea.vmem %s5, %s6068
        $region64: #{tpu_custom_call.1} parent=59 // pred_fallthru
          _
      $region60: #{tpu_custom_call.1} parent=5 // pred_fallthru
        _
    $region6: #{tpu_custom_call.1} parent=1 // loop_footer
      %s19 = sadd.s32 1, %s15
    $region7: #{tpu_custom_call.1} parent=1 // loop_footer_branch
      %14 = sbr.rel target = $region3
    $region8: #{tpu_custom_call.1} parent=1 // loop_exit
      _
    %6070 = vsyncpa [#allocation6], 1
    %s6071 = scalar_lea.sflag [#allocation6], 1
    %6072 = vsyncpa %s6071, 1
    %6073 = vsyncpa [#allocation8], 1

</llo_original>
